<compile_context>
chip_gen: v7x
topology: tpu7x:2x2x1
jax: 0.10.0
libtpu: 0.0.40
codegen_flags: <defaults>
</compile_context>

<pallas_src>
import functools

import jax
import jax.numpy as jnp
from jax import lax
from jax.experimental import pallas as pl
from jax.experimental.pallas import tpu as pltpu


def _layer_norm(x, w, b, eps=1e-5):
    mu = jnp.mean(x, axis=-1, keepdims=True)
    var = jnp.mean((x - mu) ** 2, axis=-1, keepdims=True)   # biased var (PyTorch LN)
    return (x - mu) * lax.rsqrt(var + eps) * w + b


# ----------------------------------------------------------------------------
# Fused kernel: one grid step == one encoder layer of one batch tile.
# Layer 0 additionally builds the token slab; the last layer pools + runs heads.
# ----------------------------------------------------------------------------
def _fused_kernel(*refs, num_modalities, num_heads, tile_b, hidden_dim):
    idx = 0
    modality = []
    for _ in range(num_modalities):
        modality.append((refs[idx], refs[idx + 1], refs[idx + 2]))
        idx += 3
    (wq_ref, wk_ref, wv_ref, bq_ref, bk_ref, bv_ref, wo_ref, bo_ref,
     ln1w_ref, ln1b_ref, w1_ref, b1_ref, w2_ref, b2_ref,
     ln2w_ref, ln2b_ref) = refs[idx:idx + 16]
    idx += 16
    whead_ref, bhead_ref = refs[idx:idx + 2]
    idx += 2
    out_ref, x_scratch = refs[idx], refs[idx + 1]

    f32 = jnp.float32
    bf16 = jnp.bfloat16
    H = hidden_dim
    S = num_modalities
    hd = H // num_heads
    P = tile_b * S                      # tokens in this batch tile, row = s*tile_b + b

    layer = pl.program_id(1)
    last = pl.num_programs(1) - 1

    # ---- layer step 0: modality projections -> resident token slab -------------
    @pl.when(layer == 0)
    def _init():
        toks = [jnp.dot(x_ref[...], w_ref[...], preferred_element_type=f32) + b_ref[...]
                for (x_ref, w_ref, b_ref) in modality]
        x_scratch[...] = jnp.concatenate(toks, axis=0)       # (P, H) f32, single full store

    # ---- one encoder layer (weights for this layer streamed by BlockSpec) ------
    x = x_scratch[...]                                        # (P, H) f32 residual stream
    x_b = x.astype(bf16)

    # additive block-diagonal "same sample" bias from (P,1)/(1,P) sample ids
    row_id = lax.broadcasted_iota(jnp.int32, (P, 1), 0) % tile_b
    col_id = lax.broadcasted_iota(jnp.int32, (1, P), 1) % tile_b
    bias = jnp.where(row_id == col_id, 0.0, -1e30).astype(f32)  # (P, P)

    # Q/K/V: three aligned (H,H) matmuls; 1/sqrt(hd) already folded into wq/bq
    q = jnp.dot(x_b, wq_ref[0], preferred_element_type=f32) + bq_ref[0]
    k = jnp.dot(x_b, wk_ref[0], preferred_element_type=f32) + bk_ref[0]
    v = jnp.dot(x_b, wv_ref[0], preferred_element_type=f32) + bv_ref[0]

    head_outs = []
    for h in range(num_heads):
        lo = h * hd
        qh = q[:, lo:lo + hd].astype(bf16)
        kh = k[:, lo:lo + hd].astype(bf16)
        vh = v[:, lo:lo + hd].astype(bf16)
        s = lax.dot_general(qh, kh, (((1,), (1,)), ((), ())),
                            preferred_element_type=f32) + bias
        s = s - jnp.max(s, axis=-1, keepdims=True)
        p = jnp.exp(s)
        p = p * pl.reciprocal(jnp.sum(p, axis=-1, keepdims=True), approx=True)
        head_outs.append(jnp.dot(p.astype(bf16), vh, preferred_element_type=f32))
    attn = jnp.concatenate(head_outs, axis=-1)                # (P, H), stays in vregs

    attn = jnp.dot(attn.astype(bf16), wo_ref[0], preferred_element_type=f32) + bo_ref[0]
    x = _layer_norm(x + attn, ln1w_ref[0], ln1b_ref[0])       # post-norm residual 1

    h1 = jnp.dot(x.astype(bf16), w1_ref[0], preferred_element_type=f32) + b1_ref[0]
    h1 = jnp.maximum(h1, 0.0)
    ffn = jnp.dot(h1.astype(bf16), w2_ref[0], preferred_element_type=f32) + b2_ref[0]
    x = _layer_norm(x + ffn, ln2w_ref[0], ln2b_ref[0])        # post-norm residual 2

    x_scratch[...] = x

    # ---- last layer step: mean-pool over tokens + packed heads -----------------
    @pl.when(layer == last)
    def _final():
        pooled = x[0:tile_b, :]
        for s_tok in range(1, S):
            pooled = pooled + x[s_tok * tile_b:(s_tok + 1) * tile_b, :]
        pooled = pooled * (1.0 / S)
        out_ref[...] = (jnp.dot(pooled.astype(bf16), whead_ref[...],
                                preferred_element_type=f32)
                        + bhead_ref[...]).astype(out_ref.dtype)


# ----------------------------------------------------------------------------
# Parameter init (deterministic, synthetic), pre-fused for the kernel.
# Weights bf16 (MXU operands), biases / LN params f32.
# ----------------------------------------------------------------------------
def init_params(key, hidden_dim, num_heads, num_layers, num_classes):
    f32, bf16 = jnp.float32, jnp.bfloat16

    def dense(k, d_in, d_out, scale=0.02):
        return (scale * jax.random.normal(k, (d_in, d_out), f32),
                jnp.zeros((1, d_out), f32))

    keys = iter(jax.random.split(key, 8 * num_layers + 16))
    params = {}

    # genomics contraction dim zero-padded 2000 -> 2048 (full 128-lane tiles)
    wg, bg = dense(next(keys), 2000, hidden_dim)
    params['genomics_proj'] = (jnp.pad(wg, ((0, 48), (0, 0))).astype(bf16), bg)
    wi, bi = dense(next(keys), 2048, hidden_dim)
    params['imaging_proj'] = (wi.astype(bf16), bi)
    wm, bm = dense(next(keys), 512, hidden_dim)
    params['molecular_proj'] = (wm.astype(bf16), bm)

    qscale = 1.0 / ((hidden_dim // num_heads) ** 0.5)
    names = ('wq', 'wk', 'wv', 'bq', 'bk', 'bv', 'wo', 'bo',
             'ln1w', 'ln1b', 'w1', 'b1', 'w2', 'b2', 'ln2w', 'ln2b')
    stacked = {n: [] for n in names}
    for _ in range(num_layers):
        wq, bq = dense(next(keys), hidden_dim, hidden_dim)
        wk, bk = dense(next(keys), hidden_dim, hidden_dim)
        wv, bv = dense(next(keys), hidden_dim, hidden_dim)
        wo, bo = dense(next(keys), hidden_dim, hidden_dim)
        w1, b1 = dense(next(keys), hidden_dim, 4 * hidden_dim)
        w2, b2 = dense(next(keys), 4 * hidden_dim, hidden_dim)
        stacked['wq'].append((wq * qscale).astype(bf16))     # 1/sqrt(hd) pre-folded
        stacked['bq'].append(bq * qscale)
        stacked['wk'].append(wk.astype(bf16))
        stacked['bk'].append(bk)
        stacked['wv'].append(wv.astype(bf16))
        stacked['bv'].append(bv)
        stacked['wo'].append(wo.astype(bf16))
        stacked['bo'].append(bo)
        stacked['ln1w'].append(jnp.ones((1, hidden_dim), f32))
        stacked['ln1b'].append(jnp.zeros((1, hidden_dim), f32))
        stacked['w1'].append(w1.astype(bf16))
        stacked['b1'].append(b1)
        stacked['w2'].append(w2.astype(bf16))
        stacked['b2'].append(b2)
        stacked['ln2w'].append(jnp.ones((1, hidden_dim), f32))
        stacked['ln2b'].append(jnp.zeros((1, hidden_dim), f32))
    params['layers'] = {n: jnp.stack(v, axis=0) for n, v in stacked.items()}

    # packed [prediction | feature] head, padded to a lane-dense multiple of 128
    wp, bp = dense(next(keys), hidden_dim, num_classes)
    wf, bfh = dense(next(keys), hidden_dim, hidden_dim)
    packed_w = jnp.concatenate([wp, wf], axis=1)
    packed_b = jnp.concatenate([bp, bfh], axis=1)
    out_pad = max(128, -(-packed_w.shape[1] // 128) * 128)
    pad = out_pad - packed_w.shape[1]
    params['whead'] = jnp.pad(packed_w, ((0, 0), (0, pad))).astype(bf16)
    params['bhead'] = jnp.pad(packed_b, ((0, 0), (0, pad)))
    params['num_classes'] = num_classes
    return params


# ----------------------------------------------------------------------------
# Forward wrapper: one pallas_call, grid = (batch tiles, layers)
# ----------------------------------------------------------------------------
def multimodal_fusion_forward(batch, params, num_heads, batch_tile=None):
    bf16 = jnp.bfloat16
    mod_args = []
    if 'genomics' in batch:
        w, b = params['genomics_proj']
        x = batch['genomics']['expression']
        x = jnp.pad(x, ((0, 0), (0, w.shape[0] - x.shape[1])))   # 2000 -> 2048
        mod_args += [x.astype(bf16), w, b]
    if 'imaging' in batch:
        w, b = params['imaging_proj']
        mod_args += [batch['imaging']['features'].astype(bf16), w, b]
    if 'molecular' in batch:
        w, b = params['molecular_proj']
        mod_args += [batch['molecular']['features'].astype(bf16), w, b]
    num_modalities = len(mod_args) // 3
    if num_modalities == 0:
        # TODO(synk): torch.randn fallback when no modality is present is stochastic; not reproduced.
        raise NotImplementedError("at least one modality is required")

    layer_names = ('wq', 'wk', 'wv', 'bq', 'bk', 'bv', 'wo', 'bo',
                   'ln1w', 'ln1b', 'w1', 'b1', 'w2', 'b2', 'ln2w', 'ln2b')
    layers = params['layers']
    layer_args = [layers[n] for n in layer_names]
    num_layers, _, hidden_dim = layers['wq'].shape
    whead, bhead = params['whead'], params['bhead']
    num_classes = params['num_classes']
    out_pad = whead.shape[1]

    B = mod_args[0].shape[0]
    tile_b = B if batch_tile is None else batch_tile   # for large B pick a divisor (mult. of 8)
    assert B % tile_b == 0, "batch_tile must divide the batch size"
    grid = (B // tile_b, num_layers)
    P = tile_b * num_modalities

    in_specs = []
    for i, a in enumerate(mod_args):
        if i % 3 == 0:   # per-sample modality features: tiled along the parallel batch axis
            in_specs.append(pl.BlockSpec((tile_b, a.shape[1]), lambda bt, l: (bt, 0)))
        else:            # projection weights / biases: fetched once, resident
            in_specs.append(pl.BlockSpec(a.shape, lambda bt, l, nd=a.ndim: (0,) * nd))
    for a in layer_args:  # per-layer weights: streamed + auto double-buffered over l
        in_specs.append(pl.BlockSpec((1,) + a.shape[1:],
                                     lambda bt, l, nd=a.ndim: (l,) + (0,) * (nd - 1)))
    in_specs += [pl.BlockSpec(whead.shape, lambda bt, l: (0, 0)),
                 pl.BlockSpec(bhead.shape, lambda bt, l: (0, 0))]

    kernel = functools.partial(
        _fused_kernel, num_modalities=num_modalities, num_heads=num_heads,
        tile_b=tile_b, hidden_dim=hidden_dim)

    packed = pl.pallas_call(
        kernel,
        out_shape=jax.ShapeDtypeStruct((B, out_pad), jnp.float32),
        grid=grid,
        in_specs=in_specs,
        out_specs=pl.BlockSpec((tile_b, out_pad), lambda bt, l: (bt, 0)),
        scratch_shapes=[pltpu.VMEM((P, hidden_dim), jnp.float32)],   # resident token slab
        compiler_params=pltpu.CompilerParams(
            dimension_semantics=("parallel", "arbitrary")),
    )(*mod_args, *layer_args, whead, bhead)

    return {'predictions': packed[:, :num_classes],
            'features': packed[:, num_classes:num_classes + hidden_dim],
            'attention_weights': None}


if __name__ == "__main__":
    hidden_dim = 32
    num_heads = 4
    num_layers = 2
    num_classes = 1
    batch_size = 2

    key = jax.random.PRNGKey(0)
    k_params, k_g, k_i, k_m = jax.random.split(key, 4)

    params = init_params(k_params, hidden_dim, num_heads, num_layers, num_classes)

    batch = {
        'genomics': {'expression': jax.random.normal(k_g, (batch_size, 2000), jnp.float32)},
        'imaging': {'features': jax.random.normal(k_i, (batch_size, 2048), jnp.float32)},
        'molecular': {'features': jax.random.normal(k_m, (batch_size, 512), jnp.float32)},
    }

    outputs = multimodal_fusion_forward(batch, params, num_heads)
    jax.block_until_ready(outputs['predictions'])
    jax.block_until_ready(outputs['features'])

    assert outputs['predictions'].shape == (batch_size, num_classes)
    assert outputs['features'].shape == (batch_size, hidden_dim)
    print("KERNEL_OK")
</pallas_src>

<mosaic_0001>
module attributes {stable_mosaic.version = 11 : i64} {
  func.func @_fused_kernel(%arg0: i32, %arg1: i32, %arg2: memref<2x2048xbf16, #tpu.memory_space<vmem>>, %arg3: memref<2048x32xbf16, #tpu.memory_space<vmem>>, %arg4: memref<1x32xf32, #tpu.memory_space<vmem>>, %arg5: memref<2x2048xbf16, #tpu.memory_space<vmem>>, %arg6: memref<2048x32xbf16, #tpu.memory_space<vmem>>, %arg7: memref<1x32xf32, #tpu.memory_space<vmem>>, %arg8: memref<2x512xbf16, #tpu.memory_space<vmem>>, %arg9: memref<512x32xbf16, #tpu.memory_space<vmem>>, %arg10: memref<1x32xf32, #tpu.memory_space<vmem>>, %arg11: memref<1x32x32xbf16, #tpu.memory_space<vmem>>, %arg12: memref<1x32x32xbf16, #tpu.memory_space<vmem>>, %arg13: memref<1x32x32xbf16, #tpu.memory_space<vmem>>, %arg14: memref<1x1x32xf32, #tpu.memory_space<vmem>>, %arg15: memref<1x1x32xf32, #tpu.memory_space<vmem>>, %arg16: memref<1x1x32xf32, #tpu.memory_space<vmem>>, %arg17: memref<1x32x32xbf16, #tpu.memory_space<vmem>>, %arg18: memref<1x1x32xf32, #tpu.memory_space<vmem>>, %arg19: memref<1x1x32xf32, #tpu.memory_space<vmem>>, %arg20: memref<1x1x32xf32, #tpu.memory_space<vmem>>, %arg21: memref<1x32x128xbf16, #tpu.memory_space<vmem>>, %arg22: memref<1x1x128xf32, #tpu.memory_space<vmem>>, %arg23: memref<1x128x32xbf16, #tpu.memory_space<vmem>>, %arg24: memref<1x1x32xf32, #tpu.memory_space<vmem>>, %arg25: memref<1x1x32xf32, #tpu.memory_space<vmem>>, %arg26: memref<1x1x32xf32, #tpu.memory_space<vmem>>, %arg27: memref<32x128xbf16, #tpu.memory_space<vmem>>, %arg28: memref<1x128xf32, #tpu.memory_space<vmem>>, %arg29: memref<2x128xf32, #tpu.memory_space<vmem>>, %arg30: memref<6x32xf32, #tpu.memory_space<vmem>>) attributes {dimension_semantics = [#tpu.dimension_semantics<parallel>, #tpu.dimension_semantics<arbitrary>], iteration_bounds = array<i64: 1, 2>, scalar_prefetch = 0 : i64, scratch_operands = 1 : i64, tpu.core_type = #tpu.core_type<tc>, window_params = [{transform_indices = @transform_0, window_bounds = array<i64: 2, 2048>}, {pipeline_mode = #tpu.pipeline_mode<synchronous>, transform_indices = @transform_1, window_bounds = array<i64: 2048, 32>}, {pipeline_mode = #tpu.pipeline_mode<synchronous>, transform_indices = @transform_2, window_bounds = array<i64: 1, 32>}, {transform_indices = @transform_3, window_bounds = array<i64: 2, 2048>}, {pipeline_mode = #tpu.pipeline_mode<synchronous>, transform_indices = @transform_4, window_bounds = array<i64: 2048, 32>}, {pipeline_mode = #tpu.pipeline_mode<synchronous>, transform_indices = @transform_5, window_bounds = array<i64: 1, 32>}, {transform_indices = @transform_6, window_bounds = array<i64: 2, 512>}, {pipeline_mode = #tpu.pipeline_mode<synchronous>, transform_indices = @transform_7, window_bounds = array<i64: 512, 32>}, {pipeline_mode = #tpu.pipeline_mode<synchronous>, transform_indices = @transform_8, window_bounds = array<i64: 1, 32>}, {transform_indices = @transform_9, window_bounds = array<i64: 1, 32, 32>}, {transform_indices = @transform_10, window_bounds = array<i64: 1, 32, 32>}, {transform_indices = @transform_11, window_bounds = array<i64: 1, 32, 32>}, {transform_indices = @transform_12, window_bounds = array<i64: 1, 1, 32>}, {transform_indices = @transform_13, window_bounds = array<i64: 1, 1, 32>}, {transform_indices = @transform_14, window_bounds = array<i64: 1, 1, 32>}, {transform_indices = @transform_15, window_bounds = array<i64: 1, 32, 32>}, {transform_indices = @transform_16, window_bounds = array<i64: 1, 1, 32>}, {transform_indices = @transform_17, window_bounds = array<i64: 1, 1, 32>}, {transform_indices = @transform_18, window_bounds = array<i64: 1, 1, 32>}, {transform_indices = @transform_19, window_bounds = array<i64: 1, 32, 128>}, {transform_indices = @transform_20, window_bounds = array<i64: 1, 1, 128>}, {transform_indices = @transform_21, window_bounds = array<i64: 1, 128, 32>}, {transform_indices = @transform_22, window_bounds = array<i64: 1, 1, 32>}, {transform_indices = @transform_23, window_bounds = array<i64: 1, 1, 32>}, {transform_indices = @transform_24, window_bounds = array<i64: 1, 1, 32>}, {pipeline_mode = #tpu.pipeline_mode<synchronous>, transform_indices = @transform_25, window_bounds = array<i64: 32, 128>}, {pipeline_mode = #tpu.pipeline_mode<synchronous>, transform_indices = @transform_26, window_bounds = array<i64: 1, 128>}, {transform_indices = @transform_27, window_bounds = array<i64: 2, 128>}]} {
    %c0_i32 = arith.constant 0 : i32
    %0 = arith.cmpi eq, %arg1, %c0_i32 : i32
    %1 = arith.extui %0 : i1 to i32
    %c0_i32_0 = arith.constant 0 : i32
    %2 = arith.cmpi ne, %1, %c0_i32_0 : i32
    scf.if %2 {
      %c0_98 = arith.constant 0 : index
      %c0_99 = arith.constant 0 : index
      %231 = vector.load %arg2[%c0_98, %c0_99] : memref<2x2048xbf16, #tpu.memory_space<vmem>>, vector<2x2048xbf16>
      %c0_100 = arith.constant 0 : index
      %c0_101 = arith.constant 0 : index
      %232 = vector.load %arg3[%c0_100, %c0_101] : memref<2048x32xbf16, #tpu.memory_space<vmem>>, vector<2048x32xbf16>
      %cst_102 = arith.constant dense<0.000000e+00> : vector<2x32xf32>
      %233 = tpu.matmul %231, %232, %cst_102 {dimension_numbers = #tpu.dot_dimension_numbers<[1], [0], [0], [1], [0, 0, 1, 1], [], []>} : vector<2x2048xbf16>, vector<2048x32xbf16>, vector<2x32xf32> -> vector<2x32xf32>
      %c0_103 = arith.constant 0 : index
      %c0_104 = arith.constant 0 : index
      %234 = vector.load %arg4[%c0_103, %c0_104] : memref<1x32xf32, #tpu.memory_space<vmem>>, vector<1x32xf32>
      %235 = vector.broadcast %234 : vector<1x32xf32> to vector<2x32xf32>
      %236 = arith.addf %233, %235 : vector<2x32xf32>
      %c0_105 = arith.constant 0 : index
      %c0_106 = arith.constant 0 : index
      %237 = vector.load %arg5[%c0_105, %c0_106] : memref<2x2048xbf16, #tpu.memory_space<vmem>>, vector<2x2048xbf16>
      %c0_107 = arith.constant 0 : index
      %c0_108 = arith.constant 0 : index
      %238 = vector.load %arg6[%c0_107, %c0_108] : memref<2048x32xbf16, #tpu.memory_space<vmem>>, vector<2048x32xbf16>
      %cst_109 = arith.constant dense<0.000000e+00> : vector<2x32xf32>
      %239 = tpu.matmul %237, %238, %cst_109 {dimension_numbers = #tpu.dot_dimension_numbers<[1], [0], [0], [1], [0, 0, 1, 1], [], []>} : vector<2x2048xbf16>, vector<2048x32xbf16>, vector<2x32xf32> -> vector<2x32xf32>
      %c0_110 = arith.constant 0 : index
      %c0_111 = arith.constant 0 : index
      %240 = vector.load %arg7[%c0_110, %c0_111] : memref<1x32xf32, #tpu.memory_space<vmem>>, vector<1x32xf32>
      %241 = vector.broadcast %240 : vector<1x32xf32> to vector<2x32xf32>
      %242 = arith.addf %239, %241 : vector<2x32xf32>
      %c0_112 = arith.constant 0 : index
      %c0_113 = arith.constant 0 : index
      %243 = vector.load %arg8[%c0_112, %c0_113] : memref<2x512xbf16, #tpu.memory_space<vmem>>, vector<2x512xbf16>
      %c0_114 = arith.constant 0 : index
      %c0_115 = arith.constant 0 : index
      %244 = vector.load %arg9[%c0_114, %c0_115] : memref<512x32xbf16, #tpu.memory_space<vmem>>, vector<512x32xbf16>
      %cst_116 = arith.constant dense<0.000000e+00> : vector<2x32xf32>
      %245 = tpu.matmul %243, %244, %cst_116 {dimension_numbers = #tpu.dot_dimension_numbers<[1], [0], [0], [1], [0, 0, 1, 1], [], []>} : vector<2x512xbf16>, vector<512x32xbf16>, vector<2x32xf32> -> vector<2x32xf32>
      %c0_117 = arith.constant 0 : index
      %c0_118 = arith.constant 0 : index
      %246 = vector.load %arg10[%c0_117, %c0_118] : memref<1x32xf32, #tpu.memory_space<vmem>>, vector<1x32xf32>
      %247 = vector.broadcast %246 : vector<1x32xf32> to vector<2x32xf32>
      %248 = arith.addf %245, %247 : vector<2x32xf32>
      %249 = tpu.concatenate %236, %242, %248 in 0 : vector<2x32xf32>, vector<2x32xf32>, vector<2x32xf32> -> vector<6x32xf32>
      %c0_119 = arith.constant 0 : index
      %c0_120 = arith.constant 0 : index
      %250 = vector.load %arg30[%c0_119, %c0_120] : memref<6x32xf32, #tpu.memory_space<vmem>>, vector<6x32xf32>
      tpu.vector_store %arg30[%c0_119, %c0_120], %249 {strides = array<i32>} : memref<6x32xf32, #tpu.memory_space<vmem>>, vector<6x32xf32>,
    } else {
    }
    %c0 = arith.constant 0 : index
    %c0_1 = arith.constant 0 : index
    %3 = vector.load %arg30[%c0, %c0_1] : memref<6x32xf32, #tpu.memory_space<vmem>>, vector<6x32xf32>
    %4 = arith.truncf %3 : vector<6x32xf32> to vector<6x32xbf16>
    %5 = tpu.iota {dimensions = array<i32: 0>} : vector<6x1xi32>
    %c2_i32 = arith.constant 2 : i32
    %c0_i32_2 = arith.constant 0 : i32
    %6 = arith.cmpi eq, %c2_i32, %c0_i32_2 : i32
    %c1_i32 = arith.constant 1 : i32
    %7 = arith.select %6, %c1_i32, %c2_i32 : i32
    %8 = vector.broadcast %7 : i32 to vector<6x1xi32>
    %9 = arith.remsi %5, %8 : vector<6x1xi32>
    %c0_i32_3 = arith.constant 0 : i32
    %10 = vector.broadcast %c0_i32_3 : i32 to vector<6x1xi32>
    %11 = arith.cmpi ne, %9, %10 : vector<6x1xi32>
    %c0_i32_4 = arith.constant 0 : i32
    %12 = vector.broadcast %c0_i32_4 : i32 to vector<6x1xi32>
    %13 = arith.cmpi slt, %9, %12 : vector<6x1xi32>
    %c0_i32_5 = arith.constant 0 : i32
    %14 = arith.cmpi slt, %7, %c0_i32_5 : i32
    %15 = vector.broadcast %14 : i1 to vector<6x1xi1>
    %16 = vector.broadcast %15 : vector<6x1xi1> to vector<6x1xi1>
    %17 = arith.xori %13, %16 : vector<6x1xi1>
    %18 = arith.andi %17, %11 : vector<6x1xi1>
    %19 = vector.broadcast %7 : i32 to vector<6x1xi32>
    %20 = arith.addi %9, %19 : vector<6x1xi32>
    %21 = arith.select %18, %20, %9 : vector<6x1xi1>, vector<6x1xi32>
    %22 = tpu.iota {dimensions = array<i32: 1>} : vector<1x6xi32>
    %c2_i32_6 = arith.constant 2 : i32
    %c0_i32_7 = arith.constant 0 : i32
    %23 = arith.cmpi eq, %c2_i32_6, %c0_i32_7 : i32
    %c1_i32_8 = arith.constant 1 : i32
    %24 = arith.select %23, %c1_i32_8, %c2_i32_6 : i32
    %25 = vector.broadcast %24 : i32 to vector<1x6xi32>
    %26 = arith.remsi %22, %25 : vector<1x6xi32>
    %c0_i32_9 = arith.constant 0 : i32
    %27 = vector.broadcast %c0_i32_9 : i32 to vector<1x6xi32>
    %28 = arith.cmpi ne, %26, %27 : vector<1x6xi32>
    %c0_i32_10 = arith.constant 0 : i32
    %29 = vector.broadcast %c0_i32_10 : i32 to vector<1x6xi32>
    %30 = arith.cmpi slt, %26, %29 : vector<1x6xi32>
    %c0_i32_11 = arith.constant 0 : i32
    %31 = arith.cmpi slt, %24, %c0_i32_11 : i32
    %32 = vector.broadcast %31 : i1 to vector<1x6xi1>
    %33 = vector.broadcast %32 : vector<1x6xi1> to vector<1x6xi1>
    %34 = arith.xori %30, %33 : vector<1x6xi1>
    %35 = arith.andi %34, %28 : vector<1x6xi1>
    %36 = vector.broadcast %24 : i32 to vector<1x6xi32>
    %37 = arith.addi %26, %36 : vector<1x6xi32>
    %38 = arith.select %35, %37, %26 : vector<1x6xi1>, vector<1x6xi32>
    %39 = vector.broadcast %21 : vector<6x1xi32> to vector<6x6xi32>
    %40 = vector.broadcast %38 : vector<1x6xi32> to vector<6x6xi32>
    %41 = arith.cmpi eq, %39, %40 : vector<6x6xi32>
    %cst = arith.constant 0.000000e+00 : f32
    %cst_12 = arith.constant -1.000000e+30 : f32
    %42 = vector.broadcast %cst : f32 to vector<6x6xf32>
    %43 = vector.broadcast %cst_12 : f32 to vector<6x6xf32>
    %44 = arith.select %41, %42, %43 : vector<6x6xi1>, vector<6x6xf32>
    %c0_13 = arith.constant 0 : index
    %c0_14 = arith.constant 0 : index
    %c0_15 = arith.constant 0 : index
    %45 = vector.load %arg11[%c0_13, %c0_14, %c0_15] : memref<1x32x32xbf16, #tpu.memory_space<vmem>>, vector<1x32x32xbf16>
    %46 = vector.shape_cast %45 : vector<1x32x32xbf16> to vector<32x32xbf16>
    %cst_16 = arith.constant dense<0.000000e+00> : vector<6x32xf32>
    %47 = tpu.matmul %4, %46, %cst_16 {dimension_numbers = #tpu.dot_dimension_numbers<[1], [0], [0], [1], [0, 0, 1, 1], [], []>} : vector<6x32xbf16>, vector<32x32xbf16>, vector<6x32xf32> -> vector<6x32xf32>
    %c0_17 = arith.constant 0 : index
    %c0_18 = arith.constant 0 : index
    %c0_19 = arith.constant 0 : index
    %48 = vector.load %arg14[%c0_17, %c0_18, %c0_19] : memref<1x1x32xf32, #tpu.memory_space<vmem>>, vector<1x1x32xf32>
    %49 = vector.shape_cast %48 : vector<1x1x32xf32> to vector<1x32xf32>
    %50 = vector.broadcast %49 : vector<1x32xf32> to vector<6x32xf32>
    %51 = arith.addf %47, %50 : vector<6x32xf32>
    %c0_20 = arith.constant 0 : index
    %c0_21 = arith.constant 0 : index
    %c0_22 = arith.constant 0 : index
    %52 = vector.load %arg12[%c0_20, %c0_21, %c0_22] : memref<1x32x32xbf16, #tpu.memory_space<vmem>>, vector<1x32x32xbf16>
    %53 = vector.shape_cast %52 : vector<1x32x32xbf16> to vector<32x32xbf16>
    %cst_23 = arith.constant dense<0.000000e+00> : vector<6x32xf32>
    %54 = tpu.matmul %4, %53, %cst_23 {dimension_numbers = #tpu.dot_dimension_numbers<[1], [0], [0], [1], [0, 0, 1, 1], [], []>} : vector<6x32xbf16>, vector<32x32xbf16>, vector<6x32xf32> -> vector<6x32xf32>
    %c0_24 = arith.constant 0 : index
    %c0_25 = arith.constant 0 : index
    %c0_26 = arith.constant 0 : index
    %55 = vector.load %arg15[%c0_24, %c0_25, %c0_26] : memref<1x1x32xf32, #tpu.memory_space<vmem>>, vector<1x1x32xf32>
    %56 = vector.shape_cast %55 : vector<1x1x32xf32> to vector<1x32xf32>
    %57 = vector.broadcast %56 : vector<1x32xf32> to vector<6x32xf32>
    %58 = arith.addf %54, %57 : vector<6x32xf32>
    %c0_27 = arith.constant 0 : index
    %c0_28 = arith.constant 0 : index
    %c0_29 = arith.constant 0 : index
    %59 = vector.load %arg13[%c0_27, %c0_28, %c0_29] : memref<1x32x32xbf16, #tpu.memory_space<vmem>>, vector<1x32x32xbf16>
    %60 = vector.shape_cast %59 : vector<1x32x32xbf16> to vector<32x32xbf16>
    %cst_30 = arith.constant dense<0.000000e+00> : vector<6x32xf32>
    %61 = tpu.matmul %4, %60, %cst_30 {dimension_numbers = #tpu.dot_dimension_numbers<[1], [0], [0], [1], [0, 0, 1, 1], [], []>} : vector<6x32xbf16>, vector<32x32xbf16>, vector<6x32xf32> -> vector<6x32xf32>
    %c0_31 = arith.constant 0 : index
    %c0_32 = arith.constant 0 : index
    %c0_33 = arith.constant 0 : index
    %62 = vector.load %arg16[%c0_31, %c0_32, %c0_33] : memref<1x1x32xf32, #tpu.memory_space<vmem>>, vector<1x1x32xf32>
    %63 = vector.shape_cast %62 : vector<1x1x32xf32> to vector<1x32xf32>
    %64 = vector.broadcast %63 : vector<1x32xf32> to vector<6x32xf32>
    %65 = arith.addf %61, %64 : vector<6x32xf32>
    %66 = vector.extract_strided_slice %51 {offsets = [0, 0], sizes = [6, 8], strides = [1, 1]} : vector<6x32xf32> to vector<6x8xf32>
    %67 = arith.truncf %66 : vector<6x8xf32> to vector<6x8xbf16>
    %68 = vector.extract_strided_slice %58 {offsets = [0, 0], sizes = [6, 8], strides = [1, 1]} : vector<6x32xf32> to vector<6x8xf32>
    %69 = arith.truncf %68 : vector<6x8xf32> to vector<6x8xbf16>
    %70 = vector.extract_strided_slice %65 {offsets = [0, 0], sizes = [6, 8], strides = [1, 1]} : vector<6x32xf32> to vector<6x8xf32>
    %71 = arith.truncf %70 : vector<6x8xf32> to vector<6x8xbf16>
    %cst_34 = arith.constant dense<0.000000e+00> : vector<6x6xf32>
    %72 = tpu.matmul %67, %69, %cst_34 {dimension_numbers = #tpu.dot_dimension_numbers<[1], [1], [0], [0], [0, 0, 1, 0], [], []>} : vector<6x8xbf16>, vector<6x8xbf16>, vector<6x6xf32> -> vector<6x6xf32>
    %73 = arith.addf %72, %44 : vector<6x6xf32>
    %cst_35 = arith.constant dense<0xFF800000> : vector<6xf32>
    %74 = vector.multi_reduction <maximumf>, %73, %cst_35 [1] : vector<6x6xf32> to vector<6xf32>
    %75 = vector.shape_cast %74 : vector<6xf32> to vector<6x1xf32>
    %76 = vector.broadcast %75 : vector<6x1xf32> to vector<6x6xf32>
    %77 = arith.subf %73, %76 : vector<6x6xf32>
    %78 = math.exp %77 : vector<6x6xf32>
    %cst_36 = arith.constant dense<0.000000e+00> : vector<6xf32>
    %79 = vector.multi_reduction <add>, %78, %cst_36 [1] : vector<6x6xf32> to vector<6xf32>
    %80 = vector.shape_cast %79 : vector<6xf32> to vector<6x1xf32>
    %81 = tpu.reciprocal %80 {approx = true} : vector<6x1xf32> -> vector<6x1xf32>
    %82 = vector.broadcast %81 : vector<6x1xf32> to vector<6x6xf32>
    %83 = arith.mulf %78, %82 : vector<6x6xf32>
    %84 = arith.truncf %83 : vector<6x6xf32> to vector<6x6xbf16>
    %cst_37 = arith.constant dense<0.000000e+00> : vector<6x8xf32>
    %85 = tpu.matmul %84, %71, %cst_37 {dimension_numbers = #tpu.dot_dimension_numbers<[1], [0], [0], [1], [0, 0, 1, 1], [], []>} : vector<6x6xbf16>, vector<6x8xbf16>, vector<6x8xf32> -> vector<6x8xf32>
    %86 = vector.extract_strided_slice %51 {offsets = [0, 8], sizes = [6, 8], strides = [1, 1]} : vector<6x32xf32> to vector<6x8xf32>
    %87 = arith.truncf %86 : vector<6x8xf32> to vector<6x8xbf16>
    %88 = vector.extract_strided_slice %58 {offsets = [0, 8], sizes = [6, 8], strides = [1, 1]} : vector<6x32xf32> to vector<6x8xf32>
    %89 = arith.truncf %88 : vector<6x8xf32> to vector<6x8xbf16>
    %90 = vector.extract_strided_slice %65 {offsets = [0, 8], sizes = [6, 8], strides = [1, 1]} : vector<6x32xf32> to vector<6x8xf32>
    %91 = arith.truncf %90 : vector<6x8xf32> to vector<6x8xbf16>
    %cst_38 = arith.constant dense<0.000000e+00> : vector<6x6xf32>
    %92 = tpu.matmul %87, %89, %cst_38 {dimension_numbers = #tpu.dot_dimension_numbers<[1], [1], [0], [0], [0, 0, 1, 0], [], []>} : vector<6x8xbf16>, vector<6x8xbf16>, vector<6x6xf32> -> vector<6x6xf32>
    %93 = arith.addf %92, %44 : vector<6x6xf32>
    %cst_39 = arith.constant dense<0xFF800000> : vector<6xf32>
    %94 = vector.multi_reduction <maximumf>, %93, %cst_39 [1] : vector<6x6xf32> to vector<6xf32>
    %95 = vector.shape_cast %94 : vector<6xf32> to vector<6x1xf32>
    %96 = vector.broadcast %95 : vector<6x1xf32> to vector<6x6xf32>
    %97 = arith.subf %93, %96 : vector<6x6xf32>
    %98 = math.exp %97 : vector<6x6xf32>
    %cst_40 = arith.constant dense<0.000000e+00> : vector<6xf32>
    %99 = vector.multi_reduction <add>, %98, %cst_40 [1] : vector<6x6xf32> to vector<6xf32>
    %100 = vector.shape_cast %99 : vector<6xf32> to vector<6x1xf32>
    %101 = tpu.reciprocal %100 {approx = true} : vector<6x1xf32> -> vector<6x1xf32>
    %102 = vector.broadcast %101 : vector<6x1xf32> to vector<6x6xf32>
    %103 = arith.mulf %98, %102 : vector<6x6xf32>
    %104 = arith.truncf %103 : vector<6x6xf32> to vector<6x6xbf16>
    %cst_41 = arith.constant dense<0.000000e+00> : vector<6x8xf32>
    %105 = tpu.matmul %104, %91, %cst_41 {dimension_numbers = #tpu.dot_dimension_numbers<[1], [0], [0], [1], [0, 0, 1, 1], [], []>} : vector<6x6xbf16>, vector<6x8xbf16>, vector<6x8xf32> -> vector<6x8xf32>
    %106 = vector.extract_strided_slice %51 {offsets = [0, 16], sizes = [6, 8], strides = [1, 1]} : vector<6x32xf32> to vector<6x8xf32>
    %107 = arith.truncf %106 : vector<6x8xf32> to vector<6x8xbf16>
    %108 = vector.extract_strided_slice %58 {offsets = [0, 16], sizes = [6, 8], strides = [1, 1]} : vector<6x32xf32> to vector<6x8xf32>
    %109 = arith.truncf %108 : vector<6x8xf32> to vector<6x8xbf16>
    %110 = vector.extract_strided_slice %65 {offsets = [0, 16], sizes = [6, 8], strides = [1, 1]} : vector<6x32xf32> to vector<6x8xf32>
    %111 = arith.truncf %110 : vector<6x8xf32> to vector<6x8xbf16>
    %cst_42 = arith.constant dense<0.000000e+00> : vector<6x6xf32>
    %112 = tpu.matmul %107, %109, %cst_42 {dimension_numbers = #tpu.dot_dimension_numbers<[1], [1], [0], [0], [0, 0, 1, 0], [], []>} : vector<6x8xbf16>, vector<6x8xbf16>, vector<6x6xf32> -> vector<6x6xf32>
    %113 = arith.addf %112, %44 : vector<6x6xf32>
    %cst_43 = arith.constant dense<0xFF800000> : vector<6xf32>
    %114 = vector.multi_reduction <maximumf>, %113, %cst_43 [1] : vector<6x6xf32> to vector<6xf32>
    %115 = vector.shape_cast %114 : vector<6xf32> to vector<6x1xf32>
    %116 = vector.broadcast %115 : vector<6x1xf32> to vector<6x6xf32>
    %117 = arith.subf %113, %116 : vector<6x6xf32>
    %118 = math.exp %117 : vector<6x6xf32>
    %cst_44 = arith.constant dense<0.000000e+00> : vector<6xf32>
    %119 = vector.multi_reduction <add>, %118, %cst_44 [1] : vector<6x6xf32> to vector<6xf32>
    %120 = vector.shape_cast %119 : vector<6xf32> to vector<6x1xf32>
    %121 = tpu.reciprocal %120 {approx = true} : vector<6x1xf32> -> vector<6x1xf32>
    %122 = vector.broadcast %121 : vector<6x1xf32> to vector<6x6xf32>
    %123 = arith.mulf %118, %122 : vector<6x6xf32>
    %124 = arith.truncf %123 : vector<6x6xf32> to vector<6x6xbf16>
    %cst_45 = arith.constant dense<0.000000e+00> : vector<6x8xf32>
    %125 = tpu.matmul %124, %111, %cst_45 {dimension_numbers = #tpu.dot_dimension_numbers<[1], [0], [0], [1], [0, 0, 1, 1], [], []>} : vector<6x6xbf16>, vector<6x8xbf16>, vector<6x8xf32> -> vector<6x8xf32>
    %126 = vector.extract_strided_slice %51 {offsets = [0, 24], sizes = [6, 8], strides = [1, 1]} : vector<6x32xf32> to vector<6x8xf32>
    %127 = arith.truncf %126 : vector<6x8xf32> to vector<6x8xbf16>
    %128 = vector.extract_strided_slice %58 {offsets = [0, 24], sizes = [6, 8], strides = [1, 1]} : vector<6x32xf32> to vector<6x8xf32>
    %129 = arith.truncf %128 : vector<6x8xf32> to vector<6x8xbf16>
    %130 = vector.extract_strided_slice %65 {offsets = [0, 24], sizes = [6, 8], strides = [1, 1]} : vector<6x32xf32> to vector<6x8xf32>
    %131 = arith.truncf %130 : vector<6x8xf32> to vector<6x8xbf16>
    %cst_46 = arith.constant dense<0.000000e+00> : vector<6x6xf32>
    %132 = tpu.matmul %127, %129, %cst_46 {dimension_numbers = #tpu.dot_dimension_numbers<[1], [1], [0], [0], [0, 0, 1, 0], [], []>} : vector<6x8xbf16>, vector<6x8xbf16>, vector<6x6xf32> -> vector<6x6xf32>
    %133 = arith.addf %132, %44 : vector<6x6xf32>
    %cst_47 = arith.constant dense<0xFF800000> : vector<6xf32>
    %134 = vector.multi_reduction <maximumf>, %133, %cst_47 [1] : vector<6x6xf32> to vector<6xf32>
    %135 = vector.shape_cast %134 : vector<6xf32> to vector<6x1xf32>
    %136 = vector.broadcast %135 : vector<6x1xf32> to vector<6x6xf32>
    %137 = arith.subf %133, %136 : vector<6x6xf32>
    %138 = math.exp %137 : vector<6x6xf32>
    %cst_48 = arith.constant dense<0.000000e+00> : vector<6xf32>
    %139 = vector.multi_reduction <add>, %138, %cst_48 [1] : vector<6x6xf32> to vector<6xf32>
    %140 = vector.shape_cast %139 : vector<6xf32> to vector<6x1xf32>
    %141 = tpu.reciprocal %140 {approx = true} : vector<6x1xf32> -> vector<6x1xf32>
    %142 = vector.broadcast %141 : vector<6x1xf32> to vector<6x6xf32>
    %143 = arith.mulf %138, %142 : vector<6x6xf32>
    %144 = arith.truncf %143 : vector<6x6xf32> to vector<6x6xbf16>
    %cst_49 = arith.constant dense<0.000000e+00> : vector<6x8xf32>
    %145 = tpu.matmul %144, %131, %cst_49 {dimension_numbers = #tpu.dot_dimension_numbers<[1], [0], [0], [1], [0, 0, 1, 1], [], []>} : vector<6x6xbf16>, vector<6x8xbf16>, vector<6x8xf32> -> vector<6x8xf32>
    %146 = tpu.concatenate %85, %105, %125, %145 in 1 : vector<6x8xf32>, vector<6x8xf32>, vector<6x8xf32>, vector<6x8xf32> -> vector<6x32xf32>
    %147 = arith.truncf %146 : vector<6x32xf32> to vector<6x32xbf16>
    %c0_50 = arith.constant 0 : index
    %c0_51 = arith.constant 0 : index
    %c0_52 = arith.constant 0 : index
    %148 = vector.load %arg17[%c0_50, %c0_51, %c0_52] : memref<1x32x32xbf16, #tpu.memory_space<vmem>>, vector<1x32x32xbf16>
    %149 = vector.shape_cast %148 : vector<1x32x32xbf16> to vector<32x32xbf16>
    %cst_53 = arith.constant dense<0.000000e+00> : vector<6x32xf32>
    %150 = tpu.matmul %147, %149, %cst_53 {dimension_numbers = #tpu.dot_dimension_numbers<[1], [0], [0], [1], [0, 0, 1, 1], [], []>} : vector<6x32xbf16>, vector<32x32xbf16>, vector<6x32xf32> -> vector<6x32xf32>
    %c0_54 = arith.constant 0 : index
    %c0_55 = arith.constant 0 : index
    %c0_56 = arith.constant 0 : index
    %151 = vector.load %arg18[%c0_54, %c0_55, %c0_56] : memref<1x1x32xf32, #tpu.memory_space<vmem>>, vector<1x1x32xf32>
    %152 = vector.shape_cast %151 : vector<1x1x32xf32> to vector<1x32xf32>
    %153 = vector.broadcast %152 : vector<1x32xf32> to vector<6x32xf32>
    %154 = arith.addf %150, %153 : vector<6x32xf32>
    %155 = arith.addf %3, %154 : vector<6x32xf32>
    %c0_57 = arith.constant 0 : index
    %c0_58 = arith.constant 0 : index
    %c0_59 = arith.constant 0 : index
    %156 = vector.load %arg19[%c0_57, %c0_58, %c0_59] : memref<1x1x32xf32, #tpu.memory_space<vmem>>, vector<1x1x32xf32>
    %157 = vector.shape_cast %156 : vector<1x1x32xf32> to vector<1x32xf32>
    %c0_60 = arith.constant 0 : index
    %c0_61 = arith.constant 0 : index
    %c0_62 = arith.constant 0 : index
    %158 = vector.load %arg20[%c0_60, %c0_61, %c0_62] : memref<1x1x32xf32, #tpu.memory_space<vmem>>, vector<1x1x32xf32>
    %159 = vector.shape_cast %158 : vector<1x1x32xf32> to vector<1x32xf32>
    %cst_63 = arith.constant dense<0.000000e+00> : vector<6xf32>
    %160 = vector.multi_reduction <add>, %155, %cst_63 [1] : vector<6x32xf32> to vector<6xf32>
    %161 = vector.shape_cast %160 : vector<6xf32> to vector<6x1xf32>
    %cst_64 = arith.constant 3.200000e+01 : f32
    %162 = vector.broadcast %cst_64 : f32 to vector<6x1xf32>
    %163 = arith.divf %161, %162 : vector<6x1xf32>
    %164 = vector.broadcast %163 : vector<6x1xf32> to vector<6x32xf32>
    %165 = arith.subf %155, %164 : vector<6x32xf32>
    %166 = arith.mulf %165, %165 : vector<6x32xf32>
    %cst_65 = arith.constant dense<0.000000e+00> : vector<6xf32>
    %167 = vector.multi_reduction <add>, %166, %cst_65 [1] : vector<6x32xf32> to vector<6xf32>
    %168 = vector.shape_cast %167 : vector<6xf32> to vector<6x1xf32>
    %cst_66 = arith.constant 3.200000e+01 : f32
    %169 = vector.broadcast %cst_66 : f32 to vector<6x1xf32>
    %170 = arith.divf %168, %169 : vector<6x1xf32>
    %171 = vector.broadcast %163 : vector<6x1xf32> to vector<6x32xf32>
    %172 = arith.subf %155, %171 : vector<6x32xf32>
    %cst_67 = arith.constant 9.99999974E-6 : f32
    %173 = vector.broadcast %cst_67 : f32 to vector<6x1xf32>
    %174 = arith.addf %170, %173 : vector<6x1xf32>
    %175 = math.rsqrt %174 : vector<6x1xf32>
    %176 = vector.broadcast %175 : vector<6x1xf32> to vector<6x32xf32>
    %177 = arith.mulf %172, %176 : vector<6x32xf32>
    %178 = vector.broadcast %157 : vector<1x32xf32> to vector<6x32xf32>
    %179 = arith.mulf %177, %178 : vector<6x32xf32>
    %180 = vector.broadcast %159 : vector<1x32xf32> to vector<6x32xf32>
    %181 = arith.addf %179, %180 : vector<6x32xf32>
    %182 = arith.truncf %181 : vector<6x32xf32> to vector<6x32xbf16>
    %c0_68 = arith.constant 0 : index
    %c0_69 = arith.constant 0 : index
    %c0_70 = arith.constant 0 : index
    %183 = vector.load %arg21[%c0_68, %c0_69, %c0_70] : memref<1x32x128xbf16, #tpu.memory_space<vmem>>, vector<1x32x128xbf16>
    %184 = vector.shape_cast %183 : vector<1x32x128xbf16> to vector<32x128xbf16>
    %cst_71 = arith.constant dense<0.000000e+00> : vector<6x128xf32>
    %185 = tpu.matmul %182, %184, %cst_71 {dimension_numbers = #tpu.dot_dimension_numbers<[1], [0], [0], [1], [0, 0, 1, 1], [], []>} : vector<6x32xbf16>, vector<32x128xbf16>, vector<6x128xf32> -> vector<6x128xf32>
    %c0_72 = arith.constant 0 : index
    %c0_73 = arith.constant 0 : index
    %c0_74 = arith.constant 0 : index
    %186 = vector.load %arg22[%c0_72, %c0_73, %c0_74] : memref<1x1x128xf32, #tpu.memory_space<vmem>>, vector<1x1x128xf32>
    %187 = vector.shape_cast %186 : vector<1x1x128xf32> to vector<1x128xf32>
    %188 = vector.broadcast %187 : vector<1x128xf32> to vector<6x128xf32>
    %189 = arith.addf %185, %188 : vector<6x128xf32>
    %cst_75 = arith.constant 0.000000e+00 : f32
    %190 = vector.broadcast %cst_75 : f32 to vector<6x128xf32>
    %191 = arith.maximumf %189, %190 : vector<6x128xf32>
    %192 = arith.truncf %191 : vector<6x128xf32> to vector<6x128xbf16>
    %c0_76 = arith.constant 0 : index
    %c0_77 = arith.constant 0 : index
    %c0_78 = arith.constant 0 : index
    %193 = vector.load %arg23[%c0_76, %c0_77, %c0_78] : memref<1x128x32xbf16, #tpu.memory_space<vmem>>, vector<1x128x32xbf16>
    %194 = vector.shape_cast %193 : vector<1x128x32xbf16> to vector<128x32xbf16>
    %cst_79 = arith.constant dense<0.000000e+00> : vector<6x32xf32>
    %195 = tpu.matmul %192, %194, %cst_79 {dimension_numbers = #tpu.dot_dimension_numbers<[1], [0], [0], [1], [0, 0, 1, 1], [], []>} : vector<6x128xbf16>, vector<128x32xbf16>, vector<6x32xf32> -> vector<6x32xf32>
    %c0_80 = arith.constant 0 : index
    %c0_81 = arith.constant 0 : index
    %c0_82 = arith.constant 0 : index
    %196 = vector.load %arg24[%c0_80, %c0_81, %c0_82] : memref<1x1x32xf32, #tpu.memory_space<vmem>>, vector<1x1x32xf32>
    %197 = vector.shape_cast %196 : vector<1x1x32xf32> to vector<1x32xf32>
    %198 = vector.broadcast %197 : vector<1x32xf32> to vector<6x32xf32>
    %199 = arith.addf %195, %198 : vector<6x32xf32>
    %200 = arith.addf %181, %199 : vector<6x32xf32>
    %c0_83 = arith.constant 0 : index
    %c0_84 = arith.constant 0 : index
    %c0_85 = arith.constant 0 : index
    %201 = vector.load %arg25[%c0_83, %c0_84, %c0_85] : memref<1x1x32xf32, #tpu.memory_space<vmem>>, vector<1x1x32xf32>
    %202 = vector.shape_cast %201 : vector<1x1x32xf32> to vector<1x32xf32>
    %c0_86 = arith.constant 0 : index
    %c0_87 = arith.constant 0 : index
    %c0_88 = arith.constant 0 : index
    %203 = vector.load %arg26[%c0_86, %c0_87, %c0_88] : memref<1x1x32xf32, #tpu.memory_space<vmem>>, vector<1x1x32xf32>
    %204 = vector.shape_cast %203 : vector<1x1x32xf32> to vector<1x32xf32>
    %cst_89 = arith.constant dense<0.000000e+00> : vector<6xf32>
    %205 = vector.multi_reduction <add>, %200, %cst_89 [1] : vector<6x32xf32> to vector<6xf32>
    %206 = vector.shape_cast %205 : vector<6xf32> to vector<6x1xf32>
    %cst_90 = arith.constant 3.200000e+01 : f32
    %207 = vector.broadcast %cst_90 : f32 to vector<6x1xf32>
    %208 = arith.divf %206, %207 : vector<6x1xf32>
    %209 = vector.broadcast %208 : vector<6x1xf32> to vector<6x32xf32>
    %210 = arith.subf %200, %209 : vector<6x32xf32>
    %211 = arith.mulf %210, %210 : vector<6x32xf32>
    %cst_91 = arith.constant dense<0.000000e+00> : vector<6xf32>
    %212 = vector.multi_reduction <add>, %211, %cst_91 [1] : vector<6x32xf32> to vector<6xf32>
    %213 = vector.shape_cast %212 : vector<6xf32> to vector<6x1xf32>
    %cst_92 = arith.constant 3.200000e+01 : f32
    %214 = vector.broadcast %cst_92 : f32 to vector<6x1xf32>
    %215 = arith.divf %213, %214 : vector<6x1xf32>
    %216 = vector.broadcast %208 : vector<6x1xf32> to vector<6x32xf32>
    %217 = arith.subf %200, %216 : vector<6x32xf32>
    %cst_93 = arith.constant 9.99999974E-6 : f32
    %218 = vector.broadcast %cst_93 : f32 to vector<6x1xf32>
    %219 = arith.addf %215, %218 : vector<6x1xf32>
    %220 = math.rsqrt %219 : vector<6x1xf32>
    %221 = vector.broadcast %220 : vector<6x1xf32> to vector<6x32xf32>
    %222 = arith.mulf %217, %221 : vector<6x32xf32>
    %223 = vector.broadcast %202 : vector<1x32xf32> to vector<6x32xf32>
    %224 = arith.mulf %222, %223 : vector<6x32xf32>
    %225 = vector.broadcast %204 : vector<1x32xf32> to vector<6x32xf32>
    %226 = arith.addf %224, %225 : vector<6x32xf32>
    %c0_94 = arith.constant 0 : index
    %c0_95 = arith.constant 0 : index
    %227 = vector.load %arg30[%c0_94, %c0_95] : memref<6x32xf32, #tpu.memory_space<vmem>>, vector<6x32xf32>
    tpu.vector_store %arg30[%c0_94, %c0_95], %226 {strides = array<i32>} : memref<6x32xf32, #tpu.memory_space<vmem>>, vector<6x32xf32>,
    %c1_i32_96 = arith.constant 1 : i32
    %228 = arith.cmpi eq, %arg1, %c1_i32_96 : i32
    %229 = arith.extui %228 : i1 to i32
    %c0_i32_97 = arith.constant 0 : i32
    %230 = arith.cmpi ne, %229, %c0_i32_97 : i32
    scf.if %230 {
      %231 = vector.extract_strided_slice %226 {offsets = [0, 0], sizes = [2, 32], strides = [1, 1]} : vector<6x32xf32> to vector<2x32xf32>
      %232 = vector.extract_strided_slice %226 {offsets = [2, 0], sizes = [2, 32], strides = [1, 1]} : vector<6x32xf32> to vector<2x32xf32>
      %233 = arith.addf %231, %232 : vector<2x32xf32>
      %234 = vector.extract_strided_slice %226 {offsets = [4, 0], sizes = [2, 32], strides = [1, 1]} : vector<6x32xf32> to vector<2x32xf32>
      %235 = arith.addf %233, %234 : vector<2x32xf32>
      %cst_98 = arith.constant 0.333333343 : f32
      %236 = vector.broadcast %cst_98 : f32 to vector<2x32xf32>
      %237 = arith.mulf %235, %236 : vector<2x32xf32>
      %238 = arith.truncf %237 : vector<2x32xf32> to vector<2x32xbf16>
      %c0_99 = arith.constant 0 : index
      %c0_100 = arith.constant 0 : index
      %239 = vector.load %arg27[%c0_99, %c0_100] : memref<32x128xbf16, #tpu.memory_space<vmem>>, vector<32x128xbf16>
      %cst_101 = arith.constant dense<0.000000e+00> : vector<2x128xf32>
      %240 = tpu.matmul %238, %239, %cst_101 {dimension_numbers = #tpu.dot_dimension_numbers<[1], [0], [0], [1], [0, 0, 1, 1], [], []>} : vector<2x32xbf16>, vector<32x128xbf16>, vector<2x128xf32> -> vector<2x128xf32>
      %c0_102 = arith.constant 0 : index
      %c0_103 = arith.constant 0 : index
      %241 = vector.load %arg28[%c0_102, %c0_103] : memref<1x128xf32, #tpu.memory_space<vmem>>, vector<1x128xf32>
      %242 = vector.broadcast %241 : vector<1x128xf32> to vector<2x128xf32>
      %243 = arith.addf %240, %242 : vector<2x128xf32>
      %c0_104 = arith.constant 0 : index
      %c0_105 = arith.constant 0 : index
      %244 = vector.load %arg29[%c0_104, %c0_105] : memref<2x128xf32, #tpu.memory_space<vmem>>, vector<2x128xf32>
      tpu.vector_store %arg29[%c0_104, %c0_105], %243 {strides = array<i32>} : memref<2x128xf32, #tpu.memory_space<vmem>>, vector<2x128xf32>,
    } else {
    }
    return
  }
  func.func @transform_0(%arg0: i32, %arg1: i32) -> (i32, i32) {
    %c0_i32 = arith.constant 0 : i32
    %c0_i32_0 = arith.constant 0 : i32
    return %arg0, %c0_i32 : i32, i32
  }
  func.func @transform_1(%arg0: i32, %arg1: i32) -> (i32, i32) {
    %c0_i32 = arith.constant 0 : i32
    %c0_i32_0 = arith.constant 0 : i32
    %c0_i32_1 = arith.constant 0 : i32
    return %c0_i32, %c0_i32_0 : i32, i32
  }
  func.func @transform_2(%arg0: i32, %arg1: i32) -> (i32, i32) {
    %c0_i32 = arith.constant 0 : i32
    %c0_i32_0 = arith.constant 0 : i32
    %c0_i32_1 = arith.constant 0 : i32
    return %c0_i32, %c0_i32_0 : i32, i32
  }
  func.func @transform_3(%arg0: i32, %arg1: i32) -> (i32, i32) {
    %c0_i32 = arith.constant 0 : i32
    %c0_i32_0 = arith.constant 0 : i32
    return %arg0, %c0_i32 : i32, i32
  }
  func.func @transform_4(%arg0: i32, %arg1: i32) -> (i32, i32) {
    %c0_i32 = arith.constant 0 : i32
    %c0_i32_0 = arith.constant 0 : i32
    %c0_i32_1 = arith.constant 0 : i32
    return %c0_i32, %c0_i32_0 : i32, i32
  }
  func.func @transform_5(%arg0: i32, %arg1: i32) -> (i32, i32) {
    %c0_i32 = arith.constant 0 : i32
    %c0_i32_0 = arith.constant 0 : i32
    %c0_i32_1 = arith.constant 0 : i32
    return %c0_i32, %c0_i32_0 : i32, i32
  }
  func.func @transform_6(%arg0: i32, %arg1: i32) -> (i32, i32) {
    %c0_i32 = arith.constant 0 : i32
    %c0_i32_0 = arith.constant 0 : i32
    return %arg0, %c0_i32 : i32, i32
  }
  func.func @transform_7(%arg0: i32, %arg1: i32) -> (i32, i32) {
    %c0_i32 = arith.constant 0 : i32
    %c0_i32_0 = arith.constant 0 : i32
    %c0_i32_1 = arith.constant 0 : i32
    return %c0_i32, %c0_i32_0 : i32, i32
  }
  func.func @transform_8(%arg0: i32, %arg1: i32) -> (i32, i32) {
    %c0_i32 = arith.constant 0 : i32
    %c0_i32_0 = arith.constant 0 : i32
    %c0_i32_1 = arith.constant 0 : i32
    return %c0_i32, %c0_i32_0 : i32, i32
  }
  func.func @transform_9(%arg0: i32, %arg1: i32) -> (i32, i32, i32) {
    %c0_i32 = arith.constant 0 : i32
    %c0_i32_0 = arith.constant 0 : i32
    %c0_i32_1 = arith.constant 0 : i32
    return %arg1, %c0_i32, %c0_i32_0 : i32, i32, i32
  }
  func.func @transform_10(%arg0: i32, %arg1: i32) -> (i32, i32, i32) {
    %c0_i32 = arith.constant 0 : i32
    %c0_i32_0 = arith.constant 0 : i32
    %c0_i32_1 = arith.constant 0 : i32
    return %arg1, %c0_i32, %c0_i32_0 : i32, i32, i32
  }
  func.func @transform_11(%arg0: i32, %arg1: i32) -> (i32, i32, i32) {
    %c0_i32 = arith.constant 0 : i32
    %c0_i32_0 = arith.constant 0 : i32
    %c0_i32_1 = arith.constant 0 : i32
    return %arg1, %c0_i32, %c0_i32_0 : i32, i32, i32
  }
  func.func @transform_12(%arg0: i32, %arg1: i32) -> (i32, i32, i32) {
    %c0_i32 = arith.constant 0 : i32
    %c0_i32_0 = arith.constant 0 : i32
    %c0_i32_1 = arith.constant 0 : i32
    return %arg1, %c0_i32, %c0_i32_0 : i32, i32, i32
  }
  func.func @transform_13(%arg0: i32, %arg1: i32) -> (i32, i32, i32) {
    %c0_i32 = arith.constant 0 : i32
    %c0_i32_0 = arith.constant 0 : i32
    %c0_i32_1 = arith.constant 0 : i32
    return %arg1, %c0_i32, %c0_i32_0 : i32, i32, i32
  }
  func.func @transform_14(%arg0: i32, %arg1: i32) -> (i32, i32, i32) {
    %c0_i32 = arith.constant 0 : i32
    %c0_i32_0 = arith.constant 0 : i32
    %c0_i32_1 = arith.constant 0 : i32
    return %arg1, %c0_i32, %c0_i32_0 : i32, i32, i32
  }
  func.func @transform_15(%arg0: i32, %arg1: i32) -> (i32, i32, i32) {
    %c0_i32 = arith.constant 0 : i32
    %c0_i32_0 = arith.constant 0 : i32
    %c0_i32_1 = arith.constant 0 : i32
    return %arg1, %c0_i32, %c0_i32_0 : i32, i32, i32
  }
  func.func @transform_16(%arg0: i32, %arg1: i32) -> (i32, i32, i32) {
    %c0_i32 = arith.constant 0 : i32
    %c0_i32_0 = arith.constant 0 : i32
    %c0_i32_1 = arith.constant 0 : i32
    return %arg1, %c0_i32, %c0_i32_0 : i32, i32, i32
  }
  func.func @transform_17(%arg0: i32, %arg1: i32) -> (i32, i32, i32) {
    %c0_i32 = arith.constant 0 : i32
    %c0_i32_0 = arith.constant 0 : i32
    %c0_i32_1 = arith.constant 0 : i32
    return %arg1, %c0_i32, %c0_i32_0 : i32, i32, i32
  }
  func.func @transform_18(%arg0: i32, %arg1: i32) -> (i32, i32, i32) {
    %c0_i32 = arith.constant 0 : i32
    %c0_i32_0 = arith.constant 0 : i32
    %c0_i32_1 = arith.constant 0 : i32
    return %arg1, %c0_i32, %c0_i32_0 : i32, i32, i32
  }
  func.func @transform_19(%arg0: i32, %arg1: i32) -> (i32, i32, i32) {
    %c0_i32 = arith.constant 0 : i32
    %c0_i32_0 = arith.constant 0 : i32
    %c0_i32_1 = arith.constant 0 : i32
    return %arg1, %c0_i32, %c0_i32_0 : i32, i32, i32
  }
  func.func @transform_20(%arg0: i32, %arg1: i32) -> (i32, i32, i32) {
    %c0_i32 = arith.constant 0 : i32
    %c0_i32_0 = arith.constant 0 : i32
    %c0_i32_1 = arith.constant 0 : i32
    return %arg1, %c0_i32, %c0_i32_0 : i32, i32, i32
  }
  func.func @transform_21(%arg0: i32, %arg1: i32) -> (i32, i32, i32) {
    %c0_i32 = arith.constant 0 : i32
    %c0_i32_0 = arith.constant 0 : i32
    %c0_i32_1 = arith.constant 0 : i32
    return %arg1, %c0_i32, %c0_i32_0 : i32, i32, i32
  }
  func.func @transform_22(%arg0: i32, %arg1: i32) -> (i32, i32, i32) {
    %c0_i32 = arith.constant 0 : i32
    %c0_i32_0 = arith.constant 0 : i32
    %c0_i32_1 = arith.constant 0 : i32
    return %arg1, %c0_i32, %c0_i32_0 : i32, i32, i32
  }
  func.func @transform_23(%arg0: i32, %arg1: i32) -> (i32, i32, i32) {
    %c0_i32 = arith.constant 0 : i32
    %c0_i32_0 = arith.constant 0 : i32
    %c0_i32_1 = arith.constant 0 : i32
    return %arg1, %c0_i32, %c0_i32_0 : i32, i32, i32
  }
  func.func @transform_24(%arg0: i32, %arg1: i32) -> (i32, i32, i32) {
    %c0_i32 = arith.constant 0 : i32
    %c0_i32_0 = arith.constant 0 : i32
    %c0_i32_1 = arith.constant 0 : i32
    return %arg1, %c0_i32, %c0_i32_0 : i32, i32, i32
  }
  func.func @transform_25(%arg0: i32, %arg1: i32) -> (i32, i32) {
    %c0_i32 = arith.constant 0 : i32
    %c0_i32_0 = arith.constant 0 : i32
    %c0_i32_1 = arith.constant 0 : i32
    return %c0_i32, %c0_i32_0 : i32, i32
  }
  func.func @transform_26(%arg0: i32, %arg1: i32) -> (i32, i32) {
    %c0_i32 = arith.constant 0 : i32
    %c0_i32_0 = arith.constant 0 : i32
    %c0_i32_1 = arith.constant 0 : i32
    return %c0_i32, %c0_i32_0 : i32, i32
  }
  func.func @transform_27(%arg0: i32, %arg1: i32) -> (i32, i32) {
    %c0_i32 = arith.constant 0 : i32
    %c0_i32_0 = arith.constant 0 : i32
    return %arg0, %c0_i32 : i32, i32
  }
}

</mosaic_0001>

<llo_original>
// kernel: tpu_custom_call.1
$region0: #{tpu_custom_call.1}
  #allocation0 [shape = 'u32[]', space=smem, size = 0x4, offset = 0x4, fixed_abs, tag = 'smem constant byte address 0x4 - core index']
  #allocation1 [shape = 'u32[144,128]{1,0:T(1,128)}', space=vmem, size = 0x12000, scoped, tag = 'internal scratch']
  #allocation2 [shape = 'f32[6,32]{1,0:T(8,128)}', space=vmem, size = 0x1000, scoped, tag = 'scratch operand']
  %s0 = inlined_call_operand.vmem [shape: bf16[2,2048], index: 0, kind: input, shape index: {}]
  %s1 = inlined_call_operand.vmem [shape: bf16[2048,32], index: 1, kind: input, shape index: {}]
  %s2 = inlined_call_operand.vmem [shape: f32[1,32], index: 2, kind: input, shape index: {}]
  %s3 = inlined_call_operand.vmem [shape: bf16[2,2048], index: 3, kind: input, shape index: {}]
  %s4 = inlined_call_operand.vmem [shape: bf16[2048,32], index: 4, kind: input, shape index: {}]
  %s5 = inlined_call_operand.vmem [shape: f32[1,32], index: 5, kind: input, shape index: {}]
  %s6 = inlined_call_operand.vmem [shape: bf16[2,512], index: 6, kind: input, shape index: {}]
  %s7 = inlined_call_operand.vmem [shape: bf16[512,32], index: 7, kind: input, shape index: {}]
  %s8 = inlined_call_operand.vmem [shape: f32[1,32], index: 8, kind: input, shape index: {}]
  %s9 = inlined_call_operand.vmem [shape: bf16[2,32,32], index: 9, kind: input, shape index: {}]
  %s10 = inlined_call_operand.vmem [shape: bf16[2,32,32], index: 10, kind: input, shape index: {}]
  %s11 = inlined_call_operand.vmem [shape: bf16[2,32,32], index: 11, kind: input, shape index: {}]
  %s12 = inlined_call_operand.vmem [shape: f32[2,1,32], index: 12, kind: input, shape index: {}]
  %s13 = inlined_call_operand.vmem [shape: f32[2,1,32], index: 13, kind: input, shape index: {}]
  %s14 = inlined_call_operand.vmem [shape: f32[2,1,32], index: 14, kind: input, shape index: {}]
  %s15 = inlined_call_operand.vmem [shape: bf16[2,32,32], index: 15, kind: input, shape index: {}]
  %s16 = inlined_call_operand.vmem [shape: f32[2,1,32], index: 16, kind: input, shape index: {}]
  %s17 = inlined_call_operand.vmem [shape: f32[2,1,32], index: 17, kind: input, shape index: {}]
  %s18 = inlined_call_operand.vmem [shape: f32[2,1,32], index: 18, kind: input, shape index: {}]
  %s19 = inlined_call_operand.vmem [shape: bf16[2,32,128], index: 19, kind: input, shape index: {}]
  %s20 = inlined_call_operand.vmem [shape: f32[2,1,128], index: 20, kind: input, shape index: {}]
  %s21 = inlined_call_operand.vmem [shape: bf16[2,128,32], index: 21, kind: input, shape index: {}]
  %s22 = inlined_call_operand.vmem [shape: f32[2,1,32], index: 22, kind: input, shape index: {}]
  %s23 = inlined_call_operand.vmem [shape: f32[2,1,32], index: 23, kind: input, shape index: {}]
  %s24 = inlined_call_operand.vmem [shape: f32[2,1,32], index: 24, kind: input, shape index: {}]
  %s25 = inlined_call_operand.vmem [shape: bf16[32,128], index: 25, kind: input, shape index: {}]
  %s26 = inlined_call_operand.vmem [shape: f32[1,128], index: 26, kind: input, shape index: {}]
  %s27 = inlined_call_operand.hbm [shape: f32[2,128], index: 27, kind: output, shape index: {}]
  %s28 = sld [smem:[#allocation0]]
  $region149: #{tpu_custom_call.1} parent=0
    _
  %s30 = ssub.s32 1, %s28
  %s31 = scalar_select 0, %s30, %s28
  $region1: #{tpu_custom_call.1} parent=0
    #allocation3 [shape = 'u8[1024]{0}', space=vmem, size = 0x400, scoped, tag = 'output window, operand 0, single buffered']
    #allocation4 [shape = 's32[2]{0}', space=sflag, size = 0x8, scoped, tag = 'scoped memory for tpu_custom_call.1']
    %32 = vsyncpa [#allocation4], 0
    loop: start=0, step=1, limit=4
    $region2: #{tpu_custom_call.1} parent=1 // loop_pre_header
      _
    $region3: #{tpu_custom_call.1} parent=1 // loop_header
      %s34 = sphi 0, %s38
      %p35 = scmp.ge.s32.totalorder %s34, 4
      %s41 = sphi 0, %s53
      %s42 = sphi 0, %s49
      %s43 = sphi 0, %s41
      %s44 = sphi 0, %s42
      %s45 = sphi 0, %s43
      %s46 = sphi 0, %s44
      %s56 = sphi 0, %s58
      %s59 = sphi 0, %s56
      %s60 = sphi 0, %s59
      %s76 = sphi 0, %s60
      %s80 = sphi 0, %s80
      %s82 = sphi 0, %s80
      %s83 = sphi 0, %s82
      %s97 = sphi 0, %s83
      %s101 = sphi 0, %s101
      %s103 = sphi 0, %s101
      %s104 = sphi 0, %s103
      %s118 = sphi 0, %s104
      %s124 = sphi 0, %s126
      %s127 = sphi 0, %s124
      %s128 = sphi 0, %s127
      %s144 = sphi 0, %s128
      %s148 = sphi 0, %s148
      %s150 = sphi 0, %s148
      %s151 = sphi 0, %s150
      %s165 = sphi 0, %s151
      %s169 = sphi 0, %s169
      %s171 = sphi 0, %s169
      %s172 = sphi 0, %s171
      %s186 = sphi 0, %s172
      %s192 = sphi 0, %s194
      %s195 = sphi 0, %s192
      %s196 = sphi 0, %s195
      %s212 = sphi 0, %s196
      %s216 = sphi 0, %s216
      %s218 = sphi 0, %s216
      %s219 = sphi 0, %s218
      %s233 = sphi 0, %s219
      %s237 = sphi 0, %s237
      %s239 = sphi 0, %s237
      %s240 = sphi 0, %s239
      %s254 = sphi 0, %s240
      %s260 = sphi 0, %s262
      %s263 = sphi 0, %s260
      %s264 = sphi 0, %s263
      %s280 = sphi 0, %s264
      %s286 = sphi 0, %s288
      %s289 = sphi 0, %s286
      %s290 = sphi 0, %s289
      %s306 = sphi 0, %s290
      %s312 = sphi 0, %s314
      %s315 = sphi 0, %s312
      %s316 = sphi 0, %s315
      %s332 = sphi 0, %s316
      %s338 = sphi 0, %s340
      %s341 = sphi 0, %s338
      %s342 = sphi 0, %s341
      %s358 = sphi 0, %s342
      %s364 = sphi 0, %s366
      %s367 = sphi 0, %s364
      %s368 = sphi 0, %s367
      %s384 = sphi 0, %s368
      %s390 = sphi 0, %s392
      %s393 = sphi 0, %s390
      %s394 = sphi 0, %s393
      %s410 = sphi 0, %s394
      %s416 = sphi 0, %s418
      %s419 = sphi 0, %s416
      %s420 = sphi 0, %s419
      %s436 = sphi 0, %s420
      %s442 = sphi 0, %s444
      %s445 = sphi 0, %s442
      %s446 = sphi 0, %s445
      %s462 = sphi 0, %s446
      %s468 = sphi 0, %s470
      %s471 = sphi 0, %s468
      %s472 = sphi 0, %s471
      %s488 = sphi 0, %s472
      %s494 = sphi 0, %s496
      %s497 = sphi 0, %s494
      %s498 = sphi 0, %s497
      %s514 = sphi 0, %s498
      %s520 = sphi 0, %s522
      %s523 = sphi 0, %s520
      %s524 = sphi 0, %s523
      %s540 = sphi 0, %s524
      %s546 = sphi 0, %s548
      %s549 = sphi 0, %s546
      %s550 = sphi 0, %s549
      %s566 = sphi 0, %s550
      %s572 = sphi 0, %s574
      %s575 = sphi 0, %s572
      %s576 = sphi 0, %s575
      %s592 = sphi 0, %s576
      %s598 = sphi 0, %s600
      %s601 = sphi 0, %s598
      %s602 = sphi 0, %s601
      %s618 = sphi 0, %s602
      %s624 = sphi 0, %s626
      %s627 = sphi 0, %s624
      %s628 = sphi 0, %s627
      %s644 = sphi 0, %s628
      %s650 = sphi 0, %s652
      %s653 = sphi 0, %s650
      %s654 = sphi 0, %s653
      %s670 = sphi 0, %s654
      %s674 = sphi 0, %s674
      %s676 = sphi 0, %s674
      %s677 = sphi 0, %s676
      %s691 = sphi 0, %s677
      %s695 = sphi 0, %s695
      %s697 = sphi 0, %s695
      %s698 = sphi 0, %s697
      %s712 = sphi 0, %s698
      %s718 = sphi 0, %s720
      %s721 = sphi 0, %s718
      %s722 = sphi 0, %s721
      %s738 = sphi 0, %s722
    $region4: #{tpu_custom_call.1} parent=1 // loop_header_branch
      %37 = sbr.rel (%p35) target = $region8
    $region5: #{tpu_custom_call.1} parent=1 // loop_body
      %s39 = ssub.s32 %s34, 1
      %s40 = ssub.s32 %s34, 2
      %s47 = sadd.s32 1, %s42
      %p48 = scmp.ge.s32.totalorder %s47, 2
      %s49 = scalar_select %p48, 0, %s47
      %s50 = sadd.s32 1, %s41
      %s51 = scalar_select %p48, %s50, %s41
      %p52 = scmp.ge.s32.totalorder %s51, 1
      %s53 = scalar_select %p52, 0, %s51
      %s54 = ssub.s32 %s41, %s53
      %p55 = scmp.eq.s32.totalorder %s54, 0
      %s57 = sadd.s32 %s56, 1
      %s58 = scalar_select %p55, %s56, %s57
      %p61 = pneg %p55
      %p62 = scmp.eq.s32.totalorder %s34, 1
      %p63 = por %p61, %p62
      %p64 = scmp.ne.s32.totalorder %s56, %s59
      %p65 = scmp.eq.s32.totalorder %s34, 0
      %p66 = por %p64, %p65
      %p67 = scmp.ne.s32.totalorder %s56, %s59
      %p68 = scmp.eq.s32.totalorder %s39, 1
      %p69 = por %p67, %p68
      %p70 = scmp.ne.s32.totalorder %s59, %s60
      %p71 = scmp.eq.s32.totalorder %s39, 0
      %p72 = por %p70, %p71
      %p73 = scmp.ne.s32.totalorder %s59, %s60
      %p74 = scmp.eq.s32.totalorder %s40, 1
      %p75 = por %p73, %p74
      %p77 = scmp.ne.s32.totalorder %s60, %s76
      %p78 = scmp.eq.s32.totalorder %s40, 0
      %p79 = por %p77, %p78
      %s81 = sadd.s32 %s80, 1
      %p84 = scmp.eq.s32.totalorder %s34, 1
      %p85 = scmp.ne.s32.totalorder %s80, %s82
      %p86 = scmp.eq.s32.totalorder %s34, 0
      %p87 = por %p85, %p86
      %p88 = scmp.ne.s32.totalorder %s80, %s82
      %p89 = scmp.eq.s32.totalorder %s39, 1
      %p90 = por %p88, %p89
      %p91 = scmp.ne.s32.totalorder %s82, %s83
      %p92 = scmp.eq.s32.totalorder %s39, 0
      %p93 = por %p91, %p92
      %p94 = scmp.ne.s32.totalorder %s82, %s83
      %p95 = scmp.eq.s32.totalorder %s40, 1
      %p96 = por %p94, %p95
      %p98 = scmp.ne.s32.totalorder %s83, %s97
      %p99 = scmp.eq.s32.totalorder %s40, 0
      %p100 = por %p98, %p99
      %s102 = sadd.s32 %s101, 1
      %p105 = scmp.eq.s32.totalorder %s34, 1
      %p106 = scmp.ne.s32.totalorder %s101, %s103
      %p107 = scmp.eq.s32.totalorder %s34, 0
      %p108 = por %p106, %p107
      %p109 = scmp.ne.s32.totalorder %s101, %s103
      %p110 = scmp.eq.s32.totalorder %s39, 1
      %p111 = por %p109, %p110
      %p112 = scmp.ne.s32.totalorder %s103, %s104
      %p113 = scmp.eq.s32.totalorder %s39, 0
      %p114 = por %p112, %p113
      %p115 = scmp.ne.s32.totalorder %s103, %s104
      %p116 = scmp.eq.s32.totalorder %s40, 1
      %p117 = por %p115, %p116
      %p119 = scmp.ne.s32.totalorder %s104, %s118
      %p120 = scmp.eq.s32.totalorder %s40, 0
      %p121 = por %p119, %p120
      %s122 = ssub.s32 %s41, %s53
      %p123 = scmp.eq.s32.totalorder %s122, 0
      %s125 = sadd.s32 %s124, 1
      %s126 = scalar_select %p123, %s124, %s125
      %p129 = pneg %p123
      %p130 = scmp.eq.s32.totalorder %s34, 1
      %p131 = por %p129, %p130
      %p132 = scmp.ne.s32.totalorder %s124, %s127
      %p133 = scmp.eq.s32.totalorder %s34, 0
      %p134 = por %p132, %p133
      %p135 = scmp.ne.s32.totalorder %s124, %s127
      %p136 = scmp.eq.s32.totalorder %s39, 1
      %p137 = por %p135, %p136
      %p138 = scmp.ne.s32.totalorder %s127, %s128
      %p139 = scmp.eq.s32.totalorder %s39, 0
      %p140 = por %p138, %p139
      %p141 = scmp.ne.s32.totalorder %s127, %s128
      %p142 = scmp.eq.s32.totalorder %s40, 1
      %p143 = por %p141, %p142
      %p145 = scmp.ne.s32.totalorder %s128, %s144
      %p146 = scmp.eq.s32.totalorder %s40, 0
      %p147 = por %p145, %p146
      %s149 = sadd.s32 %s148, 1
      %p152 = scmp.eq.s32.totalorder %s34, 1
      %p153 = scmp.ne.s32.totalorder %s148, %s150
      %p154 = scmp.eq.s32.totalorder %s34, 0
      %p155 = por %p153, %p154
      %p156 = scmp.ne.s32.totalorder %s148, %s150
      %p157 = scmp.eq.s32.totalorder %s39, 1
      %p158 = por %p156, %p157
      %p159 = scmp.ne.s32.totalorder %s150, %s151
      %p160 = scmp.eq.s32.totalorder %s39, 0
      %p161 = por %p159, %p160
      %p162 = scmp.ne.s32.totalorder %s150, %s151
      %p163 = scmp.eq.s32.totalorder %s40, 1
      %p164 = por %p162, %p163
      %p166 = scmp.ne.s32.totalorder %s151, %s165
      %p167 = scmp.eq.s32.totalorder %s40, 0
      %p168 = por %p166, %p167
      %s170 = sadd.s32 %s169, 1
      %p173 = scmp.eq.s32.totalorder %s34, 1
      %p174 = scmp.ne.s32.totalorder %s169, %s171
      %p175 = scmp.eq.s32.totalorder %s34, 0
      %p176 = por %p174, %p175
      %p177 = scmp.ne.s32.totalorder %s169, %s171
      %p178 = scmp.eq.s32.totalorder %s39, 1
      %p179 = por %p177, %p178
      %p180 = scmp.ne.s32.totalorder %s171, %s172
      %p181 = scmp.eq.s32.totalorder %s39, 0
      %p182 = por %p180, %p181
      %p183 = scmp.ne.s32.totalorder %s171, %s172
      %p184 = scmp.eq.s32.totalorder %s40, 1
      %p185 = por %p183, %p184
      %p187 = scmp.ne.s32.totalorder %s172, %s186
      %p188 = scmp.eq.s32.totalorder %s40, 0
      %p189 = por %p187, %p188
      %s190 = ssub.s32 %s41, %s53
      %p191 = scmp.eq.s32.totalorder %s190, 0
      %s193 = sadd.s32 %s192, 1
      %s194 = scalar_select %p191, %s192, %s193
      %p197 = pneg %p191
      %p198 = scmp.eq.s32.totalorder %s34, 1
      %p199 = por %p197, %p198
      %p200 = scmp.ne.s32.totalorder %s192, %s195
      %p201 = scmp.eq.s32.totalorder %s34, 0
      %p202 = por %p200, %p201
      %p203 = scmp.ne.s32.totalorder %s192, %s195
      %p204 = scmp.eq.s32.totalorder %s39, 1
      %p205 = por %p203, %p204
      %p206 = scmp.ne.s32.totalorder %s195, %s196
      %p207 = scmp.eq.s32.totalorder %s39, 0
      %p208 = por %p206, %p207
      %p209 = scmp.ne.s32.totalorder %s195, %s196
      %p210 = scmp.eq.s32.totalorder %s40, 1
      %p211 = por %p209, %p210
      %p213 = scmp.ne.s32.totalorder %s196, %s212
      %p214 = scmp.eq.s32.totalorder %s40, 0
      %p215 = por %p213, %p214
      %s217 = sadd.s32 %s216, 1
      %p220 = scmp.eq.s32.totalorder %s34, 1
      %p221 = scmp.ne.s32.totalorder %s216, %s218
      %p222 = scmp.eq.s32.totalorder %s34, 0
      %p223 = por %p221, %p222
      %p224 = scmp.ne.s32.totalorder %s216, %s218
      %p225 = scmp.eq.s32.totalorder %s39, 1
      %p226 = por %p224, %p225
      %p227 = scmp.ne.s32.totalorder %s218, %s219
      %p228 = scmp.eq.s32.totalorder %s39, 0
      %p229 = por %p227, %p228
      %p230 = scmp.ne.s32.totalorder %s218, %s219
      %p231 = scmp.eq.s32.totalorder %s40, 1
      %p232 = por %p230, %p231
      %p234 = scmp.ne.s32.totalorder %s219, %s233
      %p235 = scmp.eq.s32.totalorder %s40, 0
      %p236 = por %p234, %p235
      %s238 = sadd.s32 %s237, 1
      %p241 = scmp.eq.s32.totalorder %s34, 1
      %p242 = scmp.ne.s32.totalorder %s237, %s239
      %p243 = scmp.eq.s32.totalorder %s34, 0
      %p244 = por %p242, %p243
      %p245 = scmp.ne.s32.totalorder %s237, %s239
      %p246 = scmp.eq.s32.totalorder %s39, 1
      %p247 = por %p245, %p246
      %p248 = scmp.ne.s32.totalorder %s239, %s240
      %p249 = scmp.eq.s32.totalorder %s39, 0
      %p250 = por %p248, %p249
      %p251 = scmp.ne.s32.totalorder %s239, %s240
      %p252 = scmp.eq.s32.totalorder %s40, 1
      %p253 = por %p251, %p252
      %p255 = scmp.ne.s32.totalorder %s240, %s254
      %p256 = scmp.eq.s32.totalorder %s40, 0
      %p257 = por %p255, %p256
      %s258 = ssub.s32 %s42, %s49
      %p259 = scmp.eq.s32.totalorder %s258, 0
      %s261 = sadd.s32 %s260, 1
      %s262 = scalar_select %p259, %s260, %s261
      %p265 = pneg %p259
      %p266 = scmp.eq.s32.totalorder %s34, 1
      %p267 = por %p265, %p266
      %p268 = scmp.ne.s32.totalorder %s260, %s263
      %p269 = scmp.eq.s32.totalorder %s34, 0
      %p270 = por %p268, %p269
      %p271 = scmp.ne.s32.totalorder %s260, %s263
      %p272 = scmp.eq.s32.totalorder %s39, 1
      %p273 = por %p271, %p272
      %p274 = scmp.ne.s32.totalorder %s263, %s264
      %p275 = scmp.eq.s32.totalorder %s39, 0
      %p276 = por %p274, %p275
      %p277 = scmp.ne.s32.totalorder %s263, %s264
      %p278 = scmp.eq.s32.totalorder %s40, 1
      %p279 = por %p277, %p278
      %p281 = scmp.ne.s32.totalorder %s264, %s280
      %p282 = scmp.eq.s32.totalorder %s40, 0
      %p283 = por %p281, %p282
      %s284 = ssub.s32 %s42, %s49
      %p285 = scmp.eq.s32.totalorder %s284, 0
      %s287 = sadd.s32 %s286, 1
      %s288 = scalar_select %p285, %s286, %s287
      %p291 = pneg %p285
      %p292 = scmp.eq.s32.totalorder %s34, 1
      %p293 = por %p291, %p292
      %p294 = scmp.ne.s32.totalorder %s286, %s289
      %p295 = scmp.eq.s32.totalorder %s34, 0
      %p296 = por %p294, %p295
      %p297 = scmp.ne.s32.totalorder %s286, %s289
      %p298 = scmp.eq.s32.totalorder %s39, 1
      %p299 = por %p297, %p298
      %p300 = scmp.ne.s32.totalorder %s289, %s290
      %p301 = scmp.eq.s32.totalorder %s39, 0
      %p302 = por %p300, %p301
      %p303 = scmp.ne.s32.totalorder %s289, %s290
      %p304 = scmp.eq.s32.totalorder %s40, 1
      %p305 = por %p303, %p304
      %p307 = scmp.ne.s32.totalorder %s290, %s306
      %p308 = scmp.eq.s32.totalorder %s40, 0
      %p309 = por %p307, %p308
      %s310 = ssub.s32 %s42, %s49
      %p311 = scmp.eq.s32.totalorder %s310, 0
      %s313 = sadd.s32 %s312, 1
      %s314 = scalar_select %p311, %s312, %s313
      %p317 = pneg %p311
      %p318 = scmp.eq.s32.totalorder %s34, 1
      %p319 = por %p317, %p318
      %p320 = scmp.ne.s32.totalorder %s312, %s315
      %p321 = scmp.eq.s32.totalorder %s34, 0
      %p322 = por %p320, %p321
      %p323 = scmp.ne.s32.totalorder %s312, %s315
      %p324 = scmp.eq.s32.totalorder %s39, 1
      %p325 = por %p323, %p324
      %p326 = scmp.ne.s32.totalorder %s315, %s316
      %p327 = scmp.eq.s32.totalorder %s39, 0
      %p328 = por %p326, %p327
      %p329 = scmp.ne.s32.totalorder %s315, %s316
      %p330 = scmp.eq.s32.totalorder %s40, 1
      %p331 = por %p329, %p330
      %p333 = scmp.ne.s32.totalorder %s316, %s332
      %p334 = scmp.eq.s32.totalorder %s40, 0
      %p335 = por %p333, %p334
      %s336 = ssub.s32 %s42, %s49
      %p337 = scmp.eq.s32.totalorder %s336, 0
      %s339 = sadd.s32 %s338, 1
      %s340 = scalar_select %p337, %s338, %s339
      %p343 = pneg %p337
      %p344 = scmp.eq.s32.totalorder %s34, 1
      %p345 = por %p343, %p344
      %p346 = scmp.ne.s32.totalorder %s338, %s341
      %p347 = scmp.eq.s32.totalorder %s34, 0
      %p348 = por %p346, %p347
      %p349 = scmp.ne.s32.totalorder %s338, %s341
      %p350 = scmp.eq.s32.totalorder %s39, 1
      %p351 = por %p349, %p350
      %p352 = scmp.ne.s32.totalorder %s341, %s342
      %p353 = scmp.eq.s32.totalorder %s39, 0
      %p354 = por %p352, %p353
      %p355 = scmp.ne.s32.totalorder %s341, %s342
      %p356 = scmp.eq.s32.totalorder %s40, 1
      %p357 = por %p355, %p356
      %p359 = scmp.ne.s32.totalorder %s342, %s358
      %p360 = scmp.eq.s32.totalorder %s40, 0
      %p361 = por %p359, %p360
      %s362 = ssub.s32 %s42, %s49
      %p363 = scmp.eq.s32.totalorder %s362, 0
      %s365 = sadd.s32 %s364, 1
      %s366 = scalar_select %p363, %s364, %s365
      %p369 = pneg %p363
      %p370 = scmp.eq.s32.totalorder %s34, 1
      %p371 = por %p369, %p370
      %p372 = scmp.ne.s32.totalorder %s364, %s367
      %p373 = scmp.eq.s32.totalorder %s34, 0
      %p374 = por %p372, %p373
      %p375 = scmp.ne.s32.totalorder %s364, %s367
      %p376 = scmp.eq.s32.totalorder %s39, 1
      %p377 = por %p375, %p376
      %p378 = scmp.ne.s32.totalorder %s367, %s368
      %p379 = scmp.eq.s32.totalorder %s39, 0
      %p380 = por %p378, %p379
      %p381 = scmp.ne.s32.totalorder %s367, %s368
      %p382 = scmp.eq.s32.totalorder %s40, 1
      %p383 = por %p381, %p382
      %p385 = scmp.ne.s32.totalorder %s368, %s384
      %p386 = scmp.eq.s32.totalorder %s40, 0
      %p387 = por %p385, %p386
      %s388 = ssub.s32 %s42, %s49
      %p389 = scmp.eq.s32.totalorder %s388, 0
      %s391 = sadd.s32 %s390, 1
      %s392 = scalar_select %p389, %s390, %s391
      %p395 = pneg %p389
      %p396 = scmp.eq.s32.totalorder %s34, 1
      %p397 = por %p395, %p396
      %p398 = scmp.ne.s32.totalorder %s390, %s393
      %p399 = scmp.eq.s32.totalorder %s34, 0
      %p400 = por %p398, %p399
      %p401 = scmp.ne.s32.totalorder %s390, %s393
      %p402 = scmp.eq.s32.totalorder %s39, 1
      %p403 = por %p401, %p402
      %p404 = scmp.ne.s32.totalorder %s393, %s394
      %p405 = scmp.eq.s32.totalorder %s39, 0
      %p406 = por %p404, %p405
      %p407 = scmp.ne.s32.totalorder %s393, %s394
      %p408 = scmp.eq.s32.totalorder %s40, 1
      %p409 = por %p407, %p408
      %p411 = scmp.ne.s32.totalorder %s394, %s410
      %p412 = scmp.eq.s32.totalorder %s40, 0
      %p413 = por %p411, %p412
      %s414 = ssub.s32 %s42, %s49
      %p415 = scmp.eq.s32.totalorder %s414, 0
      %s417 = sadd.s32 %s416, 1
      %s418 = scalar_select %p415, %s416, %s417
      %p421 = pneg %p415
      %p422 = scmp.eq.s32.totalorder %s34, 1
      %p423 = por %p421, %p422
      %p424 = scmp.ne.s32.totalorder %s416, %s419
      %p425 = scmp.eq.s32.totalorder %s34, 0
      %p426 = por %p424, %p425
      %p427 = scmp.ne.s32.totalorder %s416, %s419
      %p428 = scmp.eq.s32.totalorder %s39, 1
      %p429 = por %p427, %p428
      %p430 = scmp.ne.s32.totalorder %s419, %s420
      %p431 = scmp.eq.s32.totalorder %s39, 0
      %p432 = por %p430, %p431
      %p433 = scmp.ne.s32.totalorder %s419, %s420
      %p434 = scmp.eq.s32.totalorder %s40, 1
      %p435 = por %p433, %p434
      %p437 = scmp.ne.s32.totalorder %s420, %s436
      %p438 = scmp.eq.s32.totalorder %s40, 0
      %p439 = por %p437, %p438
      %s440 = ssub.s32 %s42, %s49
      %p441 = scmp.eq.s32.totalorder %s440, 0
      %s443 = sadd.s32 %s442, 1
      %s444 = scalar_select %p441, %s442, %s443
      %p447 = pneg %p441
      %p448 = scmp.eq.s32.totalorder %s34, 1
      %p449 = por %p447, %p448
      %p450 = scmp.ne.s32.totalorder %s442, %s445
      %p451 = scmp.eq.s32.totalorder %s34, 0
      %p452 = por %p450, %p451
      %p453 = scmp.ne.s32.totalorder %s442, %s445
      %p454 = scmp.eq.s32.totalorder %s39, 1
      %p455 = por %p453, %p454
      %p456 = scmp.ne.s32.totalorder %s445, %s446
      %p457 = scmp.eq.s32.totalorder %s39, 0
      %p458 = por %p456, %p457
      %p459 = scmp.ne.s32.totalorder %s445, %s446
      %p460 = scmp.eq.s32.totalorder %s40, 1
      %p461 = por %p459, %p460
      %p463 = scmp.ne.s32.totalorder %s446, %s462
      %p464 = scmp.eq.s32.totalorder %s40, 0
      %p465 = por %p463, %p464
      %s466 = ssub.s32 %s42, %s49
      %p467 = scmp.eq.s32.totalorder %s466, 0
      %s469 = sadd.s32 %s468, 1
      %s470 = scalar_select %p467, %s468, %s469
      %p473 = pneg %p467
      %p474 = scmp.eq.s32.totalorder %s34, 1
      %p475 = por %p473, %p474
      %p476 = scmp.ne.s32.totalorder %s468, %s471
      %p477 = scmp.eq.s32.totalorder %s34, 0
      %p478 = por %p476, %p477
      %p479 = scmp.ne.s32.totalorder %s468, %s471
      %p480 = scmp.eq.s32.totalorder %s39, 1
      %p481 = por %p479, %p480
      %p482 = scmp.ne.s32.totalorder %s471, %s472
      %p483 = scmp.eq.s32.totalorder %s39, 0
      %p484 = por %p482, %p483
      %p485 = scmp.ne.s32.totalorder %s471, %s472
      %p486 = scmp.eq.s32.totalorder %s40, 1
      %p487 = por %p485, %p486
      %p489 = scmp.ne.s32.totalorder %s472, %s488
      %p490 = scmp.eq.s32.totalorder %s40, 0
      %p491 = por %p489, %p490
      %s492 = ssub.s32 %s42, %s49
      %p493 = scmp.eq.s32.totalorder %s492, 0
      %s495 = sadd.s32 %s494, 1
      %s496 = scalar_select %p493, %s494, %s495
      %p499 = pneg %p493
      %p500 = scmp.eq.s32.totalorder %s34, 1
      %p501 = por %p499, %p500
      %p502 = scmp.ne.s32.totalorder %s494, %s497
      %p503 = scmp.eq.s32.totalorder %s34, 0
      %p504 = por %p502, %p503
      %p505 = scmp.ne.s32.totalorder %s494, %s497
      %p506 = scmp.eq.s32.totalorder %s39, 1
      %p507 = por %p505, %p506
      %p508 = scmp.ne.s32.totalorder %s497, %s498
      %p509 = scmp.eq.s32.totalorder %s39, 0
      %p510 = por %p508, %p509
      %p511 = scmp.ne.s32.totalorder %s497, %s498
      %p512 = scmp.eq.s32.totalorder %s40, 1
      %p513 = por %p511, %p512
      %p515 = scmp.ne.s32.totalorder %s498, %s514
      %p516 = scmp.eq.s32.totalorder %s40, 0
      %p517 = por %p515, %p516
      %s518 = ssub.s32 %s42, %s49
      %p519 = scmp.eq.s32.totalorder %s518, 0
      %s521 = sadd.s32 %s520, 1
      %s522 = scalar_select %p519, %s520, %s521
      %p525 = pneg %p519
      %p526 = scmp.eq.s32.totalorder %s34, 1
      %p527 = por %p525, %p526
      %p528 = scmp.ne.s32.totalorder %s520, %s523
      %p529 = scmp.eq.s32.totalorder %s34, 0
      %p530 = por %p528, %p529
      %p531 = scmp.ne.s32.totalorder %s520, %s523
      %p532 = scmp.eq.s32.totalorder %s39, 1
      %p533 = por %p531, %p532
      %p534 = scmp.ne.s32.totalorder %s523, %s524
      %p535 = scmp.eq.s32.totalorder %s39, 0
      %p536 = por %p534, %p535
      %p537 = scmp.ne.s32.totalorder %s523, %s524
      %p538 = scmp.eq.s32.totalorder %s40, 1
      %p539 = por %p537, %p538
      %p541 = scmp.ne.s32.totalorder %s524, %s540
      %p542 = scmp.eq.s32.totalorder %s40, 0
      %p543 = por %p541, %p542
      %s544 = ssub.s32 %s42, %s49
      %p545 = scmp.eq.s32.totalorder %s544, 0
      %s547 = sadd.s32 %s546, 1
      %s548 = scalar_select %p545, %s546, %s547
      %p551 = pneg %p545
      %p552 = scmp.eq.s32.totalorder %s34, 1
      %p553 = por %p551, %p552
      %p554 = scmp.ne.s32.totalorder %s546, %s549
      %p555 = scmp.eq.s32.totalorder %s34, 0
      %p556 = por %p554, %p555
      %p557 = scmp.ne.s32.totalorder %s546, %s549
      %p558 = scmp.eq.s32.totalorder %s39, 1
      %p559 = por %p557, %p558
      %p560 = scmp.ne.s32.totalorder %s549, %s550
      %p561 = scmp.eq.s32.totalorder %s39, 0
      %p562 = por %p560, %p561
      %p563 = scmp.ne.s32.totalorder %s549, %s550
      %p564 = scmp.eq.s32.totalorder %s40, 1
      %p565 = por %p563, %p564
      %p567 = scmp.ne.s32.totalorder %s550, %s566
      %p568 = scmp.eq.s32.totalorder %s40, 0
      %p569 = por %p567, %p568
      %s570 = ssub.s32 %s42, %s49
      %p571 = scmp.eq.s32.totalorder %s570, 0
      %s573 = sadd.s32 %s572, 1
      %s574 = scalar_select %p571, %s572, %s573
      %p577 = pneg %p571
      %p578 = scmp.eq.s32.totalorder %s34, 1
      %p579 = por %p577, %p578
      %p580 = scmp.ne.s32.totalorder %s572, %s575
      %p581 = scmp.eq.s32.totalorder %s34, 0
      %p582 = por %p580, %p581
      %p583 = scmp.ne.s32.totalorder %s572, %s575
      %p584 = scmp.eq.s32.totalorder %s39, 1
      %p585 = por %p583, %p584
      %p586 = scmp.ne.s32.totalorder %s575, %s576
      %p587 = scmp.eq.s32.totalorder %s39, 0
      %p588 = por %p586, %p587
      %p589 = scmp.ne.s32.totalorder %s575, %s576
      %p590 = scmp.eq.s32.totalorder %s40, 1
      %p591 = por %p589, %p590
      %p593 = scmp.ne.s32.totalorder %s576, %s592
      %p594 = scmp.eq.s32.totalorder %s40, 0
      %p595 = por %p593, %p594
      %s596 = ssub.s32 %s42, %s49
      %p597 = scmp.eq.s32.totalorder %s596, 0
      %s599 = sadd.s32 %s598, 1
      %s600 = scalar_select %p597, %s598, %s599
      %p603 = pneg %p597
      %p604 = scmp.eq.s32.totalorder %s34, 1
      %p605 = por %p603, %p604
      %p606 = scmp.ne.s32.totalorder %s598, %s601
      %p607 = scmp.eq.s32.totalorder %s34, 0
      %p608 = por %p606, %p607
      %p609 = scmp.ne.s32.totalorder %s598, %s601
      %p610 = scmp.eq.s32.totalorder %s39, 1
      %p611 = por %p609, %p610
      %p612 = scmp.ne.s32.totalorder %s601, %s602
      %p613 = scmp.eq.s32.totalorder %s39, 0
      %p614 = por %p612, %p613
      %p615 = scmp.ne.s32.totalorder %s601, %s602
      %p616 = scmp.eq.s32.totalorder %s40, 1
      %p617 = por %p615, %p616
      %p619 = scmp.ne.s32.totalorder %s602, %s618
      %p620 = scmp.eq.s32.totalorder %s40, 0
      %p621 = por %p619, %p620
      %s622 = ssub.s32 %s42, %s49
      %p623 = scmp.eq.s32.totalorder %s622, 0
      %s625 = sadd.s32 %s624, 1
      %s626 = scalar_select %p623, %s624, %s625
      %p629 = pneg %p623
      %p630 = scmp.eq.s32.totalorder %s34, 1
      %p631 = por %p629, %p630
      %p632 = scmp.ne.s32.totalorder %s624, %s627
      %p633 = scmp.eq.s32.totalorder %s34, 0
      %p634 = por %p632, %p633
      %p635 = scmp.ne.s32.totalorder %s624, %s627
      %p636 = scmp.eq.s32.totalorder %s39, 1
      %p637 = por %p635, %p636
      %p638 = scmp.ne.s32.totalorder %s627, %s628
      %p639 = scmp.eq.s32.totalorder %s39, 0
      %p640 = por %p638, %p639
      %p641 = scmp.ne.s32.totalorder %s627, %s628
      %p642 = scmp.eq.s32.totalorder %s40, 1
      %p643 = por %p641, %p642
      %p645 = scmp.ne.s32.totalorder %s628, %s644
      %p646 = scmp.eq.s32.totalorder %s40, 0
      %p647 = por %p645, %p646
      %s648 = ssub.s32 %s42, %s49
      %p649 = scmp.eq.s32.totalorder %s648, 0
      %s651 = sadd.s32 %s650, 1
      %s652 = scalar_select %p649, %s650, %s651
      %p655 = pneg %p649
      %p656 = scmp.eq.s32.totalorder %s34, 1
      %p657 = por %p655, %p656
      %p658 = scmp.ne.s32.totalorder %s650, %s653
      %p659 = scmp.eq.s32.totalorder %s34, 0
      %p660 = por %p658, %p659
      %p661 = scmp.ne.s32.totalorder %s650, %s653
      %p662 = scmp.eq.s32.totalorder %s39, 1
      %p663 = por %p661, %p662
      %p664 = scmp.ne.s32.totalorder %s653, %s654
      %p665 = scmp.eq.s32.totalorder %s39, 0
      %p666 = por %p664, %p665
      %p667 = scmp.ne.s32.totalorder %s653, %s654
      %p668 = scmp.eq.s32.totalorder %s40, 1
      %p669 = por %p667, %p668
      %p671 = scmp.ne.s32.totalorder %s654, %s670
      %p672 = scmp.eq.s32.totalorder %s40, 0
      %p673 = por %p671, %p672
      %s675 = sadd.s32 %s674, 1
      %p678 = scmp.eq.s32.totalorder %s34, 1
      %p679 = scmp.ne.s32.totalorder %s674, %s676
      %p680 = scmp.eq.s32.totalorder %s34, 0
      %p681 = por %p679, %p680
      %p682 = scmp.ne.s32.totalorder %s674, %s676
      %p683 = scmp.eq.s32.totalorder %s39, 1
      %p684 = por %p682, %p683
      %p685 = scmp.ne.s32.totalorder %s676, %s677
      %p686 = scmp.eq.s32.totalorder %s39, 0
      %p687 = por %p685, %p686
      %p688 = scmp.ne.s32.totalorder %s676, %s677
      %p689 = scmp.eq.s32.totalorder %s40, 1
      %p690 = por %p688, %p689
      %p692 = scmp.ne.s32.totalorder %s677, %s691
      %p693 = scmp.eq.s32.totalorder %s40, 0
      %p694 = por %p692, %p693
      %s696 = sadd.s32 %s695, 1
      %p699 = scmp.eq.s32.totalorder %s34, 1
      %p700 = scmp.ne.s32.totalorder %s695, %s697
      %p701 = scmp.eq.s32.totalorder %s34, 0
      %p702 = por %p700, %p701
      %p703 = scmp.ne.s32.totalorder %s695, %s697
      %p704 = scmp.eq.s32.totalorder %s39, 1
      %p705 = por %p703, %p704
      %p706 = scmp.ne.s32.totalorder %s697, %s698
      %p707 = scmp.eq.s32.totalorder %s39, 0
      %p708 = por %p706, %p707
      %p709 = scmp.ne.s32.totalorder %s697, %s698
      %p710 = scmp.eq.s32.totalorder %s40, 1
      %p711 = por %p709, %p710
      %p713 = scmp.ne.s32.totalorder %s698, %s712
      %p714 = scmp.eq.s32.totalorder %s40, 0
      %p715 = por %p713, %p714
      %s716 = ssub.s32 %s41, %s53
      %p717 = scmp.eq.s32.totalorder %s716, 0
      %s719 = sadd.s32 %s718, 1
      %s720 = scalar_select %p717, %s718, %s719
      %p723 = pneg %p717
      %p724 = scmp.eq.s32.totalorder %s34, 1
      %p725 = por %p723, %p724
      %p726 = scmp.ne.s32.totalorder %s718, %s721
      %p727 = scmp.eq.s32.totalorder %s34, 0
      %p728 = por %p726, %p727
      %p729 = scmp.ne.s32.totalorder %s718, %s721
      %p730 = scmp.eq.s32.totalorder %s39, 1
      %p731 = por %p729, %p730
      %p732 = scmp.ne.s32.totalorder %s721, %s722
      %p733 = scmp.eq.s32.totalorder %s39, 0
      %p734 = por %p732, %p733
      %p735 = scmp.ne.s32.totalorder %s721, %s722
      %p736 = scmp.eq.s32.totalorder %s40, 1
      %p737 = por %p735, %p736
      %p739 = scmp.ne.s32.totalorder %s722, %s738
      %p740 = scmp.eq.s32.totalorder %s40, 0
      %p741 = por %p739, %p740
      %p742 = scmp.le.s32.totalorder 1, %s34
      %p743 = scmp.lt.s32.totalorder %s34, 3
      %p744 = pnand %p742, %p743
      %p745 = pneg %p744
      // Predicated region
      $region9: #{tpu_custom_call.1} parent=5 // pred_check
        _
      $region10: #{tpu_custom_call.1} parent=5 // pred_check_branch
        %747 = sbr.rel (%p744) target = $region12
      $region11: #{tpu_custom_call.1} parent=5 // pred_region
        %s748 = ssub.s32 %s34, 1
        // Predicated region
        $region13: #{tpu_custom_call.1} parent=11 // pred_check
          %p749 = pneg %p72
        $region14: #{tpu_custom_call.1} parent=11 // pred_check_branch
          %751 = sbr.rel (%p749) target = $region16
        $region15: #{tpu_custom_call.1} parent=11 // pred_region
          %p752 = scmp.lt.s32.totalorder %s43, 0
          %s753 = scalar_select %p752, %s43, 0
          %s754 = smul.addr %s753, 16
          %s755 = scalar_lea.vmem %s0, %s754
        $region16: #{tpu_custom_call.1} parent=11 // pred_fallthru
          _
        // Predicated region
        $region17: #{tpu_custom_call.1} parent=11 // pred_check
          %p756 = pneg %p93
        $region18: #{tpu_custom_call.1} parent=11 // pred_check_branch
          %758 = sbr.rel (%p756) target = $region20
        $region19: #{tpu_custom_call.1} parent=11 // pred_region
          _
        $region20: #{tpu_custom_call.1} parent=11 // pred_fallthru
          _
        // Predicated region
        $region21: #{tpu_custom_call.1} parent=11 // pred_check
          %p759 = pneg %p114
        $region22: #{tpu_custom_call.1} parent=11 // pred_check_branch
          %761 = sbr.rel (%p759) target = $region24
        $region23: #{tpu_custom_call.1} parent=11 // pred_region
          _
        $region24: #{tpu_custom_call.1} parent=11 // pred_fallthru
          _
        // Predicated region
        $region25: #{tpu_custom_call.1} parent=11 // pred_check
          %p762 = pneg %p140
        $region26: #{tpu_custom_call.1} parent=11 // pred_check_branch
          %764 = sbr.rel (%p762) target = $region28
        $region27: #{tpu_custom_call.1} parent=11 // pred_region
          %p765 = scmp.lt.s32.totalorder %s43, 0
          %s766 = scalar_select %p765, %s43, 0
          %s767 = smul.addr %s766, 16
          %s768 = scalar_lea.vmem %s3, %s767
        $region28: #{tpu_custom_call.1} parent=11 // pred_fallthru
          _
        // Predicated region
        $region29: #{tpu_custom_call.1} parent=11 // pred_check
          %p769 = pneg %p161
        $region30: #{tpu_custom_call.1} parent=11 // pred_check_branch
          %771 = sbr.rel (%p769) target = $region32
        $region31: #{tpu_custom_call.1} parent=11 // pred_region
          _
        $region32: #{tpu_custom_call.1} parent=11 // pred_fallthru
          _
        // Predicated region
        $region33: #{tpu_custom_call.1} parent=11 // pred_check
          %p772 = pneg %p182
        $region34: #{tpu_custom_call.1} parent=11 // pred_check_branch
          %774 = sbr.rel (%p772) target = $region36
        $region35: #{tpu_custom_call.1} parent=11 // pred_region
          _
        $region36: #{tpu_custom_call.1} parent=11 // pred_fallthru
          _
        // Predicated region
        $region37: #{tpu_custom_call.1} parent=11 // pred_check
          %p775 = pneg %p208
        $region38: #{tpu_custom_call.1} parent=11 // pred_check_branch
          %777 = sbr.rel (%p775) target = $region40
        $region39: #{tpu_custom_call.1} parent=11 // pred_region
          %p778 = scmp.lt.s32.totalorder %s43, 0
          %s779 = scalar_select %p778, %s43, 0
          %s780 = smul.addr %s779, 4
          %s781 = scalar_lea.vmem %s6, %s780
        $region40: #{tpu_custom_call.1} parent=11 // pred_fallthru
          _
        // Predicated region
        $region41: #{tpu_custom_call.1} parent=11 // pred_check
          %p782 = pneg %p229
        $region42: #{tpu_custom_call.1} parent=11 // pred_check_branch
          %784 = sbr.rel (%p782) target = $region44
        $region43: #{tpu_custom_call.1} parent=11 // pred_region
          _
        $region44: #{tpu_custom_call.1} parent=11 // pred_fallthru
          _
        // Predicated region
        $region45: #{tpu_custom_call.1} parent=11 // pred_check
          %p785 = pneg %p250
        $region46: #{tpu_custom_call.1} parent=11 // pred_check_branch
          %787 = sbr.rel (%p785) target = $region48
        $region47: #{tpu_custom_call.1} parent=11 // pred_region
          _
        $region48: #{tpu_custom_call.1} parent=11 // pred_fallthru
          _
        // Predicated region
        $region49: #{tpu_custom_call.1} parent=11 // pred_check
          %p788 = pneg %p687
        $region50: #{tpu_custom_call.1} parent=11 // pred_check_branch
          %790 = sbr.rel (%p788) target = $region52
        $region51: #{tpu_custom_call.1} parent=11 // pred_region
          _
        $region52: #{tpu_custom_call.1} parent=11 // pred_fallthru
          _
        // Predicated region
        $region53: #{tpu_custom_call.1} parent=11 // pred_check
          %p791 = pneg %p708
        $region54: #{tpu_custom_call.1} parent=11 // pred_check_branch
          %793 = sbr.rel (%p791) target = $region56
        $region55: #{tpu_custom_call.1} parent=11 // pred_region
          _
        $region56: #{tpu_custom_call.1} parent=11 // pred_fallthru
          _
      $region12: #{tpu_custom_call.1} parent=5 // pred_fallthru
        _
      %p794 = scmp.lt.s32.totalorder %s34, 2
      // Predicated region
      $region57: #{tpu_custom_call.1} parent=5 // pred_check
        %p795 = pneg %p794
      $region58: #{tpu_custom_call.1} parent=5 // pred_check_branch
        %797 = sbr.rel (%p795) target = $region60
      $region59: #{tpu_custom_call.1} parent=5 // pred_region
        // Predicated region
        $region61: #{tpu_custom_call.1} parent=59 // pred_check
          %p798 = pneg %p270
        $region62: #{tpu_custom_call.1} parent=59 // pred_check_branch
          %800 = sbr.rel (%p798) target = $region64
        $region63: #{tpu_custom_call.1} parent=59 // pred_region
          %p801 = scmp.lt.s32.totalorder %s42, 1
          %s802 = scalar_select %p801, %s42, 1
          %s803 = smul.addr %s802, 4
          %s804 = smul.addr %s803, 4
          %s805 = scalar_lea.vmem %s9, %s804
        $region64: #{tpu_custom_call.1} parent=59 // pred_fallthru
          _
        // Predicated region
        $region65: #{tpu_custom_call.1} parent=59 // pred_check
          %p806 = pneg %p296
        $region66: #{tpu_custom_call.1} parent=59 // pred_check_branch
          %808 = sbr.rel (%p806) target = $region68
        $region67: #{tpu_custom_call.1} parent=59 // pred_region
          %p809 = scmp.lt.s32.totalorder %s42, 1
          %s810 = scalar_select %p809, %s42, 1
          %s811 = smul.addr %s810, 4
          %s812 = smul.addr %s811, 4
          %s813 = scalar_lea.vmem %s10, %s812
        $region68: #{tpu_custom_call.1} parent=59 // pred_fallthru
          _
        // Predicated region
        $region69: #{tpu_custom_call.1} parent=59 // pred_check
          %p814 = pneg %p322
        $region70: #{tpu_custom_call.1} parent=59 // pred_check_branch
          %816 = sbr.rel (%p814) target = $region72
        $region71: #{tpu_custom_call.1} parent=59 // pred_region
          %p817 = scmp.lt.s32.totalorder %s42, 1
          %s818 = scalar_select %p817, %s42, 1
          %s819 = smul.addr %s818, 4
          %s820 = smul.addr %s819, 4
          %s821 = scalar_lea.vmem %s11, %s820
        $region72: #{tpu_custom_call.1} parent=59 // pred_fallthru
          _
        // Predicated region
        $region73: #{tpu_custom_call.1} parent=59 // pred_check
          %p822 = pneg %p348
        $region74: #{tpu_custom_call.1} parent=59 // pred_check_branch
          %824 = sbr.rel (%p822) target = $region76
        $region75: #{tpu_custom_call.1} parent=59 // pred_region
          %p825 = scmp.lt.s32.totalorder %s42, 1
          %s826 = scalar_select %p825, %s42, 1
          %s827 = scalar_lea.vmem %s12, %s826
        $region76: #{tpu_custom_call.1} parent=59 // pred_fallthru
          _
        // Predicated region
        $region77: #{tpu_custom_call.1} parent=59 // pred_check
          %p828 = pneg %p374
        $region78: #{tpu_custom_call.1} parent=59 // pred_check_branch
          %830 = sbr.rel (%p828) target = $region80
        $region79: #{tpu_custom_call.1} parent=59 // pred_region
          %p831 = scmp.lt.s32.totalorder %s42, 1
          %s832 = scalar_select %p831, %s42, 1
          %s833 = scalar_lea.vmem %s13, %s832
        $region80: #{tpu_custom_call.1} parent=59 // pred_fallthru
          _
        // Predicated region
        $region81: #{tpu_custom_call.1} parent=59 // pred_check
          %p834 = pneg %p400
        $region82: #{tpu_custom_call.1} parent=59 // pred_check_branch
          %836 = sbr.rel (%p834) target = $region84
        $region83: #{tpu_custom_call.1} parent=59 // pred_region
          %p837 = scmp.lt.s32.totalorder %s42, 1
          %s838 = scalar_select %p837, %s42, 1
          %s839 = scalar_lea.vmem %s14, %s838
        $region84: #{tpu_custom_call.1} parent=59 // pred_fallthru
          _
        // Predicated region
        $region85: #{tpu_custom_call.1} parent=59 // pred_check
          %p840 = pneg %p426
        $region86: #{tpu_custom_call.1} parent=59 // pred_check_branch
          %842 = sbr.rel (%p840) target = $region88
        $region87: #{tpu_custom_call.1} parent=59 // pred_region
          %p843 = scmp.lt.s32.totalorder %s42, 1
          %s844 = scalar_select %p843, %s42, 1
          %s845 = smul.addr %s844, 4
          %s846 = smul.addr %s845, 4
          %s847 = scalar_lea.vmem %s15, %s846
        $region88: #{tpu_custom_call.1} parent=59 // pred_fallthru
          _
        // Predicated region
        $region89: #{tpu_custom_call.1} parent=59 // pred_check
          %p848 = pneg %p452
        $region90: #{tpu_custom_call.1} parent=59 // pred_check_branch
          %850 = sbr.rel (%p848) target = $region92
        $region91: #{tpu_custom_call.1} parent=59 // pred_region
          %p851 = scmp.lt.s32.totalorder %s42, 1
          %s852 = scalar_select %p851, %s42, 1
          %s853 = scalar_lea.vmem %s16, %s852
        $region92: #{tpu_custom_call.1} parent=59 // pred_fallthru
          _
        // Predicated region
        $region93: #{tpu_custom_call.1} parent=59 // pred_check
          %p854 = pneg %p478
        $region94: #{tpu_custom_call.1} parent=59 // pred_check_branch
          %856 = sbr.rel (%p854) target = $region96
        $region95: #{tpu_custom_call.1} parent=59 // pred_region
          %p857 = scmp.lt.s32.totalorder %s42, 1
          %s858 = scalar_select %p857, %s42, 1
          %s859 = scalar_lea.vmem %s17, %s858
        $region96: #{tpu_custom_call.1} parent=59 // pred_fallthru
          _
        // Predicated region
        $region97: #{tpu_custom_call.1} parent=59 // pred_check
          %p860 = pneg %p504
        $region98: #{tpu_custom_call.1} parent=59 // pred_check_branch
          %862 = sbr.rel (%p860) target = $region100
        $region99: #{tpu_custom_call.1} parent=59 // pred_region
          %p863 = scmp.lt.s32.totalorder %s42, 1
          %s864 = scalar_select %p863, %s42, 1
          %s865 = scalar_lea.vmem %s18, %s864
        $region100: #{tpu_custom_call.1} parent=59 // pred_fallthru
          _
        // Predicated region
        $region101: #{tpu_custom_call.1} parent=59 // pred_check
          %p866 = pneg %p530
        $region102: #{tpu_custom_call.1} parent=59 // pred_check_branch
          %868 = sbr.rel (%p866) target = $region104
        $region103: #{tpu_custom_call.1} parent=59 // pred_region
          %p869 = scmp.lt.s32.totalorder %s42, 1
          %s870 = scalar_select %p869, %s42, 1
          %s871 = smul.addr %s870, 4
          %s872 = smul.addr %s871, 4
          %s873 = scalar_lea.vmem %s19, %s872
        $region104: #{tpu_custom_call.1} parent=59 // pred_fallthru
          _
        // Predicated region
        $region105: #{tpu_custom_call.1} parent=59 // pred_check
          %p874 = pneg %p556
        $region106: #{tpu_custom_call.1} parent=59 // pred_check_branch
          %876 = sbr.rel (%p874) target = $region108
        $region107: #{tpu_custom_call.1} parent=59 // pred_region
          %p877 = scmp.lt.s32.totalorder %s42, 1
          %s878 = scalar_select %p877, %s42, 1
          %s879 = scalar_lea.vmem %s20, %s878
        $region108: #{tpu_custom_call.1} parent=59 // pred_fallthru
          _
        // Predicated region
        $region109: #{tpu_custom_call.1} parent=59 // pred_check
          %p880 = pneg %p582
        $region110: #{tpu_custom_call.1} parent=59 // pred_check_branch
          %882 = sbr.rel (%p880) target = $region112
        $region111: #{tpu_custom_call.1} parent=59 // pred_region
          %p883 = scmp.lt.s32.totalorder %s42, 1
          %s884 = scalar_select %p883, %s42, 1
          %s885 = smul.addr %s884, 16
          %s886 = smul.addr %s885, 4
          %s887 = scalar_lea.vmem %s21, %s886
        $region112: #{tpu_custom_call.1} parent=59 // pred_fallthru
          _
        // Predicated region
        $region113: #{tpu_custom_call.1} parent=59 // pred_check
          %p888 = pneg %p608
        $region114: #{tpu_custom_call.1} parent=59 // pred_check_branch
          %890 = sbr.rel (%p888) target = $region116
        $region115: #{tpu_custom_call.1} parent=59 // pred_region
          %p891 = scmp.lt.s32.totalorder %s42, 1
          %s892 = scalar_select %p891, %s42, 1
          %s893 = scalar_lea.vmem %s22, %s892
        $region116: #{tpu_custom_call.1} parent=59 // pred_fallthru
          _
        // Predicated region
        $region117: #{tpu_custom_call.1} parent=59 // pred_check
          %p894 = pneg %p634
        $region118: #{tpu_custom_call.1} parent=59 // pred_check_branch
          %896 = sbr.rel (%p894) target = $region120
        $region119: #{tpu_custom_call.1} parent=59 // pred_region
          %p897 = scmp.lt.s32.totalorder %s42, 1
          %s898 = scalar_select %p897, %s42, 1
          %s899 = scalar_lea.vmem %s23, %s898
        $region120: #{tpu_custom_call.1} parent=59 // pred_fallthru
          _
        // Predicated region
        $region121: #{tpu_custom_call.1} parent=59 // pred_check
          %p900 = pneg %p660
        $region122: #{tpu_custom_call.1} parent=59 // pred_check_branch
          %902 = sbr.rel (%p900) target = $region124
        $region123: #{tpu_custom_call.1} parent=59 // pred_region
          %p903 = scmp.lt.s32.totalorder %s42, 1
          %s904 = scalar_select %p903, %s42, 1
          %s905 = scalar_lea.vmem %s24, %s904
        $region124: #{tpu_custom_call.1} parent=59 // pred_fallthru
          _
      $region60: #{tpu_custom_call.1} parent=5 // pred_fallthru
        _
      %p906 = scmp.le.s32.totalorder 1, %s34
      %p907 = scmp.lt.s32.totalorder %s34, 3
      %p908 = pnand %p906, %p907
      %p909 = pneg %p908
      // Predicated region
      $region125: #{tpu_custom_call.1} parent=5 // pred_check
        _
      $region126: #{tpu_custom_call.1} parent=5 // pred_check_branch
        %911 = sbr.rel (%p908) target = $region128
      $region127: #{tpu_custom_call.1} parent=5 // pred_region
        %s912 = ssub.s32 %s34, 1
        %p913 = scmp.lt.s32.totalorder %s43, 0
        %s914 = scalar_select %p913, %s43, 0
        %s915 = smul.addr %s914, 16
        %s916 = scalar_lea.vmem %s0, %s915
        %p917 = pneg %p72
        %p918 = pneg %p69
        %p919 = pneg %p93
        %p920 = pneg %p90
        %p921 = pneg %p114
        %p922 = pneg %p111
        %p923 = scmp.lt.s32.totalorder %s43, 0
        %s924 = scalar_select %p923, %s43, 0
        %s925 = smul.addr %s924, 16
        %s926 = scalar_lea.vmem %s3, %s925
        %p927 = pneg %p140
        %p928 = pneg %p137
        %p929 = pneg %p161
        %p930 = pneg %p158
        %p931 = pneg %p182
        %p932 = pneg %p179
        %p933 = scmp.lt.s32.totalorder %s43, 0
        %s934 = scalar_select %p933, %s43, 0
        %s935 = smul.addr %s934, 4
        %s936 = scalar_lea.vmem %s6, %s935
        %p937 = pneg %p208
        %p938 = pneg %p205
        %p939 = pneg %p229
        %p940 = pneg %p226
        %p941 = pneg %p250
        %p942 = pneg %p247
        %p943 = scmp.lt.s32.totalorder %s44, 1
        %s944 = scalar_select %p943, %s44, 1
        %s945 = smul.addr %s944, 4
        %s946 = smul.addr %s945, 4
        %s947 = scalar_lea.vmem %s9, %s946
        %p948 = pneg %p276
        %p949 = pneg %p273
        %p950 = scmp.lt.s32.totalorder %s44, 1
        %s951 = scalar_select %p950, %s44, 1
        %s952 = smul.addr %s951, 4
        %s953 = smul.addr %s952, 4
        %s954 = scalar_lea.vmem %s10, %s953
        %p955 = pneg %p302
        %p956 = pneg %p299
        %p957 = scmp.lt.s32.totalorder %s44, 1
        %s958 = scalar_select %p957, %s44, 1
        %s959 = smul.addr %s958, 4
        %s960 = smul.addr %s959, 4
        %s961 = scalar_lea.vmem %s11, %s960
        %p962 = pneg %p328
        %p963 = pneg %p325
        %p964 = scmp.lt.s32.totalorder %s44, 1
        %s965 = scalar_select %p964, %s44, 1
        %s966 = scalar_lea.vmem %s12, %s965
        %p967 = pneg %p354
        %p968 = pneg %p351
        %p969 = scmp.lt.s32.totalorder %s44, 1
        %s970 = scalar_select %p969, %s44, 1
        %s971 = scalar_lea.vmem %s13, %s970
        %p972 = pneg %p380
        %p973 = pneg %p377
        %p974 = scmp.lt.s32.totalorder %s44, 1
        %s975 = scalar_select %p974, %s44, 1
        %s976 = scalar_lea.vmem %s14, %s975
        %p977 = pneg %p406
        %p978 = pneg %p403
        %p979 = scmp.lt.s32.totalorder %s44, 1
        %s980 = scalar_select %p979, %s44, 1
        %s981 = smul.addr %s980, 4
        %s982 = smul.addr %s981, 4
        %s983 = scalar_lea.vmem %s15, %s982
        %p984 = pneg %p432
        %p985 = pneg %p429
        %p986 = scmp.lt.s32.totalorder %s44, 1
        %s987 = scalar_select %p986, %s44, 1
        %s988 = scalar_lea.vmem %s16, %s987
        %p989 = pneg %p458
        %p990 = pneg %p455
        %p991 = scmp.lt.s32.totalorder %s44, 1
        %s992 = scalar_select %p991, %s44, 1
        %s993 = scalar_lea.vmem %s17, %s992
        %p994 = pneg %p484
        %p995 = pneg %p481
        %p996 = scmp.lt.s32.totalorder %s44, 1
        %s997 = scalar_select %p996, %s44, 1
        %s998 = scalar_lea.vmem %s18, %s997
        %p999 = pneg %p510
        %p1000 = pneg %p507
        %p1001 = scmp.lt.s32.totalorder %s44, 1
        %s1002 = scalar_select %p1001, %s44, 1
        %s1003 = smul.addr %s1002, 4
        %s1004 = smul.addr %s1003, 4
        %s1005 = scalar_lea.vmem %s19, %s1004
        %p1006 = pneg %p536
        %p1007 = pneg %p533
        %p1008 = scmp.lt.s32.totalorder %s44, 1
        %s1009 = scalar_select %p1008, %s44, 1
        %s1010 = scalar_lea.vmem %s20, %s1009
        %p1011 = pneg %p562
        %p1012 = pneg %p559
        %p1013 = scmp.lt.s32.totalorder %s44, 1
        %s1014 = scalar_select %p1013, %s44, 1
        %s1015 = smul.addr %s1014, 16
        %s1016 = smul.addr %s1015, 4
        %s1017 = scalar_lea.vmem %s21, %s1016
        %p1018 = pneg %p588
        %p1019 = pneg %p585
        %p1020 = scmp.lt.s32.totalorder %s44, 1
        %s1021 = scalar_select %p1020, %s44, 1
        %s1022 = scalar_lea.vmem %s22, %s1021
        %p1023 = pneg %p614
        %p1024 = pneg %p611
        %p1025 = scmp.lt.s32.totalorder %s44, 1
        %s1026 = scalar_select %p1025, %s44, 1
        %s1027 = scalar_lea.vmem %s23, %s1026
        %p1028 = pneg %p640
        %p1029 = pneg %p637
        %p1030 = scmp.lt.s32.totalorder %s44, 1
        %s1031 = scalar_select %p1030, %s44, 1
        %s1032 = scalar_lea.vmem %s24, %s1031
        %p1033 = pneg %p666
        %p1034 = pneg %p663
        %p1035 = pneg %p687
        %p1036 = pneg %p684
        %p1037 = pneg %p708
        %p1038 = pneg %p705
        %p1039 = pneg %p734
        %p1040 = pneg %p731
        %p1041 = scmp.lt.s32.totalorder %s43, 0
        %s1042 = scalar_select %p1041, %s43, 0
        %s1043 = smul.addr %s1042, 16
        %s1044 = scalar_lea.vmem %s0, %s1043
        %p1045 = scmp.lt.s32.totalorder %s43, 0
        %s1046 = scalar_select %p1045, %s43, 0
        %s1047 = smul.addr %s1046, 16
        %s1048 = scalar_lea.vmem %s3, %s1047
        %p1049 = scmp.lt.s32.totalorder %s43, 0
        %s1050 = scalar_select %p1049, %s43, 0
        %s1051 = smul.addr %s1050, 4
        %s1052 = scalar_lea.vmem %s6, %s1051
        %p1053 = scmp.lt.s32.totalorder %s44, 1
        %s1054 = scalar_select %p1053, %s44, 1
        %s1055 = smul.addr %s1054, 4
        %s1056 = smul.addr %s1055, 4
        %s1057 = scalar_lea.vmem %s9, %s1056
        %p1058 = scmp.lt.s32.totalorder %s44, 1
        %s1059 = scalar_select %p1058, %s44, 1
        %s1060 = smul.addr %s1059, 4
        %s1061 = smul.addr %s1060, 4
        %s1062 = scalar_lea.vmem %s10, %s1061
        %p1063 = scmp.lt.s32.totalorder %s44, 1
        %s1064 = scalar_select %p1063, %s44, 1
        %s1065 = smul.addr %s1064, 4
        %s1066 = smul.addr %s1065, 4
        %s1067 = scalar_lea.vmem %s11, %s1066
        %p1068 = scmp.lt.s32.totalorder %s44, 1
        %s1069 = scalar_select %p1068, %s44, 1
        %s1070 = scalar_lea.vmem %s12, %s1069
        %p1071 = scmp.lt.s32.totalorder %s44, 1
        %s1072 = scalar_select %p1071, %s44, 1
        %s1073 = scalar_lea.vmem %s13, %s1072
        %p1074 = scmp.lt.s32.totalorder %s44, 1
        %s1075 = scalar_select %p1074, %s44, 1
        %s1076 = scalar_lea.vmem %s14, %s1075
        %p1077 = scmp.lt.s32.totalorder %s44, 1
        %s1078 = scalar_select %p1077, %s44, 1
        %s1079 = smul.addr %s1078, 4
        %s1080 = smul.addr %s1079, 4
        %s1081 = scalar_lea.vmem %s15, %s1080
        %p1082 = scmp.lt.s32.totalorder %s44, 1
        %s1083 = scalar_select %p1082, %s44, 1
        %s1084 = scalar_lea.vmem %s16, %s1083
        %p1085 = scmp.lt.s32.totalorder %s44, 1
        %s1086 = scalar_select %p1085, %s44, 1
        %s1087 = scalar_lea.vmem %s17, %s1086
        %p1088 = scmp.lt.s32.totalorder %s44, 1
        %s1089 = scalar_select %p1088, %s44, 1
        %s1090 = scalar_lea.vmem %s18, %s1089
        %p1091 = scmp.lt.s32.totalorder %s44, 1
        %s1092 = scalar_select %p1091, %s44, 1
        %s1093 = smul.addr %s1092, 4
        %s1094 = smul.addr %s1093, 4
        %s1095 = scalar_lea.vmem %s19, %s1094
        %p1096 = scmp.lt.s32.totalorder %s44, 1
        %s1097 = scalar_select %p1096, %s44, 1
        %s1098 = scalar_lea.vmem %s20, %s1097
        %p1099 = scmp.lt.s32.totalorder %s44, 1
        %s1100 = scalar_select %p1099, %s44, 1
        %s1101 = smul.addr %s1100, 16
        %s1102 = smul.addr %s1101, 4
        %s1103 = scalar_lea.vmem %s21, %s1102
        %p1104 = scmp.lt.s32.totalorder %s44, 1
        %s1105 = scalar_select %p1104, %s44, 1
        %s1106 = scalar_lea.vmem %s22, %s1105
        %p1107 = scmp.lt.s32.totalorder %s44, 1
        %s1108 = scalar_select %p1107, %s44, 1
        %s1109 = scalar_lea.vmem %s23, %s1108
        %p1110 = scmp.lt.s32.totalorder %s44, 1
        %s1111 = scalar_select %p1110, %s44, 1
        %s1112 = scalar_lea.vmem %s24, %s1111
        %p1114 = scmp.eq.s32.totalorder %s44, 0
        // Predicated region
        $region129: #{tpu_custom_call.1} parent=127 // pred_check
          %p1115 = pneg %p1114
        $region130: #{tpu_custom_call.1} parent=127 // pred_check_branch
          %1117 = sbr.rel (%p1115) target = $region132
        $region131: #{tpu_custom_call.1} parent=127 // pred_region
          %v1118 = vld [vmem:[%s1044] sm:$0xff]
          %v1119 = vld [vmem:[%s1044 + $0x8] sm:$0xff]
          %v1120 = vld [vmem:[%s1] sm:$0xf]
          %v1121 = vld [vmem:[%s1 + $0x4] sm:$0xf]
          %v1122 = vld [vmem:[%s1 + $0x8] sm:$0xf]
          %v1123 = vld [vmem:[%s1 + $0xc] sm:$0xf]
          %v1124 = vld [vmem:[%s1 + $0x10] sm:$0xf]
          %v1125 = vld [vmem:[%s1 + $0x14] sm:$0xf]
          %v1126 = vld [vmem:[%s1 + $0x18] sm:$0xf]
          %v1127 = vld [vmem:[%s1 + $0x1c] sm:$0xf]
          %v1128 = vld [vmem:[%s1 + $0x20] sm:$0xf]
          %v1129 = vld [vmem:[%s1 + $0x24] sm:$0xf]
          %v1130 = vld [vmem:[%s1 + $0x28] sm:$0xf]
          %v1131 = vld [vmem:[%s1 + $0x2c] sm:$0xf]
          %v1132 = vld [vmem:[%s1 + $0x30] sm:$0xf]
          %v1133 = vld [vmem:[%s1 + $0x34] sm:$0xf]
          %v1134 = vld [vmem:[%s1 + $0x38] sm:$0xf]
          %v1135 = vld [vmem:[%s1 + $0x3c] sm:$0xf]
          %v1136 = vld [vmem:[%s1 + $0x40] sm:$0xf]
          %v1137 = vld [vmem:[%s1 + $0x44] sm:$0xf]
          %v1138 = vld [vmem:[%s1 + $0x48] sm:$0xf]
          %v1139 = vld [vmem:[%s1 + $0x4c] sm:$0xf]
          %v1140 = vld [vmem:[%s1 + $0x50] sm:$0xf]
          %v1141 = vld [vmem:[%s1 + $0x54] sm:$0xf]
          %v1142 = vld [vmem:[%s1 + $0x58] sm:$0xf]
          %v1143 = vld [vmem:[%s1 + $0x5c] sm:$0xf]
          %v1144 = vld [vmem:[%s1 + $0x60] sm:$0xf]
          %v1145 = vld [vmem:[%s1 + $0x64] sm:$0xf]
          %v1146 = vld [vmem:[%s1 + $0x68] sm:$0xf]
          %v1147 = vld [vmem:[%s1 + $0x6c] sm:$0xf]
          %v1148 = vld [vmem:[%s1 + $0x70] sm:$0xf]
          %v1149 = vld [vmem:[%s1 + $0x74] sm:$0xf]
          %v1150 = vld [vmem:[%s1 + $0x78] sm:$0xf]
          %v1151 = vld [vmem:[%s1 + $0x7c] sm:$0xf]
          %v1152 = vld [vmem:[%s1 + $0x80] sm:$0xf]
          %v1153 = vld [vmem:[%s1 + $0x84] sm:$0xf]
          %v1154 = vld [vmem:[%s1 + $0x88] sm:$0xf]
          %v1155 = vld [vmem:[%s1 + $0x8c] sm:$0xf]
          %v1156 = vld [vmem:[%s1 + $0x90] sm:$0xf]
          %v1157 = vld [vmem:[%s1 + $0x94] sm:$0xf]
          %v1158 = vld [vmem:[%s1 + $0x98] sm:$0xf]
          %v1159 = vld [vmem:[%s1 + $0x9c] sm:$0xf]
          %v1160 = vld [vmem:[%s1 + $0xa0] sm:$0xf]
          %v1161 = vld [vmem:[%s1 + $0xa4] sm:$0xf]
          %v1162 = vld [vmem:[%s1 + $0xa8] sm:$0xf]
          %v1163 = vld [vmem:[%s1 + $0xac] sm:$0xf]
          %v1164 = vld [vmem:[%s1 + $0xb0] sm:$0xf]
          %v1165 = vld [vmem:[%s1 + $0xb4] sm:$0xf]
          %v1166 = vld [vmem:[%s1 + $0xb8] sm:$0xf]
          %v1167 = vld [vmem:[%s1 + $0xbc] sm:$0xf]
          %v1168 = vld [vmem:[%s1 + $0xc0] sm:$0xf]
          %v1169 = vld [vmem:[%s1 + $0xc4] sm:$0xf]
          %v1170 = vld [vmem:[%s1 + $0xc8] sm:$0xf]
          %v1171 = vld [vmem:[%s1 + $0xcc] sm:$0xf]
          %v1172 = vld [vmem:[%s1 + $0xd0] sm:$0xf]
          %v1173 = vld [vmem:[%s1 + $0xd4] sm:$0xf]
          %v1174 = vld [vmem:[%s1 + $0xd8] sm:$0xf]
          %v1175 = vld [vmem:[%s1 + $0xdc] sm:$0xf]
          %v1176 = vld [vmem:[%s1 + $0xe0] sm:$0xf]
          %v1177 = vld [vmem:[%s1 + $0xe4] sm:$0xf]
          %v1178 = vld [vmem:[%s1 + $0xe8] sm:$0xf]
          %v1179 = vld [vmem:[%s1 + $0xec] sm:$0xf]
          %v1180 = vld [vmem:[%s1 + $0xf0] sm:$0xf]
          %v1181 = vld [vmem:[%s1 + $0xf4] sm:$0xf]
          %v1182 = vld [vmem:[%s1 + $0xf8] sm:$0xf]
          %v1183 = vld [vmem:[%s1 + $0xfc] sm:$0xf]
          %v1184 = vld [vmem:[%s1 + $0x100] sm:$0xf]
          %v1185 = vld [vmem:[%s1 + $0x104] sm:$0xf]
          %v1186 = vld [vmem:[%s1 + $0x108] sm:$0xf]
          %v1187 = vld [vmem:[%s1 + $0x10c] sm:$0xf]
          %v1188 = vld [vmem:[%s1 + $0x110] sm:$0xf]
          %v1189 = vld [vmem:[%s1 + $0x114] sm:$0xf]
          %v1190 = vld [vmem:[%s1 + $0x118] sm:$0xf]
          %v1191 = vld [vmem:[%s1 + $0x11c] sm:$0xf]
          %v1192 = vld [vmem:[%s1 + $0x120] sm:$0xf]
          %v1193 = vld [vmem:[%s1 + $0x124] sm:$0xf]
          %v1194 = vld [vmem:[%s1 + $0x128] sm:$0xf]
          %v1195 = vld [vmem:[%s1 + $0x12c] sm:$0xf]
          %v1196 = vld [vmem:[%s1 + $0x130] sm:$0xf]
          %v1197 = vld [vmem:[%s1 + $0x134] sm:$0xf]
          %v1198 = vld [vmem:[%s1 + $0x138] sm:$0xf]
          %v1199 = vld [vmem:[%s1 + $0x13c] sm:$0xf]
          %v1200 = vld [vmem:[%s1 + $0x140] sm:$0xf]
          %v1201 = vld [vmem:[%s1 + $0x144] sm:$0xf]
          %v1202 = vld [vmem:[%s1 + $0x148] sm:$0xf]
          %v1203 = vld [vmem:[%s1 + $0x14c] sm:$0xf]
          %v1204 = vld [vmem:[%s1 + $0x150] sm:$0xf]
          %v1205 = vld [vmem:[%s1 + $0x154] sm:$0xf]
          %v1206 = vld [vmem:[%s1 + $0x158] sm:$0xf]
          %v1207 = vld [vmem:[%s1 + $0x15c] sm:$0xf]
          %v1208 = vld [vmem:[%s1 + $0x160] sm:$0xf]
          %v1209 = vld [vmem:[%s1 + $0x164] sm:$0xf]
          %v1210 = vld [vmem:[%s1 + $0x168] sm:$0xf]
          %v1211 = vld [vmem:[%s1 + $0x16c] sm:$0xf]
          %v1212 = vld [vmem:[%s1 + $0x170] sm:$0xf]
          %v1213 = vld [vmem:[%s1 + $0x174] sm:$0xf]
          %v1214 = vld [vmem:[%s1 + $0x178] sm:$0xf]
          %v1215 = vld [vmem:[%s1 + $0x17c] sm:$0xf]
          %v1216 = vld [vmem:[%s1 + $0x180] sm:$0xf]
          %v1217 = vld [vmem:[%s1 + $0x184] sm:$0xf]
          %v1218 = vld [vmem:[%s1 + $0x188] sm:$0xf]
          %v1219 = vld [vmem:[%s1 + $0x18c] sm:$0xf]
          %v1220 = vld [vmem:[%s1 + $0x190] sm:$0xf]
          %v1221 = vld [vmem:[%s1 + $0x194] sm:$0xf]
          %v1222 = vld [vmem:[%s1 + $0x198] sm:$0xf]
          %v1223 = vld [vmem:[%s1 + $0x19c] sm:$0xf]
          %v1224 = vld [vmem:[%s1 + $0x1a0] sm:$0xf]
          %v1225 = vld [vmem:[%s1 + $0x1a4] sm:$0xf]
          %v1226 = vld [vmem:[%s1 + $0x1a8] sm:$0xf]
          %v1227 = vld [vmem:[%s1 + $0x1ac] sm:$0xf]
          %v1228 = vld [vmem:[%s1 + $0x1b0] sm:$0xf]
          %v1229 = vld [vmem:[%s1 + $0x1b4] sm:$0xf]
          %v1230 = vld [vmem:[%s1 + $0x1b8] sm:$0xf]
          %v1231 = vld [vmem:[%s1 + $0x1bc] sm:$0xf]
          %v1232 = vld [vmem:[%s1 + $0x1c0] sm:$0xf]
          %v1233 = vld [vmem:[%s1 + $0x1c4] sm:$0xf]
          %v1234 = vld [vmem:[%s1 + $0x1c8] sm:$0xf]
          %v1235 = vld [vmem:[%s1 + $0x1cc] sm:$0xf]
          %v1236 = vld [vmem:[%s1 + $0x1d0] sm:$0xf]
          %v1237 = vld [vmem:[%s1 + $0x1d4] sm:$0xf]
          %v1238 = vld [vmem:[%s1 + $0x1d8] sm:$0xf]
          %v1239 = vld [vmem:[%s1 + $0x1dc] sm:$0xf]
          %v1240 = vld [vmem:[%s1 + $0x1e0] sm:$0xf]
          %v1241 = vld [vmem:[%s1 + $0x1e4] sm:$0xf]
          %v1242 = vld [vmem:[%s1 + $0x1e8] sm:$0xf]
          %v1243 = vld [vmem:[%s1 + $0x1ec] sm:$0xf]
          %v1244 = vld [vmem:[%s1 + $0x1f0] sm:$0xf]
          %v1245 = vld [vmem:[%s1 + $0x1f4] sm:$0xf]
          %v1246 = vld [vmem:[%s1 + $0x1f8] sm:$0xf]
          %v1247 = vld [vmem:[%s1 + $0x1fc] sm:$0xf]
          %v1248 = vld [vmem:[%s1 + $0x200] sm:$0xf]
          %v1249 = vld [vmem:[%s1 + $0x204] sm:$0xf]
          %v1250 = vld [vmem:[%s1 + $0x208] sm:$0xf]
          %v1251 = vld [vmem:[%s1 + $0x20c] sm:$0xf]
          %v1252 = vld [vmem:[%s1 + $0x210] sm:$0xf]
          %v1253 = vld [vmem:[%s1 + $0x214] sm:$0xf]
          %v1254 = vld [vmem:[%s1 + $0x218] sm:$0xf]
          %v1255 = vld [vmem:[%s1 + $0x21c] sm:$0xf]
          %v1256 = vld [vmem:[%s1 + $0x220] sm:$0xf]
          %v1257 = vld [vmem:[%s1 + $0x224] sm:$0xf]
          %v1258 = vld [vmem:[%s1 + $0x228] sm:$0xf]
          %v1259 = vld [vmem:[%s1 + $0x22c] sm:$0xf]
          %v1260 = vld [vmem:[%s1 + $0x230] sm:$0xf]
          %v1261 = vld [vmem:[%s1 + $0x234] sm:$0xf]
          %v1262 = vld [vmem:[%s1 + $0x238] sm:$0xf]
          %v1263 = vld [vmem:[%s1 + $0x23c] sm:$0xf]
          %v1264 = vld [vmem:[%s1 + $0x240] sm:$0xf]
          %v1265 = vld [vmem:[%s1 + $0x244] sm:$0xf]
          %v1266 = vld [vmem:[%s1 + $0x248] sm:$0xf]
          %v1267 = vld [vmem:[%s1 + $0x24c] sm:$0xf]
          %v1268 = vld [vmem:[%s1 + $0x250] sm:$0xf]
          %v1269 = vld [vmem:[%s1 + $0x254] sm:$0xf]
          %v1270 = vld [vmem:[%s1 + $0x258] sm:$0xf]
          %v1271 = vld [vmem:[%s1 + $0x25c] sm:$0xf]
          %v1272 = vld [vmem:[%s1 + $0x260] sm:$0xf]
          %v1273 = vld [vmem:[%s1 + $0x264] sm:$0xf]
          %v1274 = vld [vmem:[%s1 + $0x268] sm:$0xf]
          %v1275 = vld [vmem:[%s1 + $0x26c] sm:$0xf]
          %v1276 = vld [vmem:[%s1 + $0x270] sm:$0xf]
          %v1277 = vld [vmem:[%s1 + $0x274] sm:$0xf]
          %v1278 = vld [vmem:[%s1 + $0x278] sm:$0xf]
          %v1279 = vld [vmem:[%s1 + $0x27c] sm:$0xf]
          %v1280 = vld [vmem:[%s1 + $0x280] sm:$0xf]
          %v1281 = vld [vmem:[%s1 + $0x284] sm:$0xf]
          %v1282 = vld [vmem:[%s1 + $0x288] sm:$0xf]
          %v1283 = vld [vmem:[%s1 + $0x28c] sm:$0xf]
          %v1284 = vld [vmem:[%s1 + $0x290] sm:$0xf]
          %v1285 = vld [vmem:[%s1 + $0x294] sm:$0xf]
          %v1286 = vld [vmem:[%s1 + $0x298] sm:$0xf]
          %v1287 = vld [vmem:[%s1 + $0x29c] sm:$0xf]
          %v1288 = vld [vmem:[%s1 + $0x2a0] sm:$0xf]
          %v1289 = vld [vmem:[%s1 + $0x2a4] sm:$0xf]
          %v1290 = vld [vmem:[%s1 + $0x2a8] sm:$0xf]
          %v1291 = vld [vmem:[%s1 + $0x2ac] sm:$0xf]
          %v1292 = vld [vmem:[%s1 + $0x2b0] sm:$0xf]
          %v1293 = vld [vmem:[%s1 + $0x2b4] sm:$0xf]
          %v1294 = vld [vmem:[%s1 + $0x2b8] sm:$0xf]
          %v1295 = vld [vmem:[%s1 + $0x2bc] sm:$0xf]
          %v1296 = vld [vmem:[%s1 + $0x2c0] sm:$0xf]
          %v1297 = vld [vmem:[%s1 + $0x2c4] sm:$0xf]
          %v1298 = vld [vmem:[%s1 + $0x2c8] sm:$0xf]
          %v1299 = vld [vmem:[%s1 + $0x2cc] sm:$0xf]
          %v1300 = vld [vmem:[%s1 + $0x2d0] sm:$0xf]
          %v1301 = vld [vmem:[%s1 + $0x2d4] sm:$0xf]
          %v1302 = vld [vmem:[%s1 + $0x2d8] sm:$0xf]
          %v1303 = vld [vmem:[%s1 + $0x2dc] sm:$0xf]
          %v1304 = vld [vmem:[%s1 + $0x2e0] sm:$0xf]
          %v1305 = vld [vmem:[%s1 + $0x2e4] sm:$0xf]
          %v1306 = vld [vmem:[%s1 + $0x2e8] sm:$0xf]
          %v1307 = vld [vmem:[%s1 + $0x2ec] sm:$0xf]
          %v1308 = vld [vmem:[%s1 + $0x2f0] sm:$0xf]
          %v1309 = vld [vmem:[%s1 + $0x2f4] sm:$0xf]
          %v1310 = vld [vmem:[%s1 + $0x2f8] sm:$0xf]
          %v1311 = vld [vmem:[%s1 + $0x2fc] sm:$0xf]
          %v1312 = vld [vmem:[%s1 + $0x300] sm:$0xf]
          %v1313 = vld [vmem:[%s1 + $0x304] sm:$0xf]
          %v1314 = vld [vmem:[%s1 + $0x308] sm:$0xf]
          %v1315 = vld [vmem:[%s1 + $0x30c] sm:$0xf]
          %v1316 = vld [vmem:[%s1 + $0x310] sm:$0xf]
          %v1317 = vld [vmem:[%s1 + $0x314] sm:$0xf]
          %v1318 = vld [vmem:[%s1 + $0x318] sm:$0xf]
          %v1319 = vld [vmem:[%s1 + $0x31c] sm:$0xf]
          %v1320 = vld [vmem:[%s1 + $0x320] sm:$0xf]
          %v1321 = vld [vmem:[%s1 + $0x324] sm:$0xf]
          %v1322 = vld [vmem:[%s1 + $0x328] sm:$0xf]
          %v1323 = vld [vmem:[%s1 + $0x32c] sm:$0xf]
          %v1324 = vld [vmem:[%s1 + $0x330] sm:$0xf]
          %v1325 = vld [vmem:[%s1 + $0x334] sm:$0xf]
          %v1326 = vld [vmem:[%s1 + $0x338] sm:$0xf]
          %v1327 = vld [vmem:[%s1 + $0x33c] sm:$0xf]
          %v1328 = vld [vmem:[%s1 + $0x340] sm:$0xf]
          %v1329 = vld [vmem:[%s1 + $0x344] sm:$0xf]
          %v1330 = vld [vmem:[%s1 + $0x348] sm:$0xf]
          %v1331 = vld [vmem:[%s1 + $0x34c] sm:$0xf]
          %v1332 = vld [vmem:[%s1 + $0x350] sm:$0xf]
          %v1333 = vld [vmem:[%s1 + $0x354] sm:$0xf]
          %v1334 = vld [vmem:[%s1 + $0x358] sm:$0xf]
          %v1335 = vld [vmem:[%s1 + $0x35c] sm:$0xf]
          %v1336 = vld [vmem:[%s1 + $0x360] sm:$0xf]
          %v1337 = vld [vmem:[%s1 + $0x364] sm:$0xf]
          %v1338 = vld [vmem:[%s1 + $0x368] sm:$0xf]
          %v1339 = vld [vmem:[%s1 + $0x36c] sm:$0xf]
          %v1340 = vld [vmem:[%s1 + $0x370] sm:$0xf]
          %v1341 = vld [vmem:[%s1 + $0x374] sm:$0xf]
          %v1342 = vld [vmem:[%s1 + $0x378] sm:$0xf]
          %v1343 = vld [vmem:[%s1 + $0x37c] sm:$0xf]
          %v1344 = vld [vmem:[%s1 + $0x380] sm:$0xf]
          %v1345 = vld [vmem:[%s1 + $0x384] sm:$0xf]
          %v1346 = vld [vmem:[%s1 + $0x388] sm:$0xf]
          %v1347 = vld [vmem:[%s1 + $0x38c] sm:$0xf]
          %v1348 = vld [vmem:[%s1 + $0x390] sm:$0xf]
          %v1349 = vld [vmem:[%s1 + $0x394] sm:$0xf]
          %v1350 = vld [vmem:[%s1 + $0x398] sm:$0xf]
          %v1351 = vld [vmem:[%s1 + $0x39c] sm:$0xf]
          %v1352 = vld [vmem:[%s1 + $0x3a0] sm:$0xf]
          %v1353 = vld [vmem:[%s1 + $0x3a4] sm:$0xf]
          %v1354 = vld [vmem:[%s1 + $0x3a8] sm:$0xf]
          %v1355 = vld [vmem:[%s1 + $0x3ac] sm:$0xf]
          %v1356 = vld [vmem:[%s1 + $0x3b0] sm:$0xf]
          %v1357 = vld [vmem:[%s1 + $0x3b4] sm:$0xf]
          %v1358 = vld [vmem:[%s1 + $0x3b8] sm:$0xf]
          %v1359 = vld [vmem:[%s1 + $0x3bc] sm:$0xf]
          %v1360 = vld [vmem:[%s1 + $0x3c0] sm:$0xf]
          %v1361 = vld [vmem:[%s1 + $0x3c4] sm:$0xf]
          %v1362 = vld [vmem:[%s1 + $0x3c8] sm:$0xf]
          %v1363 = vld [vmem:[%s1 + $0x3cc] sm:$0xf]
          %v1364 = vld [vmem:[%s1 + $0x3d0] sm:$0xf]
          %v1365 = vld [vmem:[%s1 + $0x3d4] sm:$0xf]
          %v1366 = vld [vmem:[%s1 + $0x3d8] sm:$0xf]
          %v1367 = vld [vmem:[%s1 + $0x3dc] sm:$0xf]
          %v1368 = vld [vmem:[%s1 + $0x3e0] sm:$0xf]
          %v1369 = vld [vmem:[%s1 + $0x3e4] sm:$0xf]
          %v1370 = vld [vmem:[%s1 + $0x3e8] sm:$0xf]
          %v1371 = vld [vmem:[%s1 + $0x3ec] sm:$0xf]
          %v1372 = vld [vmem:[%s1 + $0x3f0] sm:$0xf]
          %v1373 = vld [vmem:[%s1 + $0x3f4] sm:$0xf]
          %v1374 = vld [vmem:[%s1 + $0x3f8] sm:$0xf]
          %v1375 = vld [vmem:[%s1 + $0x3fc] sm:$0xf]
          %v1376 = vld [vmem:[%s2] sm:$0x1]
          %v1378 = vlaneseq
          %v1379 = vshrl.u32 %v1378, 7
          %v1380 = vsub.s32 0, %v1379
          %v1381 = vrot.slane %v1376, %v1380
          %v1385 = vcombine.high %v1118, %v1118
          %v1387 = vunpack.c.l.s4 1966171168
          %v1388 = vunpack.c.0.s8 %v1387
          %v1389 = vlaneseq
          %v1390 = vshrl.u32 %v1389, 7
          %v1391 = vsub.s32 %v1388, %v1390
          %v1392 = vrot.slane %v1118, %v1391
          %v1394 = vunpack.c.l.s4 1966171168
          %v1395 = vunpack.c.0.s8 %v1394
          %v1396 = vlaneseq
          %v1397 = vshrl.u32 %v1396, 7
          %v1398 = vsub.s32 %v1395, %v1397
          %v1399 = vrot.slane %v1385, %v1398
          %v1400 = vcombine.high %v1392, %v1392
          %v1401 = vcombine.high %v1399, %v1399
          %v1403 = vunpack.c.l.s4 1966171168
          %v1404 = vunpack.c.0.s8 %v1403
          %v1405 = vlaneseq
          %v1406 = vshrl.u32 %v1405, 7
          %v1407 = vsub.s32 %v1404, %v1406
          %v1408 = vrot.slane %v1392, %v1407
          %v1410 = vunpack.c.l.s4 1966171168
          %v1411 = vunpack.c.0.s8 %v1410
          %v1412 = vlaneseq
          %v1413 = vshrl.u32 %v1412, 7
          %v1414 = vsub.s32 %v1411, %v1413
          %v1415 = vrot.slane %v1399, %v1414
          %v1417 = vunpack.c.l.s4 1966171168
          %v1418 = vunpack.c.0.s8 %v1417
          %v1419 = vlaneseq
          %v1420 = vshrl.u32 %v1419, 7
          %v1421 = vsub.s32 %v1418, %v1420
          %v1422 = vrot.slane %v1400, %v1421
          %v1424 = vunpack.c.l.s4 1966171168
          %v1425 = vunpack.c.0.s8 %v1424
          %v1426 = vlaneseq
          %v1427 = vshrl.u32 %v1426, 7
          %v1428 = vsub.s32 %v1425, %v1427
          %v1429 = vrot.slane %v1401, %v1428
          %v1430 = vcombine.high %v1408, %v1408
          %v1431 = vcombine.high %v1415, %v1415
          %v1432 = vcombine.high %v1422, %v1422
          %v1433 = vcombine.high %v1429, %v1429
          %v1434 = vcombine.high %v1119, %v1119
          %v1436 = vunpack.c.l.s4 1966171168
          %v1437 = vunpack.c.0.s8 %v1436
          %v1438 = vlaneseq
          %v1439 = vshrl.u32 %v1438, 7
          %v1440 = vsub.s32 %v1437, %v1439
          %v1441 = vrot.slane %v1119, %v1440
          %v1443 = vunpack.c.l.s4 1966171168
          %v1444 = vunpack.c.0.s8 %v1443
          %v1445 = vlaneseq
          %v1446 = vshrl.u32 %v1445, 7
          %v1447 = vsub.s32 %v1444, %v1446
          %v1448 = vrot.slane %v1434, %v1447
          %v1449 = vcombine.high %v1441, %v1441
          %v1450 = vcombine.high %v1448, %v1448
          %v1452 = vunpack.c.l.s4 1966171168
          %v1453 = vunpack.c.0.s8 %v1452
          %v1454 = vlaneseq
          %v1455 = vshrl.u32 %v1454, 7
          %v1456 = vsub.s32 %v1453, %v1455
          %v1457 = vrot.slane %v1441, %v1456
          %v1459 = vunpack.c.l.s4 1966171168
          %v1460 = vunpack.c.0.s8 %v1459
          %v1461 = vlaneseq
          %v1462 = vshrl.u32 %v1461, 7
          %v1463 = vsub.s32 %v1460, %v1462
          %v1464 = vrot.slane %v1448, %v1463
          %v1466 = vunpack.c.l.s4 1966171168
          %v1467 = vunpack.c.0.s8 %v1466
          %v1468 = vlaneseq
          %v1469 = vshrl.u32 %v1468, 7
          %v1470 = vsub.s32 %v1467, %v1469
          %v1471 = vrot.slane %v1449, %v1470
          %v1473 = vunpack.c.l.s4 1966171168
          %v1474 = vunpack.c.0.s8 %v1473
          %v1475 = vlaneseq
          %v1476 = vshrl.u32 %v1475, 7
          %v1477 = vsub.s32 %v1474, %v1476
          %v1478 = vrot.slane %v1450, %v1477
          %v1479 = vcombine.high %v1457, %v1457
          %v1480 = vcombine.high %v1464, %v1464
          %v1481 = vcombine.high %v1471, %v1471
          %v1482 = vcombine.high %v1478, %v1478
          %v1755 = vunpack.c.l.b16 %v1120
          %v1756 = vunpack.c.l.b16 %v1121
          %v1757 = vunpack.c.l.b16 %v1122
          %v1758 = vunpack.c.l.b16 %v1123
          %v1759 = vunpack.c.l.b16 %v1124
          %v1760 = vunpack.c.l.b16 %v1125
          %v1761 = vunpack.c.l.b16 %v1126
          %v1762 = vunpack.c.l.b16 %v1127
          %v1763 = vunpack.c.l.b16 %v1128
          %v1764 = vunpack.c.l.b16 %v1129
          %v1765 = vunpack.c.l.b16 %v1130
          %v1766 = vunpack.c.l.b16 %v1131
          %v1767 = vunpack.c.l.b16 %v1132
          %v1768 = vunpack.c.l.b16 %v1133
          %v1769 = vunpack.c.l.b16 %v1134
          %v1770 = vunpack.c.l.b16 %v1135
          %v1771 = vunpack.c.l.b16 %v1136
          %v1772 = vunpack.c.l.b16 %v1137
          %v1773 = vunpack.c.l.b16 %v1138
          %v1774 = vunpack.c.l.b16 %v1139
          %v1775 = vunpack.c.l.b16 %v1140
          %v1776 = vunpack.c.l.b16 %v1141
          %v1777 = vunpack.c.l.b16 %v1142
          %v1778 = vunpack.c.l.b16 %v1143
          %v1779 = vunpack.c.l.b16 %v1144
          %v1780 = vunpack.c.l.b16 %v1145
          %v1781 = vunpack.c.l.b16 %v1146
          %v1782 = vunpack.c.l.b16 %v1147
          %v1783 = vunpack.c.l.b16 %v1148
          %v1784 = vunpack.c.l.b16 %v1149
          %v1785 = vunpack.c.l.b16 %v1150
          %v1786 = vunpack.c.l.b16 %v1151
          %v1787 = vunpack.c.l.b16 %v1152
          %v1788 = vunpack.c.l.b16 %v1153
          %v1789 = vunpack.c.l.b16 %v1154
          %v1790 = vunpack.c.l.b16 %v1155
          %v1791 = vunpack.c.l.b16 %v1156
          %v1792 = vunpack.c.l.b16 %v1157
          %v1793 = vunpack.c.l.b16 %v1158
          %v1794 = vunpack.c.l.b16 %v1159
          %v1795 = vunpack.c.l.b16 %v1160
          %v1796 = vunpack.c.l.b16 %v1161
          %v1797 = vunpack.c.l.b16 %v1162
          %v1798 = vunpack.c.l.b16 %v1163
          %v1799 = vunpack.c.l.b16 %v1164
          %v1800 = vunpack.c.l.b16 %v1165
          %v1801 = vunpack.c.l.b16 %v1166
          %v1802 = vunpack.c.l.b16 %v1167
          %v1803 = vunpack.c.l.b16 %v1168
          %v1804 = vunpack.c.l.b16 %v1169
          %v1805 = vunpack.c.l.b16 %v1170
          %v1806 = vunpack.c.l.b16 %v1171
          %v1807 = vunpack.c.l.b16 %v1172
          %v1808 = vunpack.c.l.b16 %v1173
          %v1809 = vunpack.c.l.b16 %v1174
          %v1810 = vunpack.c.l.b16 %v1175
          %v1811 = vunpack.c.l.b16 %v1176
          %v1812 = vunpack.c.l.b16 %v1177
          %v1813 = vunpack.c.l.b16 %v1178
          %v1814 = vunpack.c.l.b16 %v1179
          %v1815 = vunpack.c.l.b16 %v1180
          %v1816 = vunpack.c.l.b16 %v1181
          %v1817 = vunpack.c.l.b16 %v1182
          %v1818 = vunpack.c.l.b16 %v1183
          %v1819 = vunpack.c.l.b16 %v1184
          %v1820 = vunpack.c.l.b16 %v1185
          %v1821 = vunpack.c.l.b16 %v1186
          %v1822 = vunpack.c.l.b16 %v1187
          %v1823 = vunpack.c.l.b16 %v1188
          %v1824 = vunpack.c.l.b16 %v1189
          %v1825 = vunpack.c.l.b16 %v1190
          %v1826 = vunpack.c.l.b16 %v1191
          %v1827 = vunpack.c.l.b16 %v1192
          %v1828 = vunpack.c.l.b16 %v1193
          %v1829 = vunpack.c.l.b16 %v1194
          %v1830 = vunpack.c.l.b16 %v1195
          %v1831 = vunpack.c.l.b16 %v1196
          %v1832 = vunpack.c.l.b16 %v1197
          %v1833 = vunpack.c.l.b16 %v1198
          %v1834 = vunpack.c.l.b16 %v1199
          %v1835 = vunpack.c.l.b16 %v1200
          %v1836 = vunpack.c.l.b16 %v1201
          %v1837 = vunpack.c.l.b16 %v1202
          %v1838 = vunpack.c.l.b16 %v1203
          %v1839 = vunpack.c.l.b16 %v1204
          %v1840 = vunpack.c.l.b16 %v1205
          %v1841 = vunpack.c.l.b16 %v1206
          %v1842 = vunpack.c.l.b16 %v1207
          %v1843 = vunpack.c.l.b16 %v1208
          %v1844 = vunpack.c.l.b16 %v1209
          %v1845 = vunpack.c.l.b16 %v1210
          %v1846 = vunpack.c.l.b16 %v1211
          %v1847 = vunpack.c.l.b16 %v1212
          %v1848 = vunpack.c.l.b16 %v1213
          %v1849 = vunpack.c.l.b16 %v1214
          %v1850 = vunpack.c.l.b16 %v1215
          %v1851 = vunpack.c.l.b16 %v1216
          %v1852 = vunpack.c.l.b16 %v1217
          %v1853 = vunpack.c.l.b16 %v1218
          %v1854 = vunpack.c.l.b16 %v1219
          %v1855 = vunpack.c.l.b16 %v1220
          %v1856 = vunpack.c.l.b16 %v1221
          %v1857 = vunpack.c.l.b16 %v1222
          %v1858 = vunpack.c.l.b16 %v1223
          %v1859 = vunpack.c.l.b16 %v1224
          %v1860 = vunpack.c.l.b16 %v1225
          %v1861 = vunpack.c.l.b16 %v1226
          %v1862 = vunpack.c.l.b16 %v1227
          %v1863 = vunpack.c.l.b16 %v1228
          %v1864 = vunpack.c.l.b16 %v1229
          %v1865 = vunpack.c.l.b16 %v1230
          %v1866 = vunpack.c.l.b16 %v1231
          %v1867 = vunpack.c.l.b16 %v1232
          %v1868 = vunpack.c.l.b16 %v1233
          %v1869 = vunpack.c.l.b16 %v1234
          %v1870 = vunpack.c.l.b16 %v1235
          %v1871 = vunpack.c.l.b16 %v1236
          %v1872 = vunpack.c.l.b16 %v1237
          %v1873 = vunpack.c.l.b16 %v1238
          %v1874 = vunpack.c.l.b16 %v1239
          %v1875 = vunpack.c.l.b16 %v1240
          %v1876 = vunpack.c.l.b16 %v1241
          %v1877 = vunpack.c.l.b16 %v1242
          %v1878 = vunpack.c.l.b16 %v1243
          %v1879 = vunpack.c.l.b16 %v1244
          %v1880 = vunpack.c.l.b16 %v1245
          %v1881 = vunpack.c.l.b16 %v1246
          %v1882 = vunpack.c.l.b16 %v1247
          %v1883 = vunpack.c.l.b16 %v1248
          %v1884 = vunpack.c.l.b16 %v1249
          %v1885 = vunpack.c.l.b16 %v1250
          %v1886 = vunpack.c.l.b16 %v1251
          %v1887 = vunpack.c.l.b16 %v1252
          %v1888 = vunpack.c.l.b16 %v1253
          %v1889 = vunpack.c.l.b16 %v1254
          %v1890 = vunpack.c.l.b16 %v1255
          %v1891 = vunpack.c.l.b16 %v1256
          %v1892 = vunpack.c.l.b16 %v1257
          %v1893 = vunpack.c.l.b16 %v1258
          %v1894 = vunpack.c.l.b16 %v1259
          %v1895 = vunpack.c.l.b16 %v1260
          %v1896 = vunpack.c.l.b16 %v1261
          %v1897 = vunpack.c.l.b16 %v1262
          %v1898 = vunpack.c.l.b16 %v1263
          %v1899 = vunpack.c.l.b16 %v1264
          %v1900 = vunpack.c.l.b16 %v1265
          %v1901 = vunpack.c.l.b16 %v1266
          %v1902 = vunpack.c.l.b16 %v1267
          %v1903 = vunpack.c.l.b16 %v1268
          %v1904 = vunpack.c.l.b16 %v1269
          %v1905 = vunpack.c.l.b16 %v1270
          %v1906 = vunpack.c.l.b16 %v1271
          %v1907 = vunpack.c.l.b16 %v1272
          %v1908 = vunpack.c.l.b16 %v1273
          %v1909 = vunpack.c.l.b16 %v1274
          %v1910 = vunpack.c.l.b16 %v1275
          %v1911 = vunpack.c.l.b16 %v1276
          %v1912 = vunpack.c.l.b16 %v1277
          %v1913 = vunpack.c.l.b16 %v1278
          %v1914 = vunpack.c.l.b16 %v1279
          %v1915 = vunpack.c.l.b16 %v1280
          %v1916 = vunpack.c.l.b16 %v1281
          %v1917 = vunpack.c.l.b16 %v1282
          %v1918 = vunpack.c.l.b16 %v1283
          %v1919 = vunpack.c.l.b16 %v1284
          %v1920 = vunpack.c.l.b16 %v1285
          %v1921 = vunpack.c.l.b16 %v1286
          %v1922 = vunpack.c.l.b16 %v1287
          %v1923 = vunpack.c.l.b16 %v1288
          %v1924 = vunpack.c.l.b16 %v1289
          %v1925 = vunpack.c.l.b16 %v1290
          %v1926 = vunpack.c.l.b16 %v1291
          %v1927 = vunpack.c.l.b16 %v1292
          %v1928 = vunpack.c.l.b16 %v1293
          %v1929 = vunpack.c.l.b16 %v1294
          %v1930 = vunpack.c.l.b16 %v1295
          %v1931 = vunpack.c.l.b16 %v1296
          %v1932 = vunpack.c.l.b16 %v1297
          %v1933 = vunpack.c.l.b16 %v1298
          %v1934 = vunpack.c.l.b16 %v1299
          %v1935 = vunpack.c.l.b16 %v1300
          %v1936 = vunpack.c.l.b16 %v1301
          %v1937 = vunpack.c.l.b16 %v1302
          %v1938 = vunpack.c.l.b16 %v1303
          %v1939 = vunpack.c.l.b16 %v1304
          %v1940 = vunpack.c.l.b16 %v1305
          %v1941 = vunpack.c.l.b16 %v1306
          %v1942 = vunpack.c.l.b16 %v1307
          %v1943 = vunpack.c.l.b16 %v1308
          %v1944 = vunpack.c.l.b16 %v1309
          %v1945 = vunpack.c.l.b16 %v1310
          %v1946 = vunpack.c.l.b16 %v1311
          %v1947 = vunpack.c.l.b16 %v1312
          %v1948 = vunpack.c.l.b16 %v1313
          %v1949 = vunpack.c.l.b16 %v1314
          %v1950 = vunpack.c.l.b16 %v1315
          %v1951 = vunpack.c.l.b16 %v1316
          %v1952 = vunpack.c.l.b16 %v1317
          %v1953 = vunpack.c.l.b16 %v1318
          %v1954 = vunpack.c.l.b16 %v1319
          %v1955 = vunpack.c.l.b16 %v1320
          %v1956 = vunpack.c.l.b16 %v1321
          %v1957 = vunpack.c.l.b16 %v1322
          %v1958 = vunpack.c.l.b16 %v1323
          %v1959 = vunpack.c.l.b16 %v1324
          %v1960 = vunpack.c.l.b16 %v1325
          %v1961 = vunpack.c.l.b16 %v1326
          %v1962 = vunpack.c.l.b16 %v1327
          %v1963 = vunpack.c.l.b16 %v1328
          %v1964 = vunpack.c.l.b16 %v1329
          %v1965 = vunpack.c.l.b16 %v1330
          %v1966 = vunpack.c.l.b16 %v1331
          %v1967 = vunpack.c.l.b16 %v1332
          %v1968 = vunpack.c.l.b16 %v1333
          %v1969 = vunpack.c.l.b16 %v1334
          %v1970 = vunpack.c.l.b16 %v1335
          %v1971 = vunpack.c.l.b16 %v1336
          %v1972 = vunpack.c.l.b16 %v1337
          %v1973 = vunpack.c.l.b16 %v1338
          %v1974 = vunpack.c.l.b16 %v1339
          %v1975 = vunpack.c.l.b16 %v1340
          %v1976 = vunpack.c.l.b16 %v1341
          %v1977 = vunpack.c.l.b16 %v1342
          %v1978 = vunpack.c.l.b16 %v1343
          %v1979 = vunpack.c.l.b16 %v1344
          %v1980 = vunpack.c.l.b16 %v1345
          %v1981 = vunpack.c.l.b16 %v1346
          %v1982 = vunpack.c.l.b16 %v1347
          %v1983 = vunpack.c.l.b16 %v1348
          %v1984 = vunpack.c.l.b16 %v1349
          %v1985 = vunpack.c.l.b16 %v1350
          %v1986 = vunpack.c.l.b16 %v1351
          %v1987 = vunpack.c.l.b16 %v1352
          %v1988 = vunpack.c.l.b16 %v1353
          %v1989 = vunpack.c.l.b16 %v1354
          %v1990 = vunpack.c.l.b16 %v1355
          %v1991 = vunpack.c.l.b16 %v1356
          %v1992 = vunpack.c.l.b16 %v1357
          %v1993 = vunpack.c.l.b16 %v1358
          %v1994 = vunpack.c.l.b16 %v1359
          %v1995 = vunpack.c.l.b16 %v1360
          %v1996 = vunpack.c.l.b16 %v1361
          %v1997 = vunpack.c.l.b16 %v1362
          %v1998 = vunpack.c.l.b16 %v1363
          %v1999 = vunpack.c.l.b16 %v1364
          %v2000 = vunpack.c.l.b16 %v1365
          %v2001 = vunpack.c.l.b16 %v1366
          %v2002 = vunpack.c.l.b16 %v1367
          %v2003 = vunpack.c.l.b16 %v1368
          %v2004 = vunpack.c.l.b16 %v1369
          %v2005 = vunpack.c.l.b16 %v1370
          %v2006 = vunpack.c.l.b16 %v1371
          %v2007 = vunpack.c.l.b16 %v1372
          %v2008 = vunpack.c.l.b16 %v1373
          %v2009 = vunpack.c.l.b16 %v1374
          %v2010 = vunpack.c.l.b16 %v1375
          %v2011 = vpack.c.b16 %v1756, %v1755
          %v2012 = vpack.c.b16 %v1758, %v1757
          %v2013 = vpack.c.b16 %v1760, %v1759
          %v2014 = vpack.c.b16 %v1762, %v1761
          %v2015 = vpack.c.b16 %v1764, %v1763
          %v2016 = vpack.c.b16 %v1766, %v1765
          %v2017 = vpack.c.b16 %v1768, %v1767
          %v2018 = vpack.c.b16 %v1770, %v1769
          %v2019 = vpack.c.b16 %v1772, %v1771
          %v2020 = vpack.c.b16 %v1774, %v1773
          %v2021 = vpack.c.b16 %v1776, %v1775
          %v2022 = vpack.c.b16 %v1778, %v1777
          %v2023 = vpack.c.b16 %v1780, %v1779
          %v2024 = vpack.c.b16 %v1782, %v1781
          %v2025 = vpack.c.b16 %v1784, %v1783
          %v2026 = vpack.c.b16 %v1786, %v1785
          %v2027 = vpack.c.b16 %v1788, %v1787
          %v2028 = vpack.c.b16 %v1790, %v1789
          %v2029 = vpack.c.b16 %v1792, %v1791
          %v2030 = vpack.c.b16 %v1794, %v1793
          %v2031 = vpack.c.b16 %v1796, %v1795
          %v2032 = vpack.c.b16 %v1798, %v1797
          %v2033 = vpack.c.b16 %v1800, %v1799
          %v2034 = vpack.c.b16 %v1802, %v1801
          %v2035 = vpack.c.b16 %v1804, %v1803
          %v2036 = vpack.c.b16 %v1806, %v1805
          %v2037 = vpack.c.b16 %v1808, %v1807
          %v2038 = vpack.c.b16 %v1810, %v1809
          %v2039 = vpack.c.b16 %v1812, %v1811
          %v2040 = vpack.c.b16 %v1814, %v1813
          %v2041 = vpack.c.b16 %v1816, %v1815
          %v2042 = vpack.c.b16 %v1818, %v1817
          %v2043 = vpack.c.b16 %v1820, %v1819
          %v2044 = vpack.c.b16 %v1822, %v1821
          %v2045 = vpack.c.b16 %v1824, %v1823
          %v2046 = vpack.c.b16 %v1826, %v1825
          %v2047 = vpack.c.b16 %v1828, %v1827
          %v2048 = vpack.c.b16 %v1830, %v1829
          %v2049 = vpack.c.b16 %v1832, %v1831
          %v2050 = vpack.c.b16 %v1834, %v1833
          %v2051 = vpack.c.b16 %v1836, %v1835
          %v2052 = vpack.c.b16 %v1838, %v1837
          %v2053 = vpack.c.b16 %v1840, %v1839
          %v2054 = vpack.c.b16 %v1842, %v1841
          %v2055 = vpack.c.b16 %v1844, %v1843
          %v2056 = vpack.c.b16 %v1846, %v1845
          %v2057 = vpack.c.b16 %v1848, %v1847
          %v2058 = vpack.c.b16 %v1850, %v1849
          %v2059 = vpack.c.b16 %v1852, %v1851
          %v2060 = vpack.c.b16 %v1854, %v1853
          %v2061 = vpack.c.b16 %v1856, %v1855
          %v2062 = vpack.c.b16 %v1858, %v1857
          %v2063 = vpack.c.b16 %v1860, %v1859
          %v2064 = vpack.c.b16 %v1862, %v1861
          %v2065 = vpack.c.b16 %v1864, %v1863
          %v2066 = vpack.c.b16 %v1866, %v1865
          %v2067 = vpack.c.b16 %v1868, %v1867
          %v2068 = vpack.c.b16 %v1870, %v1869
          %v2069 = vpack.c.b16 %v1872, %v1871
          %v2070 = vpack.c.b16 %v1874, %v1873
          %v2071 = vpack.c.b16 %v1876, %v1875
          %v2072 = vpack.c.b16 %v1878, %v1877
          %v2073 = vpack.c.b16 %v1880, %v1879
          %v2074 = vpack.c.b16 %v1882, %v1881
          %v2075 = vpack.c.b16 %v1884, %v1883
          %v2076 = vpack.c.b16 %v1886, %v1885
          %v2077 = vpack.c.b16 %v1888, %v1887
          %v2078 = vpack.c.b16 %v1890, %v1889
          %v2079 = vpack.c.b16 %v1892, %v1891
          %v2080 = vpack.c.b16 %v1894, %v1893
          %v2081 = vpack.c.b16 %v1896, %v1895
          %v2082 = vpack.c.b16 %v1898, %v1897
          %v2083 = vpack.c.b16 %v1900, %v1899
          %v2084 = vpack.c.b16 %v1902, %v1901
          %v2085 = vpack.c.b16 %v1904, %v1903
          %v2086 = vpack.c.b16 %v1906, %v1905
          %v2087 = vpack.c.b16 %v1908, %v1907
          %v2088 = vpack.c.b16 %v1910, %v1909
          %v2089 = vpack.c.b16 %v1912, %v1911
          %v2090 = vpack.c.b16 %v1914, %v1913
          %v2091 = vpack.c.b16 %v1916, %v1915
          %v2092 = vpack.c.b16 %v1918, %v1917
          %v2093 = vpack.c.b16 %v1920, %v1919
          %v2094 = vpack.c.b16 %v1922, %v1921
          %v2095 = vpack.c.b16 %v1924, %v1923
          %v2096 = vpack.c.b16 %v1926, %v1925
          %v2097 = vpack.c.b16 %v1928, %v1927
          %v2098 = vpack.c.b16 %v1930, %v1929
          %v2099 = vpack.c.b16 %v1932, %v1931
          %v2100 = vpack.c.b16 %v1934, %v1933
          %v2101 = vpack.c.b16 %v1936, %v1935
          %v2102 = vpack.c.b16 %v1938, %v1937
          %v2103 = vpack.c.b16 %v1940, %v1939
          %v2104 = vpack.c.b16 %v1942, %v1941
          %v2105 = vpack.c.b16 %v1944, %v1943
          %v2106 = vpack.c.b16 %v1946, %v1945
          %v2107 = vpack.c.b16 %v1948, %v1947
          %v2108 = vpack.c.b16 %v1950, %v1949
          %v2109 = vpack.c.b16 %v1952, %v1951
          %v2110 = vpack.c.b16 %v1954, %v1953
          %v2111 = vpack.c.b16 %v1956, %v1955
          %v2112 = vpack.c.b16 %v1958, %v1957
          %v2113 = vpack.c.b16 %v1960, %v1959
          %v2114 = vpack.c.b16 %v1962, %v1961
          %v2115 = vpack.c.b16 %v1964, %v1963
          %v2116 = vpack.c.b16 %v1966, %v1965
          %v2117 = vpack.c.b16 %v1968, %v1967
          %v2118 = vpack.c.b16 %v1970, %v1969
          %v2119 = vpack.c.b16 %v1972, %v1971
          %v2120 = vpack.c.b16 %v1974, %v1973
          %v2121 = vpack.c.b16 %v1976, %v1975
          %v2122 = vpack.c.b16 %v1978, %v1977
          %v2123 = vpack.c.b16 %v1980, %v1979
          %v2124 = vpack.c.b16 %v1982, %v1981
          %v2125 = vpack.c.b16 %v1984, %v1983
          %v2126 = vpack.c.b16 %v1986, %v1985
          %v2127 = vpack.c.b16 %v1988, %v1987
          %v2128 = vpack.c.b16 %v1990, %v1989
          %v2129 = vpack.c.b16 %v1992, %v1991
          %v2130 = vpack.c.b16 %v1994, %v1993
          %v2131 = vpack.c.b16 %v1996, %v1995
          %v2132 = vpack.c.b16 %v1998, %v1997
          %v2133 = vpack.c.b16 %v2000, %v1999
          %v2134 = vpack.c.b16 %v2002, %v2001
          %v2135 = vpack.c.b16 %v2004, %v2003
          %v2136 = vpack.c.b16 %v2006, %v2005
          %v2137 = vpack.c.b16 %v2008, %v2007
          %v2138 = vpack.c.b16 %v2010, %v2009
          %2267 = vmatprep.subr.bf16.mxu0 0
          %2268 = vmatpush1.bf16.msra.mxu0 %v2011
          %2269 = vmatprep.subr.bf16.mxu0 0
          %2270 = vmatpush1.bf16.msra.mxu0 %v2012
          %2271 = vmatprep.subr.bf16.mxu0 0
          %2272 = vmatpush1.bf16.msra.mxu0 %v2013
          %2273 = vmatprep.subr.bf16.mxu0 0
          %2274 = vmatpush1.bf16.msra.mxu0 %v2014
          %2275 = vmatprep.subr.bf16.mxu0 0
          %2276 = vmatpush1.bf16.msra.mxu0 %v2015
          %2277 = vmatprep.subr.bf16.mxu0 0
          %2278 = vmatpush1.bf16.msra.mxu0 %v2016
          %2279 = vmatprep.subr.bf16.mxu0 0
          %2280 = vmatpush1.bf16.msra.mxu0 %v2017
          %2281 = vmatprep.subr.bf16.mxu0 0
          %2282 = vmatpush1.bf16.msra.mxu0 %v2018
          %2283 = vmatprep.subr.bf16.mxu0 0
          %2284 = vmatpush1.bf16.msra.mxu0 %v2019
          %2285 = vmatprep.subr.bf16.mxu0 0
          %2286 = vmatpush1.bf16.msra.mxu0 %v2020
          %2287 = vmatprep.subr.bf16.mxu0 0
          %2288 = vmatpush1.bf16.msra.mxu0 %v2021
          %2289 = vmatprep.subr.bf16.mxu0 0
          %2290 = vmatpush1.bf16.msra.mxu0 %v2022
          %2291 = vmatprep.subr.bf16.mxu0 0
          %2292 = vmatpush1.bf16.msra.mxu0 %v2023
          %2293 = vmatprep.subr.bf16.mxu0 0
          %2294 = vmatpush1.bf16.msra.mxu0 %v2024
          %2295 = vmatprep.subr.bf16.mxu0 0
          %2296 = vmatpush1.bf16.msra.mxu0 %v2025
          %2297 = vmatprep.subr.bf16.mxu0 0
          %2298 = vmatpush1.bf16.msra.mxu0 %v2026
          %2299 = vmatprep.mubr.bf16.mxu0 %v1422
          %2300 = vmatmul.mubr.bf16.gmra.mrb[0].mxu0 %v1408
          %v2301 = vpop.f32.mrb[0].mxu0
          %v2302 = vadd.f32 %v1381, %v2301
          %v2303 = vpop.f32.mrb[0].mxu0
          %v2304 = vpop.f32.mrb[0].mxu0
          %v2305 = vpop.f32.mrb[0].mxu0
          %2306 = vdwg.mxu0
          %2307 = vmatprep.subr.bf16.mxu0 0
          %2308 = vmatpush1.bf16.msra.mxu0 %v2027
          %2309 = vmatprep.subr.bf16.mxu0 0
          %2310 = vmatpush1.bf16.msra.mxu0 %v2028
          %2311 = vmatprep.subr.bf16.mxu0 0
          %2312 = vmatpush1.bf16.msra.mxu0 %v2029
          %2313 = vmatprep.subr.bf16.mxu0 0
          %2314 = vmatpush1.bf16.msra.mxu0 %v2030
          %2315 = vmatprep.subr.bf16.mxu0 0
          %2316 = vmatpush1.bf16.msra.mxu0 %v2031
          %2317 = vmatprep.subr.bf16.mxu0 0
          %2318 = vmatpush1.bf16.msra.mxu0 %v2032
          %2319 = vmatprep.subr.bf16.mxu0 0
          %2320 = vmatpush1.bf16.msra.mxu0 %v2033
          %2321 = vmatprep.subr.bf16.mxu0 0
          %2322 = vmatpush1.bf16.msra.mxu0 %v2034
          %2323 = vmatprep.subr.bf16.mxu0 0
          %2324 = vmatpush1.bf16.msra.mxu0 %v2035
          %2325 = vmatprep.subr.bf16.mxu0 0
          %2326 = vmatpush1.bf16.msra.mxu0 %v2036
          %2327 = vmatprep.subr.bf16.mxu0 0
          %2328 = vmatpush1.bf16.msra.mxu0 %v2037
          %2329 = vmatprep.subr.bf16.mxu0 0
          %2330 = vmatpush1.bf16.msra.mxu0 %v2038
          %2331 = vmatprep.subr.bf16.mxu0 0
          %2332 = vmatpush1.bf16.msra.mxu0 %v2039
          %2333 = vmatprep.subr.bf16.mxu0 0
          %2334 = vmatpush1.bf16.msra.mxu0 %v2040
          %2335 = vmatprep.subr.bf16.mxu0 0
          %2336 = vmatpush1.bf16.msra.mxu0 %v2041
          %2337 = vmatprep.subr.bf16.mxu0 0
          %2338 = vmatpush1.bf16.msra.mxu0 %v2042
          %2339 = vmatprep.mubr.bf16.mxu0 %v1432
          %2340 = vmatmul.mubr.bf16.gmra.mrb[0].mxu0 %v1430
          %v2341 = vpop.f32.mrb[0].mxu0
          %v2342 = vadd.f32 %v2302, %v2341
          %v2343 = vpop.f32.mrb[0].mxu0
          %v2344 = vpop.f32.mrb[0].mxu0
          %v2345 = vpop.f32.mrb[0].mxu0
          %2346 = vdwg.mxu0
          %2347 = vmatprep.subr.bf16.mxu0 0
          %2348 = vmatpush1.bf16.msra.mxu0 %v2043
          %2349 = vmatprep.subr.bf16.mxu0 0
          %2350 = vmatpush1.bf16.msra.mxu0 %v2044
          %2351 = vmatprep.subr.bf16.mxu0 0
          %2352 = vmatpush1.bf16.msra.mxu0 %v2045
          %2353 = vmatprep.subr.bf16.mxu0 0
          %2354 = vmatpush1.bf16.msra.mxu0 %v2046
          %2355 = vmatprep.subr.bf16.mxu0 0
          %2356 = vmatpush1.bf16.msra.mxu0 %v2047
          %2357 = vmatprep.subr.bf16.mxu0 0
          %2358 = vmatpush1.bf16.msra.mxu0 %v2048
          %2359 = vmatprep.subr.bf16.mxu0 0
          %2360 = vmatpush1.bf16.msra.mxu0 %v2049
          %2361 = vmatprep.subr.bf16.mxu0 0
          %2362 = vmatpush1.bf16.msra.mxu0 %v2050
          %2363 = vmatprep.subr.bf16.mxu0 0
          %2364 = vmatpush1.bf16.msra.mxu0 %v2051
          %2365 = vmatprep.subr.bf16.mxu0 0
          %2366 = vmatpush1.bf16.msra.mxu0 %v2052
          %2367 = vmatprep.subr.bf16.mxu0 0
          %2368 = vmatpush1.bf16.msra.mxu0 %v2053
          %2369 = vmatprep.subr.bf16.mxu0 0
          %2370 = vmatpush1.bf16.msra.mxu0 %v2054
          %2371 = vmatprep.subr.bf16.mxu0 0
          %2372 = vmatpush1.bf16.msra.mxu0 %v2055
          %2373 = vmatprep.subr.bf16.mxu0 0
          %2374 = vmatpush1.bf16.msra.mxu0 %v2056
          %2375 = vmatprep.subr.bf16.mxu0 0
          %2376 = vmatpush1.bf16.msra.mxu0 %v2057
          %2377 = vmatprep.subr.bf16.mxu0 0
          %2378 = vmatpush1.bf16.msra.mxu0 %v2058
          %2379 = vmatprep.mubr.bf16.mxu0 %v1429
          %2380 = vmatmul.mubr.bf16.gmra.mrb[0].mxu0 %v1415
          %v2381 = vpop.f32.mrb[0].mxu0
          %v2382 = vadd.f32 %v2342, %v2381
          %v2383 = vpop.f32.mrb[0].mxu0
          %v2384 = vpop.f32.mrb[0].mxu0
          %v2385 = vpop.f32.mrb[0].mxu0
          %2386 = vdwg.mxu0
          %2387 = vmatprep.subr.bf16.mxu0 0
          %2388 = vmatpush1.bf16.msra.mxu0 %v2059
          %2389 = vmatprep.subr.bf16.mxu0 0
          %2390 = vmatpush1.bf16.msra.mxu0 %v2060
          %2391 = vmatprep.subr.bf16.mxu0 0
          %2392 = vmatpush1.bf16.msra.mxu0 %v2061
          %2393 = vmatprep.subr.bf16.mxu0 0
          %2394 = vmatpush1.bf16.msra.mxu0 %v2062
          %2395 = vmatprep.subr.bf16.mxu0 0
          %2396 = vmatpush1.bf16.msra.mxu0 %v2063
          %2397 = vmatprep.subr.bf16.mxu0 0
          %2398 = vmatpush1.bf16.msra.mxu0 %v2064
          %2399 = vmatprep.subr.bf16.mxu0 0
          %2400 = vmatpush1.bf16.msra.mxu0 %v2065
          %2401 = vmatprep.subr.bf16.mxu0 0
          %2402 = vmatpush1.bf16.msra.mxu0 %v2066
          %2403 = vmatprep.subr.bf16.mxu0 0
          %2404 = vmatpush1.bf16.msra.mxu0 %v2067
          %2405 = vmatprep.subr.bf16.mxu0 0
          %2406 = vmatpush1.bf16.msra.mxu0 %v2068
          %2407 = vmatprep.subr.bf16.mxu0 0
          %2408 = vmatpush1.bf16.msra.mxu0 %v2069
          %2409 = vmatprep.subr.bf16.mxu0 0
          %2410 = vmatpush1.bf16.msra.mxu0 %v2070
          %2411 = vmatprep.subr.bf16.mxu0 0
          %2412 = vmatpush1.bf16.msra.mxu0 %v2071
          %2413 = vmatprep.subr.bf16.mxu0 0
          %2414 = vmatpush1.bf16.msra.mxu0 %v2072
          %2415 = vmatprep.subr.bf16.mxu0 0
          %2416 = vmatpush1.bf16.msra.mxu0 %v2073
          %2417 = vmatprep.subr.bf16.mxu0 0
          %2418 = vmatpush1.bf16.msra.mxu0 %v2074
          %2419 = vmatprep.mubr.bf16.mxu0 %v1433
          %2420 = vmatmul.mubr.bf16.gmra.mrb[0].mxu0 %v1431
          %v2421 = vpop.f32.mrb[0].mxu0
          %v2422 = vadd.f32 %v2382, %v2421
          %v2423 = vpop.f32.mrb[0].mxu0
          %v2424 = vpop.f32.mrb[0].mxu0
          %v2425 = vpop.f32.mrb[0].mxu0
          %2426 = vdwg.mxu0
          %2427 = vmatprep.subr.bf16.mxu0 0
          %2428 = vmatpush1.bf16.msra.mxu0 %v2075
          %2429 = vmatprep.subr.bf16.mxu0 0
          %2430 = vmatpush1.bf16.msra.mxu0 %v2076
          %2431 = vmatprep.subr.bf16.mxu0 0
          %2432 = vmatpush1.bf16.msra.mxu0 %v2077
          %2433 = vmatprep.subr.bf16.mxu0 0
          %2434 = vmatpush1.bf16.msra.mxu0 %v2078
          %2435 = vmatprep.subr.bf16.mxu0 0
          %2436 = vmatpush1.bf16.msra.mxu0 %v2079
          %2437 = vmatprep.subr.bf16.mxu0 0
          %2438 = vmatpush1.bf16.msra.mxu0 %v2080
          %2439 = vmatprep.subr.bf16.mxu0 0
          %2440 = vmatpush1.bf16.msra.mxu0 %v2081
          %2441 = vmatprep.subr.bf16.mxu0 0
          %2442 = vmatpush1.bf16.msra.mxu0 %v2082
          %2443 = vmatprep.subr.bf16.mxu0 0
          %2444 = vmatpush1.bf16.msra.mxu0 %v2083
          %2445 = vmatprep.subr.bf16.mxu0 0
          %2446 = vmatpush1.bf16.msra.mxu0 %v2084
          %2447 = vmatprep.subr.bf16.mxu0 0
          %2448 = vmatpush1.bf16.msra.mxu0 %v2085
          %2449 = vmatprep.subr.bf16.mxu0 0
          %2450 = vmatpush1.bf16.msra.mxu0 %v2086
          %2451 = vmatprep.subr.bf16.mxu0 0
          %2452 = vmatpush1.bf16.msra.mxu0 %v2087
          %2453 = vmatprep.subr.bf16.mxu0 0
          %2454 = vmatpush1.bf16.msra.mxu0 %v2088
          %2455 = vmatprep.subr.bf16.mxu0 0
          %2456 = vmatpush1.bf16.msra.mxu0 %v2089
          %2457 = vmatprep.subr.bf16.mxu0 0
          %2458 = vmatpush1.bf16.msra.mxu0 %v2090
          %2459 = vmatprep.mubr.bf16.mxu0 %v1471
          %2460 = vmatmul.mubr.bf16.gmra.mrb[0].mxu0 %v1457
          %v2461 = vpop.f32.mrb[0].mxu0
          %v2462 = vadd.f32 %v2422, %v2461
          %v2463 = vpop.f32.mrb[0].mxu0
          %v2464 = vpop.f32.mrb[0].mxu0
          %v2465 = vpop.f32.mrb[0].mxu0
          %2466 = vdwg.mxu0
          %2467 = vmatprep.subr.bf16.mxu0 0
          %2468 = vmatpush1.bf16.msra.mxu0 %v2091
          %2469 = vmatprep.subr.bf16.mxu0 0
          %2470 = vmatpush1.bf16.msra.mxu0 %v2092
          %2471 = vmatprep.subr.bf16.mxu0 0
          %2472 = vmatpush1.bf16.msra.mxu0 %v2093
          %2473 = vmatprep.subr.bf16.mxu0 0
          %2474 = vmatpush1.bf16.msra.mxu0 %v2094
          %2475 = vmatprep.subr.bf16.mxu0 0
          %2476 = vmatpush1.bf16.msra.mxu0 %v2095
          %2477 = vmatprep.subr.bf16.mxu0 0
          %2478 = vmatpush1.bf16.msra.mxu0 %v2096
          %2479 = vmatprep.subr.bf16.mxu0 0
          %2480 = vmatpush1.bf16.msra.mxu0 %v2097
          %2481 = vmatprep.subr.bf16.mxu0 0
          %2482 = vmatpush1.bf16.msra.mxu0 %v2098
          %2483 = vmatprep.subr.bf16.mxu0 0
          %2484 = vmatpush1.bf16.msra.mxu0 %v2099
          %2485 = vmatprep.subr.bf16.mxu0 0
          %2486 = vmatpush1.bf16.msra.mxu0 %v2100
          %2487 = vmatprep.subr.bf16.mxu0 0
          %2488 = vmatpush1.bf16.msra.mxu0 %v2101
          %2489 = vmatprep.subr.bf16.mxu0 0
          %2490 = vmatpush1.bf16.msra.mxu0 %v2102
          %2491 = vmatprep.subr.bf16.mxu0 0
          %2492 = vmatpush1.bf16.msra.mxu0 %v2103
          %2493 = vmatprep.subr.bf16.mxu0 0
          %2494 = vmatpush1.bf16.msra.mxu0 %v2104
          %2495 = vmatprep.subr.bf16.mxu0 0
          %2496 = vmatpush1.bf16.msra.mxu0 %v2105
          %2497 = vmatprep.subr.bf16.mxu0 0
          %2498 = vmatpush1.bf16.msra.mxu0 %v2106
          %2499 = vmatprep.mubr.bf16.mxu0 %v1481
          %2500 = vmatmul.mubr.bf16.gmra.mrb[0].mxu0 %v1479
          %v2501 = vpop.f32.mrb[0].mxu0
          %v2502 = vadd.f32 %v2462, %v2501
          %v2503 = vpop.f32.mrb[0].mxu0
          %v2504 = vpop.f32.mrb[0].mxu0
          %v2505 = vpop.f32.mrb[0].mxu0
          %2506 = vdwg.mxu0
          %2507 = vmatprep.subr.bf16.mxu0 0
          %2508 = vmatpush1.bf16.msra.mxu0 %v2107
          %2509 = vmatprep.subr.bf16.mxu0 0
          %2510 = vmatpush1.bf16.msra.mxu0 %v2108
          %2511 = vmatprep.subr.bf16.mxu0 0
          %2512 = vmatpush1.bf16.msra.mxu0 %v2109
          %2513 = vmatprep.subr.bf16.mxu0 0
          %2514 = vmatpush1.bf16.msra.mxu0 %v2110
          %2515 = vmatprep.subr.bf16.mxu0 0
          %2516 = vmatpush1.bf16.msra.mxu0 %v2111
          %2517 = vmatprep.subr.bf16.mxu0 0
          %2518 = vmatpush1.bf16.msra.mxu0 %v2112
          %2519 = vmatprep.subr.bf16.mxu0 0
          %2520 = vmatpush1.bf16.msra.mxu0 %v2113
          %2521 = vmatprep.subr.bf16.mxu0 0
          %2522 = vmatpush1.bf16.msra.mxu0 %v2114
          %2523 = vmatprep.subr.bf16.mxu0 0
          %2524 = vmatpush1.bf16.msra.mxu0 %v2115
          %2525 = vmatprep.subr.bf16.mxu0 0
          %2526 = vmatpush1.bf16.msra.mxu0 %v2116
          %2527 = vmatprep.subr.bf16.mxu0 0
          %2528 = vmatpush1.bf16.msra.mxu0 %v2117
          %2529 = vmatprep.subr.bf16.mxu0 0
          %2530 = vmatpush1.bf16.msra.mxu0 %v2118
          %2531 = vmatprep.subr.bf16.mxu0 0
          %2532 = vmatpush1.bf16.msra.mxu0 %v2119
          %2533 = vmatprep.subr.bf16.mxu0 0
          %2534 = vmatpush1.bf16.msra.mxu0 %v2120
          %2535 = vmatprep.subr.bf16.mxu0 0
          %2536 = vmatpush1.bf16.msra.mxu0 %v2121
          %2537 = vmatprep.subr.bf16.mxu0 0
          %2538 = vmatpush1.bf16.msra.mxu0 %v2122
          %2539 = vmatprep.mubr.bf16.mxu0 %v1478
          %2540 = vmatmul.mubr.bf16.gmra.mrb[0].mxu0 %v1464
          %v2541 = vpop.f32.mrb[0].mxu0
          %v2542 = vadd.f32 %v2502, %v2541
          %v2543 = vpop.f32.mrb[0].mxu0
          %v2544 = vpop.f32.mrb[0].mxu0
          %v2545 = vpop.f32.mrb[0].mxu0
          %2546 = vdwg.mxu0
          %2547 = vmatprep.subr.bf16.mxu0 0
          %2548 = vmatpush1.bf16.msra.mxu0 %v2123
          %2549 = vmatprep.subr.bf16.mxu0 0
          %2550 = vmatpush1.bf16.msra.mxu0 %v2124
          %2551 = vmatprep.subr.bf16.mxu0 0
          %2552 = vmatpush1.bf16.msra.mxu0 %v2125
          %2553 = vmatprep.subr.bf16.mxu0 0
          %2554 = vmatpush1.bf16.msra.mxu0 %v2126
          %2555 = vmatprep.subr.bf16.mxu0 0
          %2556 = vmatpush1.bf16.msra.mxu0 %v2127
          %2557 = vmatprep.subr.bf16.mxu0 0
          %2558 = vmatpush1.bf16.msra.mxu0 %v2128
          %2559 = vmatprep.subr.bf16.mxu0 0
          %2560 = vmatpush1.bf16.msra.mxu0 %v2129
          %2561 = vmatprep.subr.bf16.mxu0 0
          %2562 = vmatpush1.bf16.msra.mxu0 %v2130
          %2563 = vmatprep.subr.bf16.mxu0 0
          %2564 = vmatpush1.bf16.msra.mxu0 %v2131
          %2565 = vmatprep.subr.bf16.mxu0 0
          %2566 = vmatpush1.bf16.msra.mxu0 %v2132
          %2567 = vmatprep.subr.bf16.mxu0 0
          %2568 = vmatpush1.bf16.msra.mxu0 %v2133
          %2569 = vmatprep.subr.bf16.mxu0 0
          %2570 = vmatpush1.bf16.msra.mxu0 %v2134
          %2571 = vmatprep.subr.bf16.mxu0 0
          %2572 = vmatpush1.bf16.msra.mxu0 %v2135
          %2573 = vmatprep.subr.bf16.mxu0 0
          %2574 = vmatpush1.bf16.msra.mxu0 %v2136
          %2575 = vmatprep.subr.bf16.mxu0 0
          %2576 = vmatpush1.bf16.msra.mxu0 %v2137
          %2577 = vmatprep.subr.bf16.mxu0 0
          %2578 = vmatpush1.bf16.msra.mxu0 %v2138
          %2579 = vmatprep.mubr.bf16.mxu0 %v1482
          %2580 = vmatmul.mubr.bf16.gmra.mrb[0].mxu0 %v1480
          %v2581 = vpop.f32.mrb[0].mxu0
          %v2582 = vadd.f32 %v2542, %v2581
          %v2583 = vpop.f32.mrb[0].mxu0
          %v2584 = vpop.f32.mrb[0].mxu0
          %v2585 = vpop.f32.mrb[0].mxu0
          %2586 = vdwg.mxu0
          %v2587 = vld [vmem:[%s1048] sm:$0xff]
          %v2588 = vld [vmem:[%s1048 + $0x8] sm:$0xff]
          %v2589 = vld [vmem:[%s4] sm:$0xf]
          %v2590 = vld [vmem:[%s4 + $0x4] sm:$0xf]
          %v2591 = vld [vmem:[%s4 + $0x8] sm:$0xf]
          %v2592 = vld [vmem:[%s4 + $0xc] sm:$0xf]
          %v2593 = vld [vmem:[%s4 + $0x10] sm:$0xf]
          %v2594 = vld [vmem:[%s4 + $0x14] sm:$0xf]
          %v2595 = vld [vmem:[%s4 + $0x18] sm:$0xf]
          %v2596 = vld [vmem:[%s4 + $0x1c] sm:$0xf]
          %v2597 = vld [vmem:[%s4 + $0x20] sm:$0xf]
          %v2598 = vld [vmem:[%s4 + $0x24] sm:$0xf]
          %v2599 = vld [vmem:[%s4 + $0x28] sm:$0xf]
          %v2600 = vld [vmem:[%s4 + $0x2c] sm:$0xf]
          %v2601 = vld [vmem:[%s4 + $0x30] sm:$0xf]
          %v2602 = vld [vmem:[%s4 + $0x34] sm:$0xf]
          %v2603 = vld [vmem:[%s4 + $0x38] sm:$0xf]
          %v2604 = vld [vmem:[%s4 + $0x3c] sm:$0xf]
          %v2605 = vld [vmem:[%s4 + $0x40] sm:$0xf]
          %v2606 = vld [vmem:[%s4 + $0x44] sm:$0xf]
          %v2607 = vld [vmem:[%s4 + $0x48] sm:$0xf]
          %v2608 = vld [vmem:[%s4 + $0x4c] sm:$0xf]
          %v2609 = vld [vmem:[%s4 + $0x50] sm:$0xf]
          %v2610 = vld [vmem:[%s4 + $0x54] sm:$0xf]
          %v2611 = vld [vmem:[%s4 + $0x58] sm:$0xf]
          %v2612 = vld [vmem:[%s4 + $0x5c] sm:$0xf]
          %v2613 = vld [vmem:[%s4 + $0x60] sm:$0xf]
          %v2614 = vld [vmem:[%s4 + $0x64] sm:$0xf]
          %v2615 = vld [vmem:[%s4 + $0x68] sm:$0xf]
          %v2616 = vld [vmem:[%s4 + $0x6c] sm:$0xf]
          %v2617 = vld [vmem:[%s4 + $0x70] sm:$0xf]
          %v2618 = vld [vmem:[%s4 + $0x74] sm:$0xf]
          %v2619 = vld [vmem:[%s4 + $0x78] sm:$0xf]
          %v2620 = vld [vmem:[%s4 + $0x7c] sm:$0xf]
          %v2621 = vld [vmem:[%s4 + $0x80] sm:$0xf]
          %v2622 = vld [vmem:[%s4 + $0x84] sm:$0xf]
          %v2623 = vld [vmem:[%s4 + $0x88] sm:$0xf]
          %v2624 = vld [vmem:[%s4 + $0x8c] sm:$0xf]
          %v2625 = vld [vmem:[%s4 + $0x90] sm:$0xf]
          %v2626 = vld [vmem:[%s4 + $0x94] sm:$0xf]
          %v2627 = vld [vmem:[%s4 + $0x98] sm:$0xf]
          %v2628 = vld [vmem:[%s4 + $0x9c] sm:$0xf]
          %v2629 = vld [vmem:[%s4 + $0xa0] sm:$0xf]
          %v2630 = vld [vmem:[%s4 + $0xa4] sm:$0xf]
          %v2631 = vld [vmem:[%s4 + $0xa8] sm:$0xf]
          %v2632 = vld [vmem:[%s4 + $0xac] sm:$0xf]
          %v2633 = vld [vmem:[%s4 + $0xb0] sm:$0xf]
          %v2634 = vld [vmem:[%s4 + $0xb4] sm:$0xf]
          %v2635 = vld [vmem:[%s4 + $0xb8] sm:$0xf]
          %v2636 = vld [vmem:[%s4 + $0xbc] sm:$0xf]
          %v2637 = vld [vmem:[%s4 + $0xc0] sm:$0xf]
          %v2638 = vld [vmem:[%s4 + $0xc4] sm:$0xf]
          %v2639 = vld [vmem:[%s4 + $0xc8] sm:$0xf]
          %v2640 = vld [vmem:[%s4 + $0xcc] sm:$0xf]
          %v2641 = vld [vmem:[%s4 + $0xd0] sm:$0xf]
          %v2642 = vld [vmem:[%s4 + $0xd4] sm:$0xf]
          %v2643 = vld [vmem:[%s4 + $0xd8] sm:$0xf]
          %v2644 = vld [vmem:[%s4 + $0xdc] sm:$0xf]
          %v2645 = vld [vmem:[%s4 + $0xe0] sm:$0xf]
          %v2646 = vld [vmem:[%s4 + $0xe4] sm:$0xf]
          %v2647 = vld [vmem:[%s4 + $0xe8] sm:$0xf]
          %v2648 = vld [vmem:[%s4 + $0xec] sm:$0xf]
          %v2649 = vld [vmem:[%s4 + $0xf0] sm:$0xf]
          %v2650 = vld [vmem:[%s4 + $0xf4] sm:$0xf]
          %v2651 = vld [vmem:[%s4 + $0xf8] sm:$0xf]
          %v2652 = vld [vmem:[%s4 + $0xfc] sm:$0xf]
          %v2653 = vld [vmem:[%s4 + $0x100] sm:$0xf]
          %v2654 = vld [vmem:[%s4 + $0x104] sm:$0xf]
          %v2655 = vld [vmem:[%s4 + $0x108] sm:$0xf]
          %v2656 = vld [vmem:[%s4 + $0x10c] sm:$0xf]
          %v2657 = vld [vmem:[%s4 + $0x110] sm:$0xf]
          %v2658 = vld [vmem:[%s4 + $0x114] sm:$0xf]
          %v2659 = vld [vmem:[%s4 + $0x118] sm:$0xf]
          %v2660 = vld [vmem:[%s4 + $0x11c] sm:$0xf]
          %v2661 = vld [vmem:[%s4 + $0x120] sm:$0xf]
          %v2662 = vld [vmem:[%s4 + $0x124] sm:$0xf]
          %v2663 = vld [vmem:[%s4 + $0x128] sm:$0xf]
          %v2664 = vld [vmem:[%s4 + $0x12c] sm:$0xf]
          %v2665 = vld [vmem:[%s4 + $0x130] sm:$0xf]
          %v2666 = vld [vmem:[%s4 + $0x134] sm:$0xf]
          %v2667 = vld [vmem:[%s4 + $0x138] sm:$0xf]
          %v2668 = vld [vmem:[%s4 + $0x13c] sm:$0xf]
          %v2669 = vld [vmem:[%s4 + $0x140] sm:$0xf]
          %v2670 = vld [vmem:[%s4 + $0x144] sm:$0xf]
          %v2671 = vld [vmem:[%s4 + $0x148] sm:$0xf]
          %v2672 = vld [vmem:[%s4 + $0x14c] sm:$0xf]
          %v2673 = vld [vmem:[%s4 + $0x150] sm:$0xf]
          %v2674 = vld [vmem:[%s4 + $0x154] sm:$0xf]
          %v2675 = vld [vmem:[%s4 + $0x158] sm:$0xf]
          %v2676 = vld [vmem:[%s4 + $0x15c] sm:$0xf]
          %v2677 = vld [vmem:[%s4 + $0x160] sm:$0xf]
          %v2678 = vld [vmem:[%s4 + $0x164] sm:$0xf]
          %v2679 = vld [vmem:[%s4 + $0x168] sm:$0xf]
          %v2680 = vld [vmem:[%s4 + $0x16c] sm:$0xf]
          %v2681 = vld [vmem:[%s4 + $0x170] sm:$0xf]
          %v2682 = vld [vmem:[%s4 + $0x174] sm:$0xf]
          %v2683 = vld [vmem:[%s4 + $0x178] sm:$0xf]
          %v2684 = vld [vmem:[%s4 + $0x17c] sm:$0xf]
          %v2685 = vld [vmem:[%s4 + $0x180] sm:$0xf]
          %v2686 = vld [vmem:[%s4 + $0x184] sm:$0xf]
          %v2687 = vld [vmem:[%s4 + $0x188] sm:$0xf]
          %v2688 = vld [vmem:[%s4 + $0x18c] sm:$0xf]
          %v2689 = vld [vmem:[%s4 + $0x190] sm:$0xf]
          %v2690 = vld [vmem:[%s4 + $0x194] sm:$0xf]
          %v2691 = vld [vmem:[%s4 + $0x198] sm:$0xf]
          %v2692 = vld [vmem:[%s4 + $0x19c] sm:$0xf]
          %v2693 = vld [vmem:[%s4 + $0x1a0] sm:$0xf]
          %v2694 = vld [vmem:[%s4 + $0x1a4] sm:$0xf]
          %v2695 = vld [vmem:[%s4 + $0x1a8] sm:$0xf]
          %v2696 = vld [vmem:[%s4 + $0x1ac] sm:$0xf]
          %v2697 = vld [vmem:[%s4 + $0x1b0] sm:$0xf]
          %v2698 = vld [vmem:[%s4 + $0x1b4] sm:$0xf]
          %v2699 = vld [vmem:[%s4 + $0x1b8] sm:$0xf]
          %v2700 = vld [vmem:[%s4 + $0x1bc] sm:$0xf]
          %v2701 = vld [vmem:[%s4 + $0x1c0] sm:$0xf]
          %v2702 = vld [vmem:[%s4 + $0x1c4] sm:$0xf]
          %v2703 = vld [vmem:[%s4 + $0x1c8] sm:$0xf]
          %v2704 = vld [vmem:[%s4 + $0x1cc] sm:$0xf]
          %v2705 = vld [vmem:[%s4 + $0x1d0] sm:$0xf]
          %v2706 = vld [vmem:[%s4 + $0x1d4] sm:$0xf]
          %v2707 = vld [vmem:[%s4 + $0x1d8] sm:$0xf]
          %v2708 = vld [vmem:[%s4 + $0x1dc] sm:$0xf]
          %v2709 = vld [vmem:[%s4 + $0x1e0] sm:$0xf]
          %v2710 = vld [vmem:[%s4 + $0x1e4] sm:$0xf]
          %v2711 = vld [vmem:[%s4 + $0x1e8] sm:$0xf]
          %v2712 = vld [vmem:[%s4 + $0x1ec] sm:$0xf]
          %v2713 = vld [vmem:[%s4 + $0x1f0] sm:$0xf]
          %v2714 = vld [vmem:[%s4 + $0x1f4] sm:$0xf]
          %v2715 = vld [vmem:[%s4 + $0x1f8] sm:$0xf]
          %v2716 = vld [vmem:[%s4 + $0x1fc] sm:$0xf]
          %v2717 = vld [vmem:[%s4 + $0x200] sm:$0xf]
          %v2718 = vld [vmem:[%s4 + $0x204] sm:$0xf]
          %v2719 = vld [vmem:[%s4 + $0x208] sm:$0xf]
          %v2720 = vld [vmem:[%s4 + $0x20c] sm:$0xf]
          %v2721 = vld [vmem:[%s4 + $0x210] sm:$0xf]
          %v2722 = vld [vmem:[%s4 + $0x214] sm:$0xf]
          %v2723 = vld [vmem:[%s4 + $0x218] sm:$0xf]
          %v2724 = vld [vmem:[%s4 + $0x21c] sm:$0xf]
          %v2725 = vld [vmem:[%s4 + $0x220] sm:$0xf]
          %v2726 = vld [vmem:[%s4 + $0x224] sm:$0xf]
          %v2727 = vld [vmem:[%s4 + $0x228] sm:$0xf]
          %v2728 = vld [vmem:[%s4 + $0x22c] sm:$0xf]
          %v2729 = vld [vmem:[%s4 + $0x230] sm:$0xf]
          %v2730 = vld [vmem:[%s4 + $0x234] sm:$0xf]
          %v2731 = vld [vmem:[%s4 + $0x238] sm:$0xf]
          %v2732 = vld [vmem:[%s4 + $0x23c] sm:$0xf]
          %v2733 = vld [vmem:[%s4 + $0x240] sm:$0xf]
          %v2734 = vld [vmem:[%s4 + $0x244] sm:$0xf]
          %v2735 = vld [vmem:[%s4 + $0x248] sm:$0xf]
          %v2736 = vld [vmem:[%s4 + $0x24c] sm:$0xf]
          %v2737 = vld [vmem:[%s4 + $0x250] sm:$0xf]
          %v2738 = vld [vmem:[%s4 + $0x254] sm:$0xf]
          %v2739 = vld [vmem:[%s4 + $0x258] sm:$0xf]
          %v2740 = vld [vmem:[%s4 + $0x25c] sm:$0xf]
          %v2741 = vld [vmem:[%s4 + $0x260] sm:$0xf]
          %v2742 = vld [vmem:[%s4 + $0x264] sm:$0xf]
          %v2743 = vld [vmem:[%s4 + $0x268] sm:$0xf]
          %v2744 = vld [vmem:[%s4 + $0x26c] sm:$0xf]
          %v2745 = vld [vmem:[%s4 + $0x270] sm:$0xf]
          %v2746 = vld [vmem:[%s4 + $0x274] sm:$0xf]
          %v2747 = vld [vmem:[%s4 + $0x278] sm:$0xf]
          %v2748 = vld [vmem:[%s4 + $0x27c] sm:$0xf]
          %v2749 = vld [vmem:[%s4 + $0x280] sm:$0xf]
          %v2750 = vld [vmem:[%s4 + $0x284] sm:$0xf]
          %v2751 = vld [vmem:[%s4 + $0x288] sm:$0xf]
          %v2752 = vld [vmem:[%s4 + $0x28c] sm:$0xf]
          %v2753 = vld [vmem:[%s4 + $0x290] sm:$0xf]
          %v2754 = vld [vmem:[%s4 + $0x294] sm:$0xf]
          %v2755 = vld [vmem:[%s4 + $0x298] sm:$0xf]
          %v2756 = vld [vmem:[%s4 + $0x29c] sm:$0xf]
          %v2757 = vld [vmem:[%s4 + $0x2a0] sm:$0xf]
          %v2758 = vld [vmem:[%s4 + $0x2a4] sm:$0xf]
          %v2759 = vld [vmem:[%s4 + $0x2a8] sm:$0xf]
          %v2760 = vld [vmem:[%s4 + $0x2ac] sm:$0xf]
          %v2761 = vld [vmem:[%s4 + $0x2b0] sm:$0xf]
          %v2762 = vld [vmem:[%s4 + $0x2b4] sm:$0xf]
          %v2763 = vld [vmem:[%s4 + $0x2b8] sm:$0xf]
          %v2764 = vld [vmem:[%s4 + $0x2bc] sm:$0xf]
          %v2765 = vld [vmem:[%s4 + $0x2c0] sm:$0xf]
          %v2766 = vld [vmem:[%s4 + $0x2c4] sm:$0xf]
          %v2767 = vld [vmem:[%s4 + $0x2c8] sm:$0xf]
          %v2768 = vld [vmem:[%s4 + $0x2cc] sm:$0xf]
          %v2769 = vld [vmem:[%s4 + $0x2d0] sm:$0xf]
          %v2770 = vld [vmem:[%s4 + $0x2d4] sm:$0xf]
          %v2771 = vld [vmem:[%s4 + $0x2d8] sm:$0xf]
          %v2772 = vld [vmem:[%s4 + $0x2dc] sm:$0xf]
          %v2773 = vld [vmem:[%s4 + $0x2e0] sm:$0xf]
          %v2774 = vld [vmem:[%s4 + $0x2e4] sm:$0xf]
          %v2775 = vld [vmem:[%s4 + $0x2e8] sm:$0xf]
          %v2776 = vld [vmem:[%s4 + $0x2ec] sm:$0xf]
          %v2777 = vld [vmem:[%s4 + $0x2f0] sm:$0xf]
          %v2778 = vld [vmem:[%s4 + $0x2f4] sm:$0xf]
          %v2779 = vld [vmem:[%s4 + $0x2f8] sm:$0xf]
          %v2780 = vld [vmem:[%s4 + $0x2fc] sm:$0xf]
          %v2781 = vld [vmem:[%s4 + $0x300] sm:$0xf]
          %v2782 = vld [vmem:[%s4 + $0x304] sm:$0xf]
          %v2783 = vld [vmem:[%s4 + $0x308] sm:$0xf]
          %v2784 = vld [vmem:[%s4 + $0x30c] sm:$0xf]
          %v2785 = vld [vmem:[%s4 + $0x310] sm:$0xf]
          %v2786 = vld [vmem:[%s4 + $0x314] sm:$0xf]
          %v2787 = vld [vmem:[%s4 + $0x318] sm:$0xf]
          %v2788 = vld [vmem:[%s4 + $0x31c] sm:$0xf]
          %v2789 = vld [vmem:[%s4 + $0x320] sm:$0xf]
          %v2790 = vld [vmem:[%s4 + $0x324] sm:$0xf]
          %v2791 = vld [vmem:[%s4 + $0x328] sm:$0xf]
          %v2792 = vld [vmem:[%s4 + $0x32c] sm:$0xf]
          %v2793 = vld [vmem:[%s4 + $0x330] sm:$0xf]
          %v2794 = vld [vmem:[%s4 + $0x334] sm:$0xf]
          %v2795 = vld [vmem:[%s4 + $0x338] sm:$0xf]
          %v2796 = vld [vmem:[%s4 + $0x33c] sm:$0xf]
          %v2797 = vld [vmem:[%s4 + $0x340] sm:$0xf]
          %v2798 = vld [vmem:[%s4 + $0x344] sm:$0xf]
          %v2799 = vld [vmem:[%s4 + $0x348] sm:$0xf]
          %v2800 = vld [vmem:[%s4 + $0x34c] sm:$0xf]
          %v2801 = vld [vmem:[%s4 + $0x350] sm:$0xf]
          %v2802 = vld [vmem:[%s4 + $0x354] sm:$0xf]
          %v2803 = vld [vmem:[%s4 + $0x358] sm:$0xf]
          %v2804 = vld [vmem:[%s4 + $0x35c] sm:$0xf]
          %v2805 = vld [vmem:[%s4 + $0x360] sm:$0xf]
          %v2806 = vld [vmem:[%s4 + $0x364] sm:$0xf]
          %v2807 = vld [vmem:[%s4 + $0x368] sm:$0xf]
          %v2808 = vld [vmem:[%s4 + $0x36c] sm:$0xf]
          %v2809 = vld [vmem:[%s4 + $0x370] sm:$0xf]
          %v2810 = vld [vmem:[%s4 + $0x374] sm:$0xf]
          %v2811 = vld [vmem:[%s4 + $0x378] sm:$0xf]
          %v2812 = vld [vmem:[%s4 + $0x37c] sm:$0xf]
          %v2813 = vld [vmem:[%s4 + $0x380] sm:$0xf]
          %v2814 = vld [vmem:[%s4 + $0x384] sm:$0xf]
          %v2815 = vld [vmem:[%s4 + $0x388] sm:$0xf]
          %v2816 = vld [vmem:[%s4 + $0x38c] sm:$0xf]
          %v2817 = vld [vmem:[%s4 + $0x390] sm:$0xf]
          %v2818 = vld [vmem:[%s4 + $0x394] sm:$0xf]
          %v2819 = vld [vmem:[%s4 + $0x398] sm:$0xf]
          %v2820 = vld [vmem:[%s4 + $0x39c] sm:$0xf]
          %v2821 = vld [vmem:[%s4 + $0x3a0] sm:$0xf]
          %v2822 = vld [vmem:[%s4 + $0x3a4] sm:$0xf]
          %v2823 = vld [vmem:[%s4 + $0x3a8] sm:$0xf]
          %v2824 = vld [vmem:[%s4 + $0x3ac] sm:$0xf]
          %v2825 = vld [vmem:[%s4 + $0x3b0] sm:$0xf]
          %v2826 = vld [vmem:[%s4 + $0x3b4] sm:$0xf]
          %v2827 = vld [vmem:[%s4 + $0x3b8] sm:$0xf]
          %v2828 = vld [vmem:[%s4 + $0x3bc] sm:$0xf]
          %v2829 = vld [vmem:[%s4 + $0x3c0] sm:$0xf]
          %v2830 = vld [vmem:[%s4 + $0x3c4] sm:$0xf]
          %v2831 = vld [vmem:[%s4 + $0x3c8] sm:$0xf]
          %v2832 = vld [vmem:[%s4 + $0x3cc] sm:$0xf]
          %v2833 = vld [vmem:[%s4 + $0x3d0] sm:$0xf]
          %v2834 = vld [vmem:[%s4 + $0x3d4] sm:$0xf]
          %v2835 = vld [vmem:[%s4 + $0x3d8] sm:$0xf]
          %v2836 = vld [vmem:[%s4 + $0x3dc] sm:$0xf]
          %v2837 = vld [vmem:[%s4 + $0x3e0] sm:$0xf]
          %v2838 = vld [vmem:[%s4 + $0x3e4] sm:$0xf]
          %v2839 = vld [vmem:[%s4 + $0x3e8] sm:$0xf]
          %v2840 = vld [vmem:[%s4 + $0x3ec] sm:$0xf]
          %v2841 = vld [vmem:[%s4 + $0x3f0] sm:$0xf]
          %v2842 = vld [vmem:[%s4 + $0x3f4] sm:$0xf]
          %v2843 = vld [vmem:[%s4 + $0x3f8] sm:$0xf]
          %v2844 = vld [vmem:[%s4 + $0x3fc] sm:$0xf]
          %v2845 = vld [vmem:[%s5] sm:$0x1]
          %v2847 = vlaneseq
          %v2848 = vshrl.u32 %v2847, 7
          %v2849 = vsub.s32 0, %v2848
          %v2850 = vrot.slane %v2845, %v2849
          %v2854 = vcombine.high %v2587, %v2587
          %v2856 = vunpack.c.l.s4 1966171168
          %v2857 = vunpack.c.0.s8 %v2856
          %v2858 = vlaneseq
          %v2859 = vshrl.u32 %v2858, 7
          %v2860 = vsub.s32 %v2857, %v2859
          %v2861 = vrot.slane %v2587, %v2860
          %v2863 = vunpack.c.l.s4 1966171168
          %v2864 = vunpack.c.0.s8 %v2863
          %v2865 = vlaneseq
          %v2866 = vshrl.u32 %v2865, 7
          %v2867 = vsub.s32 %v2864, %v2866
          %v2868 = vrot.slane %v2854, %v2867
          %v2869 = vcombine.high %v2861, %v2861
          %v2870 = vcombine.high %v2868, %v2868
          %v2872 = vunpack.c.l.s4 1966171168
          %v2873 = vunpack.c.0.s8 %v2872
          %v2874 = vlaneseq
          %v2875 = vshrl.u32 %v2874, 7
          %v2876 = vsub.s32 %v2873, %v2875
          %v2877 = vrot.slane %v2861, %v2876
          %v2879 = vunpack.c.l.s4 1966171168
          %v2880 = vunpack.c.0.s8 %v2879
          %v2881 = vlaneseq
          %v2882 = vshrl.u32 %v2881, 7
          %v2883 = vsub.s32 %v2880, %v2882
          %v2884 = vrot.slane %v2868, %v2883
          %v2886 = vunpack.c.l.s4 1966171168
          %v2887 = vunpack.c.0.s8 %v2886
          %v2888 = vlaneseq
          %v2889 = vshrl.u32 %v2888, 7
          %v2890 = vsub.s32 %v2887, %v2889
          %v2891 = vrot.slane %v2869, %v2890
          %v2893 = vunpack.c.l.s4 1966171168
          %v2894 = vunpack.c.0.s8 %v2893
          %v2895 = vlaneseq
          %v2896 = vshrl.u32 %v2895, 7
          %v2897 = vsub.s32 %v2894, %v2896
          %v2898 = vrot.slane %v2870, %v2897
          %v2899 = vcombine.high %v2877, %v2877
          %v2900 = vcombine.high %v2884, %v2884
          %v2901 = vcombine.high %v2891, %v2891
          %v2902 = vcombine.high %v2898, %v2898
          %v2903 = vcombine.high %v2588, %v2588
          %v2905 = vunpack.c.l.s4 1966171168
          %v2906 = vunpack.c.0.s8 %v2905
          %v2907 = vlaneseq
          %v2908 = vshrl.u32 %v2907, 7
          %v2909 = vsub.s32 %v2906, %v2908
          %v2910 = vrot.slane %v2588, %v2909
          %v2912 = vunpack.c.l.s4 1966171168
          %v2913 = vunpack.c.0.s8 %v2912
          %v2914 = vlaneseq
          %v2915 = vshrl.u32 %v2914, 7
          %v2916 = vsub.s32 %v2913, %v2915
          %v2917 = vrot.slane %v2903, %v2916
          %v2918 = vcombine.high %v2910, %v2910
          %v2919 = vcombine.high %v2917, %v2917
          %v2921 = vunpack.c.l.s4 1966171168
          %v2922 = vunpack.c.0.s8 %v2921
          %v2923 = vlaneseq
          %v2924 = vshrl.u32 %v2923, 7
          %v2925 = vsub.s32 %v2922, %v2924
          %v2926 = vrot.slane %v2910, %v2925
          %v2928 = vunpack.c.l.s4 1966171168
          %v2929 = vunpack.c.0.s8 %v2928
          %v2930 = vlaneseq
          %v2931 = vshrl.u32 %v2930, 7
          %v2932 = vsub.s32 %v2929, %v2931
          %v2933 = vrot.slane %v2917, %v2932
          %v2935 = vunpack.c.l.s4 1966171168
          %v2936 = vunpack.c.0.s8 %v2935
          %v2937 = vlaneseq
          %v2938 = vshrl.u32 %v2937, 7
          %v2939 = vsub.s32 %v2936, %v2938
          %v2940 = vrot.slane %v2918, %v2939
          %v2942 = vunpack.c.l.s4 1966171168
          %v2943 = vunpack.c.0.s8 %v2942
          %v2944 = vlaneseq
          %v2945 = vshrl.u32 %v2944, 7
          %v2946 = vsub.s32 %v2943, %v2945
          %v2947 = vrot.slane %v2919, %v2946
          %v2948 = vcombine.high %v2926, %v2926
          %v2949 = vcombine.high %v2933, %v2933
          %v2950 = vcombine.high %v2940, %v2940
          %v2951 = vcombine.high %v2947, %v2947
          %v3224 = vunpack.c.l.b16 %v2589
          %v3225 = vunpack.c.l.b16 %v2590
          %v3226 = vunpack.c.l.b16 %v2591
          %v3227 = vunpack.c.l.b16 %v2592
          %v3228 = vunpack.c.l.b16 %v2593
          %v3229 = vunpack.c.l.b16 %v2594
          %v3230 = vunpack.c.l.b16 %v2595
          %v3231 = vunpack.c.l.b16 %v2596
          %v3232 = vunpack.c.l.b16 %v2597
          %v3233 = vunpack.c.l.b16 %v2598
          %v3234 = vunpack.c.l.b16 %v2599
          %v3235 = vunpack.c.l.b16 %v2600
          %v3236 = vunpack.c.l.b16 %v2601
          %v3237 = vunpack.c.l.b16 %v2602
          %v3238 = vunpack.c.l.b16 %v2603
          %v3239 = vunpack.c.l.b16 %v2604
          %v3240 = vunpack.c.l.b16 %v2605
          %v3241 = vunpack.c.l.b16 %v2606
          %v3242 = vunpack.c.l.b16 %v2607
          %v3243 = vunpack.c.l.b16 %v2608
          %v3244 = vunpack.c.l.b16 %v2609
          %v3245 = vunpack.c.l.b16 %v2610
          %v3246 = vunpack.c.l.b16 %v2611
          %v3247 = vunpack.c.l.b16 %v2612
          %v3248 = vunpack.c.l.b16 %v2613
          %v3249 = vunpack.c.l.b16 %v2614
          %v3250 = vunpack.c.l.b16 %v2615
          %v3251 = vunpack.c.l.b16 %v2616
          %v3252 = vunpack.c.l.b16 %v2617
          %v3253 = vunpack.c.l.b16 %v2618
          %v3254 = vunpack.c.l.b16 %v2619
          %v3255 = vunpack.c.l.b16 %v2620
          %v3256 = vunpack.c.l.b16 %v2621
          %v3257 = vunpack.c.l.b16 %v2622
          %v3258 = vunpack.c.l.b16 %v2623
          %v3259 = vunpack.c.l.b16 %v2624
          %v3260 = vunpack.c.l.b16 %v2625
          %v3261 = vunpack.c.l.b16 %v2626
          %v3262 = vunpack.c.l.b16 %v2627
          %v3263 = vunpack.c.l.b16 %v2628
          %v3264 = vunpack.c.l.b16 %v2629
          %v3265 = vunpack.c.l.b16 %v2630
          %v3266 = vunpack.c.l.b16 %v2631
          %v3267 = vunpack.c.l.b16 %v2632
          %v3268 = vunpack.c.l.b16 %v2633
          %v3269 = vunpack.c.l.b16 %v2634
          %v3270 = vunpack.c.l.b16 %v2635
          %v3271 = vunpack.c.l.b16 %v2636
          %v3272 = vunpack.c.l.b16 %v2637
          %v3273 = vunpack.c.l.b16 %v2638
          %v3274 = vunpack.c.l.b16 %v2639
          %v3275 = vunpack.c.l.b16 %v2640
          %v3276 = vunpack.c.l.b16 %v2641
          %v3277 = vunpack.c.l.b16 %v2642
          %v3278 = vunpack.c.l.b16 %v2643
          %v3279 = vunpack.c.l.b16 %v2644
          %v3280 = vunpack.c.l.b16 %v2645
          %v3281 = vunpack.c.l.b16 %v2646
          %v3282 = vunpack.c.l.b16 %v2647
          %v3283 = vunpack.c.l.b16 %v2648
          %v3284 = vunpack.c.l.b16 %v2649
          %v3285 = vunpack.c.l.b16 %v2650
          %v3286 = vunpack.c.l.b16 %v2651
          %v3287 = vunpack.c.l.b16 %v2652
          %v3288 = vunpack.c.l.b16 %v2653
          %v3289 = vunpack.c.l.b16 %v2654
          %v3290 = vunpack.c.l.b16 %v2655
          %v3291 = vunpack.c.l.b16 %v2656
          %v3292 = vunpack.c.l.b16 %v2657
          %v3293 = vunpack.c.l.b16 %v2658
          %v3294 = vunpack.c.l.b16 %v2659
          %v3295 = vunpack.c.l.b16 %v2660
          %v3296 = vunpack.c.l.b16 %v2661
          %v3297 = vunpack.c.l.b16 %v2662
          %v3298 = vunpack.c.l.b16 %v2663
          %v3299 = vunpack.c.l.b16 %v2664
          %v3300 = vunpack.c.l.b16 %v2665
          %v3301 = vunpack.c.l.b16 %v2666
          %v3302 = vunpack.c.l.b16 %v2667
          %v3303 = vunpack.c.l.b16 %v2668
          %v3304 = vunpack.c.l.b16 %v2669
          %v3305 = vunpack.c.l.b16 %v2670
          %v3306 = vunpack.c.l.b16 %v2671
          %v3307 = vunpack.c.l.b16 %v2672
          %v3308 = vunpack.c.l.b16 %v2673
          %v3309 = vunpack.c.l.b16 %v2674
          %v3310 = vunpack.c.l.b16 %v2675
          %v3311 = vunpack.c.l.b16 %v2676
          %v3312 = vunpack.c.l.b16 %v2677
          %v3313 = vunpack.c.l.b16 %v2678
          %v3314 = vunpack.c.l.b16 %v2679
          %v3315 = vunpack.c.l.b16 %v2680
          %v3316 = vunpack.c.l.b16 %v2681
          %v3317 = vunpack.c.l.b16 %v2682
          %v3318 = vunpack.c.l.b16 %v2683
          %v3319 = vunpack.c.l.b16 %v2684
          %v3320 = vunpack.c.l.b16 %v2685
          %v3321 = vunpack.c.l.b16 %v2686
          %v3322 = vunpack.c.l.b16 %v2687
          %v3323 = vunpack.c.l.b16 %v2688
          %v3324 = vunpack.c.l.b16 %v2689
          %v3325 = vunpack.c.l.b16 %v2690
          %v3326 = vunpack.c.l.b16 %v2691
          %v3327 = vunpack.c.l.b16 %v2692
          %v3328 = vunpack.c.l.b16 %v2693
          %v3329 = vunpack.c.l.b16 %v2694
          %v3330 = vunpack.c.l.b16 %v2695
          %v3331 = vunpack.c.l.b16 %v2696
          %v3332 = vunpack.c.l.b16 %v2697
          %v3333 = vunpack.c.l.b16 %v2698
          %v3334 = vunpack.c.l.b16 %v2699
          %v3335 = vunpack.c.l.b16 %v2700
          %v3336 = vunpack.c.l.b16 %v2701
          %v3337 = vunpack.c.l.b16 %v2702
          %v3338 = vunpack.c.l.b16 %v2703
          %v3339 = vunpack.c.l.b16 %v2704
          %v3340 = vunpack.c.l.b16 %v2705
          %v3341 = vunpack.c.l.b16 %v2706
          %v3342 = vunpack.c.l.b16 %v2707
          %v3343 = vunpack.c.l.b16 %v2708
          %v3344 = vunpack.c.l.b16 %v2709
          %v3345 = vunpack.c.l.b16 %v2710
          %v3346 = vunpack.c.l.b16 %v2711
          %v3347 = vunpack.c.l.b16 %v2712
          %v3348 = vunpack.c.l.b16 %v2713
          %v3349 = vunpack.c.l.b16 %v2714
          %v3350 = vunpack.c.l.b16 %v2715
          %v3351 = vunpack.c.l.b16 %v2716
          %v3352 = vunpack.c.l.b16 %v2717
          %v3353 = vunpack.c.l.b16 %v2718
          %v3354 = vunpack.c.l.b16 %v2719
          %v3355 = vunpack.c.l.b16 %v2720
          %v3356 = vunpack.c.l.b16 %v2721
          %v3357 = vunpack.c.l.b16 %v2722
          %v3358 = vunpack.c.l.b16 %v2723
          %v3359 = vunpack.c.l.b16 %v2724
          %v3360 = vunpack.c.l.b16 %v2725
          %v3361 = vunpack.c.l.b16 %v2726
          %v3362 = vunpack.c.l.b16 %v2727
          %v3363 = vunpack.c.l.b16 %v2728
          %v3364 = vunpack.c.l.b16 %v2729
          %v3365 = vunpack.c.l.b16 %v2730
          %v3366 = vunpack.c.l.b16 %v2731
          %v3367 = vunpack.c.l.b16 %v2732
          %v3368 = vunpack.c.l.b16 %v2733
          %v3369 = vunpack.c.l.b16 %v2734
          %v3370 = vunpack.c.l.b16 %v2735
          %v3371 = vunpack.c.l.b16 %v2736
          %v3372 = vunpack.c.l.b16 %v2737
          %v3373 = vunpack.c.l.b16 %v2738
          %v3374 = vunpack.c.l.b16 %v2739
          %v3375 = vunpack.c.l.b16 %v2740
          %v3376 = vunpack.c.l.b16 %v2741
          %v3377 = vunpack.c.l.b16 %v2742
          %v3378 = vunpack.c.l.b16 %v2743
          %v3379 = vunpack.c.l.b16 %v2744
          %v3380 = vunpack.c.l.b16 %v2745
          %v3381 = vunpack.c.l.b16 %v2746
          %v3382 = vunpack.c.l.b16 %v2747
          %v3383 = vunpack.c.l.b16 %v2748
          %v3384 = vunpack.c.l.b16 %v2749
          %v3385 = vunpack.c.l.b16 %v2750
          %v3386 = vunpack.c.l.b16 %v2751
          %v3387 = vunpack.c.l.b16 %v2752
          %v3388 = vunpack.c.l.b16 %v2753
          %v3389 = vunpack.c.l.b16 %v2754
          %v3390 = vunpack.c.l.b16 %v2755
          %v3391 = vunpack.c.l.b16 %v2756
          %v3392 = vunpack.c.l.b16 %v2757
          %v3393 = vunpack.c.l.b16 %v2758
          %v3394 = vunpack.c.l.b16 %v2759
          %v3395 = vunpack.c.l.b16 %v2760
          %v3396 = vunpack.c.l.b16 %v2761
          %v3397 = vunpack.c.l.b16 %v2762
          %v3398 = vunpack.c.l.b16 %v2763
          %v3399 = vunpack.c.l.b16 %v2764
          %v3400 = vunpack.c.l.b16 %v2765
          %v3401 = vunpack.c.l.b16 %v2766
          %v3402 = vunpack.c.l.b16 %v2767
          %v3403 = vunpack.c.l.b16 %v2768
          %v3404 = vunpack.c.l.b16 %v2769
          %v3405 = vunpack.c.l.b16 %v2770
          %v3406 = vunpack.c.l.b16 %v2771
          %v3407 = vunpack.c.l.b16 %v2772
          %v3408 = vunpack.c.l.b16 %v2773
          %v3409 = vunpack.c.l.b16 %v2774
          %v3410 = vunpack.c.l.b16 %v2775
          %v3411 = vunpack.c.l.b16 %v2776
          %v3412 = vunpack.c.l.b16 %v2777
          %v3413 = vunpack.c.l.b16 %v2778
          %v3414 = vunpack.c.l.b16 %v2779
          %v3415 = vunpack.c.l.b16 %v2780
          %v3416 = vunpack.c.l.b16 %v2781
          %v3417 = vunpack.c.l.b16 %v2782
          %v3418 = vunpack.c.l.b16 %v2783
          %v3419 = vunpack.c.l.b16 %v2784
          %v3420 = vunpack.c.l.b16 %v2785
          %v3421 = vunpack.c.l.b16 %v2786
          %v3422 = vunpack.c.l.b16 %v2787
          %v3423 = vunpack.c.l.b16 %v2788
          %v3424 = vunpack.c.l.b16 %v2789
          %v3425 = vunpack.c.l.b16 %v2790
          %v3426 = vunpack.c.l.b16 %v2791
          %v3427 = vunpack.c.l.b16 %v2792
          %v3428 = vunpack.c.l.b16 %v2793
          %v3429 = vunpack.c.l.b16 %v2794
          %v3430 = vunpack.c.l.b16 %v2795
          %v3431 = vunpack.c.l.b16 %v2796
          %v3432 = vunpack.c.l.b16 %v2797
          %v3433 = vunpack.c.l.b16 %v2798
          %v3434 = vunpack.c.l.b16 %v2799
          %v3435 = vunpack.c.l.b16 %v2800
          %v3436 = vunpack.c.l.b16 %v2801
          %v3437 = vunpack.c.l.b16 %v2802
          %v3438 = vunpack.c.l.b16 %v2803
          %v3439 = vunpack.c.l.b16 %v2804
          %v3440 = vunpack.c.l.b16 %v2805
          %v3441 = vunpack.c.l.b16 %v2806
          %v3442 = vunpack.c.l.b16 %v2807
          %v3443 = vunpack.c.l.b16 %v2808
          %v3444 = vunpack.c.l.b16 %v2809
          %v3445 = vunpack.c.l.b16 %v2810
          %v3446 = vunpack.c.l.b16 %v2811
          %v3447 = vunpack.c.l.b16 %v2812
          %v3448 = vunpack.c.l.b16 %v2813
          %v3449 = vunpack.c.l.b16 %v2814
          %v3450 = vunpack.c.l.b16 %v2815
          %v3451 = vunpack.c.l.b16 %v2816
          %v3452 = vunpack.c.l.b16 %v2817
          %v3453 = vunpack.c.l.b16 %v2818
          %v3454 = vunpack.c.l.b16 %v2819
          %v3455 = vunpack.c.l.b16 %v2820
          %v3456 = vunpack.c.l.b16 %v2821
          %v3457 = vunpack.c.l.b16 %v2822
          %v3458 = vunpack.c.l.b16 %v2823
          %v3459 = vunpack.c.l.b16 %v2824
          %v3460 = vunpack.c.l.b16 %v2825
          %v3461 = vunpack.c.l.b16 %v2826
          %v3462 = vunpack.c.l.b16 %v2827
          %v3463 = vunpack.c.l.b16 %v2828
          %v3464 = vunpack.c.l.b16 %v2829
          %v3465 = vunpack.c.l.b16 %v2830
          %v3466 = vunpack.c.l.b16 %v2831
          %v3467 = vunpack.c.l.b16 %v2832
          %v3468 = vunpack.c.l.b16 %v2833
          %v3469 = vunpack.c.l.b16 %v2834
          %v3470 = vunpack.c.l.b16 %v2835
          %v3471 = vunpack.c.l.b16 %v2836
          %v3472 = vunpack.c.l.b16 %v2837
          %v3473 = vunpack.c.l.b16 %v2838
          %v3474 = vunpack.c.l.b16 %v2839
          %v3475 = vunpack.c.l.b16 %v2840
          %v3476 = vunpack.c.l.b16 %v2841
          %v3477 = vunpack.c.l.b16 %v2842
          %v3478 = vunpack.c.l.b16 %v2843
          %v3479 = vunpack.c.l.b16 %v2844
          %v3480 = vpack.c.b16 %v3225, %v3224
          %v3481 = vpack.c.b16 %v3227, %v3226
          %v3482 = vpack.c.b16 %v3229, %v3228
          %v3483 = vpack.c.b16 %v3231, %v3230
          %v3484 = vpack.c.b16 %v3233, %v3232
          %v3485 = vpack.c.b16 %v3235, %v3234
          %v3486 = vpack.c.b16 %v3237, %v3236
          %v3487 = vpack.c.b16 %v3239, %v3238
          %v3488 = vpack.c.b16 %v3241, %v3240
          %v3489 = vpack.c.b16 %v3243, %v3242
          %v3490 = vpack.c.b16 %v3245, %v3244
          %v3491 = vpack.c.b16 %v3247, %v3246
          %v3492 = vpack.c.b16 %v3249, %v3248
          %v3493 = vpack.c.b16 %v3251, %v3250
          %v3494 = vpack.c.b16 %v3253, %v3252
          %v3495 = vpack.c.b16 %v3255, %v3254
          %v3496 = vpack.c.b16 %v3257, %v3256
          %v3497 = vpack.c.b16 %v3259, %v3258
          %v3498 = vpack.c.b16 %v3261, %v3260
          %v3499 = vpack.c.b16 %v3263, %v3262
          %v3500 = vpack.c.b16 %v3265, %v3264
          %v3501 = vpack.c.b16 %v3267, %v3266
          %v3502 = vpack.c.b16 %v3269, %v3268
          %v3503 = vpack.c.b16 %v3271, %v3270
          %v3504 = vpack.c.b16 %v3273, %v3272
          %v3505 = vpack.c.b16 %v3275, %v3274
          %v3506 = vpack.c.b16 %v3277, %v3276
          %v3507 = vpack.c.b16 %v3279, %v3278
          %v3508 = vpack.c.b16 %v3281, %v3280
          %v3509 = vpack.c.b16 %v3283, %v3282
          %v3510 = vpack.c.b16 %v3285, %v3284
          %v3511 = vpack.c.b16 %v3287, %v3286
          %v3512 = vpack.c.b16 %v3289, %v3288
          %v3513 = vpack.c.b16 %v3291, %v3290
          %v3514 = vpack.c.b16 %v3293, %v3292
          %v3515 = vpack.c.b16 %v3295, %v3294
          %v3516 = vpack.c.b16 %v3297, %v3296
          %v3517 = vpack.c.b16 %v3299, %v3298
          %v3518 = vpack.c.b16 %v3301, %v3300
          %v3519 = vpack.c.b16 %v3303, %v3302
          %v3520 = vpack.c.b16 %v3305, %v3304
          %v3521 = vpack.c.b16 %v3307, %v3306
          %v3522 = vpack.c.b16 %v3309, %v3308
          %v3523 = vpack.c.b16 %v3311, %v3310
          %v3524 = vpack.c.b16 %v3313, %v3312
          %v3525 = vpack.c.b16 %v3315, %v3314
          %v3526 = vpack.c.b16 %v3317, %v3316
          %v3527 = vpack.c.b16 %v3319, %v3318
          %v3528 = vpack.c.b16 %v3321, %v3320
          %v3529 = vpack.c.b16 %v3323, %v3322
          %v3530 = vpack.c.b16 %v3325, %v3324
          %v3531 = vpack.c.b16 %v3327, %v3326
          %v3532 = vpack.c.b16 %v3329, %v3328
          %v3533 = vpack.c.b16 %v3331, %v3330
          %v3534 = vpack.c.b16 %v3333, %v3332
          %v3535 = vpack.c.b16 %v3335, %v3334
          %v3536 = vpack.c.b16 %v3337, %v3336
          %v3537 = vpack.c.b16 %v3339, %v3338
          %v3538 = vpack.c.b16 %v3341, %v3340
          %v3539 = vpack.c.b16 %v3343, %v3342
          %v3540 = vpack.c.b16 %v3345, %v3344
          %v3541 = vpack.c.b16 %v3347, %v3346
          %v3542 = vpack.c.b16 %v3349, %v3348
          %v3543 = vpack.c.b16 %v3351, %v3350
          %v3544 = vpack.c.b16 %v3353, %v3352
          %v3545 = vpack.c.b16 %v3355, %v3354
          %v3546 = vpack.c.b16 %v3357, %v3356
          %v3547 = vpack.c.b16 %v3359, %v3358
          %v3548 = vpack.c.b16 %v3361, %v3360
          %v3549 = vpack.c.b16 %v3363, %v3362
          %v3550 = vpack.c.b16 %v3365, %v3364
          %v3551 = vpack.c.b16 %v3367, %v3366
          %v3552 = vpack.c.b16 %v3369, %v3368
          %v3553 = vpack.c.b16 %v3371, %v3370
          %v3554 = vpack.c.b16 %v3373, %v3372
          %v3555 = vpack.c.b16 %v3375, %v3374
          %v3556 = vpack.c.b16 %v3377, %v3376
          %v3557 = vpack.c.b16 %v3379, %v3378
          %v3558 = vpack.c.b16 %v3381, %v3380
          %v3559 = vpack.c.b16 %v3383, %v3382
          %v3560 = vpack.c.b16 %v3385, %v3384
          %v3561 = vpack.c.b16 %v3387, %v3386
          %v3562 = vpack.c.b16 %v3389, %v3388
          %v3563 = vpack.c.b16 %v3391, %v3390
          %v3564 = vpack.c.b16 %v3393, %v3392
          %v3565 = vpack.c.b16 %v3395, %v3394
          %v3566 = vpack.c.b16 %v3397, %v3396
          %v3567 = vpack.c.b16 %v3399, %v3398
          %v3568 = vpack.c.b16 %v3401, %v3400
          %v3569 = vpack.c.b16 %v3403, %v3402
          %v3570 = vpack.c.b16 %v3405, %v3404
          %v3571 = vpack.c.b16 %v3407, %v3406
          %v3572 = vpack.c.b16 %v3409, %v3408
          %v3573 = vpack.c.b16 %v3411, %v3410
          %v3574 = vpack.c.b16 %v3413, %v3412
          %v3575 = vpack.c.b16 %v3415, %v3414
          %v3576 = vpack.c.b16 %v3417, %v3416
          %v3577 = vpack.c.b16 %v3419, %v3418
          %v3578 = vpack.c.b16 %v3421, %v3420
          %v3579 = vpack.c.b16 %v3423, %v3422
          %v3580 = vpack.c.b16 %v3425, %v3424
          %v3581 = vpack.c.b16 %v3427, %v3426
          %v3582 = vpack.c.b16 %v3429, %v3428
          %v3583 = vpack.c.b16 %v3431, %v3430
          %v3584 = vpack.c.b16 %v3433, %v3432
          %v3585 = vpack.c.b16 %v3435, %v3434
          %v3586 = vpack.c.b16 %v3437, %v3436
          %v3587 = vpack.c.b16 %v3439, %v3438
          %v3588 = vpack.c.b16 %v3441, %v3440
          %v3589 = vpack.c.b16 %v3443, %v3442
          %v3590 = vpack.c.b16 %v3445, %v3444
          %v3591 = vpack.c.b16 %v3447, %v3446
          %v3592 = vpack.c.b16 %v3449, %v3448
          %v3593 = vpack.c.b16 %v3451, %v3450
          %v3594 = vpack.c.b16 %v3453, %v3452
          %v3595 = vpack.c.b16 %v3455, %v3454
          %v3596 = vpack.c.b16 %v3457, %v3456
          %v3597 = vpack.c.b16 %v3459, %v3458
          %v3598 = vpack.c.b16 %v3461, %v3460
          %v3599 = vpack.c.b16 %v3463, %v3462
          %v3600 = vpack.c.b16 %v3465, %v3464
          %v3601 = vpack.c.b16 %v3467, %v3466
          %v3602 = vpack.c.b16 %v3469, %v3468
          %v3603 = vpack.c.b16 %v3471, %v3470
          %v3604 = vpack.c.b16 %v3473, %v3472
          %v3605 = vpack.c.b16 %v3475, %v3474
          %v3606 = vpack.c.b16 %v3477, %v3476
          %v3607 = vpack.c.b16 %v3479, %v3478
          %3736 = vmatprep.subr.bf16.mxu0 0
          %3737 = vmatpush1.bf16.msra.mxu0 %v3480
          %3738 = vmatprep.subr.bf16.mxu0 0
          %3739 = vmatpush1.bf16.msra.mxu0 %v3481
          %3740 = vmatprep.subr.bf16.mxu0 0
          %3741 = vmatpush1.bf16.msra.mxu0 %v3482
          %3742 = vmatprep.subr.bf16.mxu0 0
          %3743 = vmatpush1.bf16.msra.mxu0 %v3483
          %3744 = vmatprep.subr.bf16.mxu0 0
          %3745 = vmatpush1.bf16.msra.mxu0 %v3484
          %3746 = vmatprep.subr.bf16.mxu0 0
          %3747 = vmatpush1.bf16.msra.mxu0 %v3485
          %3748 = vmatprep.subr.bf16.mxu0 0
          %3749 = vmatpush1.bf16.msra.mxu0 %v3486
          %3750 = vmatprep.subr.bf16.mxu0 0
          %3751 = vmatpush1.bf16.msra.mxu0 %v3487
          %3752 = vmatprep.subr.bf16.mxu0 0
          %3753 = vmatpush1.bf16.msra.mxu0 %v3488
          %3754 = vmatprep.subr.bf16.mxu0 0
          %3755 = vmatpush1.bf16.msra.mxu0 %v3489
          %3756 = vmatprep.subr.bf16.mxu0 0
          %3757 = vmatpush1.bf16.msra.mxu0 %v3490
          %3758 = vmatprep.subr.bf16.mxu0 0
          %3759 = vmatpush1.bf16.msra.mxu0 %v3491
          %3760 = vmatprep.subr.bf16.mxu0 0
          %3761 = vmatpush1.bf16.msra.mxu0 %v3492
          %3762 = vmatprep.subr.bf16.mxu0 0
          %3763 = vmatpush1.bf16.msra.mxu0 %v3493
          %3764 = vmatprep.subr.bf16.mxu0 0
          %3765 = vmatpush1.bf16.msra.mxu0 %v3494
          %3766 = vmatprep.subr.bf16.mxu0 0
          %3767 = vmatpush1.bf16.msra.mxu0 %v3495
          %3768 = vmatprep.mubr.bf16.mxu0 %v2891
          %3769 = vmatmul.mubr.bf16.gmra.mrb[0].mxu0 %v2877
          %v3770 = vpop.f32.mrb[0].mxu0
          %v3771 = vadd.f32 %v2850, %v3770
          %v3772 = vpop.f32.mrb[0].mxu0
          %v3773 = vpop.f32.mrb[0].mxu0
          %v3774 = vpop.f32.mrb[0].mxu0
          %3775 = vdwg.mxu0
          %3776 = vmatprep.subr.bf16.mxu0 0
          %3777 = vmatpush1.bf16.msra.mxu0 %v3496
          %3778 = vmatprep.subr.bf16.mxu0 0
          %3779 = vmatpush1.bf16.msra.mxu0 %v3497
          %3780 = vmatprep.subr.bf16.mxu0 0
          %3781 = vmatpush1.bf16.msra.mxu0 %v3498
          %3782 = vmatprep.subr.bf16.mxu0 0
          %3783 = vmatpush1.bf16.msra.mxu0 %v3499
          %3784 = vmatprep.subr.bf16.mxu0 0
          %3785 = vmatpush1.bf16.msra.mxu0 %v3500
          %3786 = vmatprep.subr.bf16.mxu0 0
          %3787 = vmatpush1.bf16.msra.mxu0 %v3501
          %3788 = vmatprep.subr.bf16.mxu0 0
          %3789 = vmatpush1.bf16.msra.mxu0 %v3502
          %3790 = vmatprep.subr.bf16.mxu0 0
          %3791 = vmatpush1.bf16.msra.mxu0 %v3503
          %3792 = vmatprep.subr.bf16.mxu0 0
          %3793 = vmatpush1.bf16.msra.mxu0 %v3504
          %3794 = vmatprep.subr.bf16.mxu0 0
          %3795 = vmatpush1.bf16.msra.mxu0 %v3505
          %3796 = vmatprep.subr.bf16.mxu0 0
          %3797 = vmatpush1.bf16.msra.mxu0 %v3506
          %3798 = vmatprep.subr.bf16.mxu0 0
          %3799 = vmatpush1.bf16.msra.mxu0 %v3507
          %3800 = vmatprep.subr.bf16.mxu0 0
          %3801 = vmatpush1.bf16.msra.mxu0 %v3508
          %3802 = vmatprep.subr.bf16.mxu0 0
          %3803 = vmatpush1.bf16.msra.mxu0 %v3509
          %3804 = vmatprep.subr.bf16.mxu0 0
          %3805 = vmatpush1.bf16.msra.mxu0 %v3510
          %3806 = vmatprep.subr.bf16.mxu0 0
          %3807 = vmatpush1.bf16.msra.mxu0 %v3511
          %3808 = vmatprep.mubr.bf16.mxu0 %v2901
          %3809 = vmatmul.mubr.bf16.gmra.mrb[0].mxu0 %v2899
          %v3810 = vpop.f32.mrb[0].mxu0
          %v3811 = vadd.f32 %v3771, %v3810
          %v3812 = vpop.f32.mrb[0].mxu0
          %v3813 = vpop.f32.mrb[0].mxu0
          %v3814 = vpop.f32.mrb[0].mxu0
          %3815 = vdwg.mxu0
          %3816 = vmatprep.subr.bf16.mxu0 0
          %3817 = vmatpush1.bf16.msra.mxu0 %v3512
          %3818 = vmatprep.subr.bf16.mxu0 0
          %3819 = vmatpush1.bf16.msra.mxu0 %v3513
          %3820 = vmatprep.subr.bf16.mxu0 0
          %3821 = vmatpush1.bf16.msra.mxu0 %v3514
          %3822 = vmatprep.subr.bf16.mxu0 0
          %3823 = vmatpush1.bf16.msra.mxu0 %v3515
          %3824 = vmatprep.subr.bf16.mxu0 0
          %3825 = vmatpush1.bf16.msra.mxu0 %v3516
          %3826 = vmatprep.subr.bf16.mxu0 0
          %3827 = vmatpush1.bf16.msra.mxu0 %v3517
          %3828 = vmatprep.subr.bf16.mxu0 0
          %3829 = vmatpush1.bf16.msra.mxu0 %v3518
          %3830 = vmatprep.subr.bf16.mxu0 0
          %3831 = vmatpush1.bf16.msra.mxu0 %v3519
          %3832 = vmatprep.subr.bf16.mxu0 0
          %3833 = vmatpush1.bf16.msra.mxu0 %v3520
          %3834 = vmatprep.subr.bf16.mxu0 0
          %3835 = vmatpush1.bf16.msra.mxu0 %v3521
          %3836 = vmatprep.subr.bf16.mxu0 0
          %3837 = vmatpush1.bf16.msra.mxu0 %v3522
          %3838 = vmatprep.subr.bf16.mxu0 0
          %3839 = vmatpush1.bf16.msra.mxu0 %v3523
          %3840 = vmatprep.subr.bf16.mxu0 0
          %3841 = vmatpush1.bf16.msra.mxu0 %v3524
          %3842 = vmatprep.subr.bf16.mxu0 0
          %3843 = vmatpush1.bf16.msra.mxu0 %v3525
          %3844 = vmatprep.subr.bf16.mxu0 0
          %3845 = vmatpush1.bf16.msra.mxu0 %v3526
          %3846 = vmatprep.subr.bf16.mxu0 0
          %3847 = vmatpush1.bf16.msra.mxu0 %v3527
          %3848 = vmatprep.mubr.bf16.mxu0 %v2898
          %3849 = vmatmul.mubr.bf16.gmra.mrb[0].mxu0 %v2884
          %v3850 = vpop.f32.mrb[0].mxu0
          %v3851 = vadd.f32 %v3811, %v3850
          %v3852 = vpop.f32.mrb[0].mxu0
          %v3853 = vpop.f32.mrb[0].mxu0
          %v3854 = vpop.f32.mrb[0].mxu0
          %3855 = vdwg.mxu0
          %3856 = vmatprep.subr.bf16.mxu0 0
          %3857 = vmatpush1.bf16.msra.mxu0 %v3528
          %3858 = vmatprep.subr.bf16.mxu0 0
          %3859 = vmatpush1.bf16.msra.mxu0 %v3529
          %3860 = vmatprep.subr.bf16.mxu0 0
          %3861 = vmatpush1.bf16.msra.mxu0 %v3530
          %3862 = vmatprep.subr.bf16.mxu0 0
          %3863 = vmatpush1.bf16.msra.mxu0 %v3531
          %3864 = vmatprep.subr.bf16.mxu0 0
          %3865 = vmatpush1.bf16.msra.mxu0 %v3532
          %3866 = vmatprep.subr.bf16.mxu0 0
          %3867 = vmatpush1.bf16.msra.mxu0 %v3533
          %3868 = vmatprep.subr.bf16.mxu0 0
          %3869 = vmatpush1.bf16.msra.mxu0 %v3534
          %3870 = vmatprep.subr.bf16.mxu0 0
          %3871 = vmatpush1.bf16.msra.mxu0 %v3535
          %3872 = vmatprep.subr.bf16.mxu0 0
          %3873 = vmatpush1.bf16.msra.mxu0 %v3536
          %3874 = vmatprep.subr.bf16.mxu0 0
          %3875 = vmatpush1.bf16.msra.mxu0 %v3537
          %3876 = vmatprep.subr.bf16.mxu0 0
          %3877 = vmatpush1.bf16.msra.mxu0 %v3538
          %3878 = vmatprep.subr.bf16.mxu0 0
          %3879 = vmatpush1.bf16.msra.mxu0 %v3539
          %3880 = vmatprep.subr.bf16.mxu0 0
          %3881 = vmatpush1.bf16.msra.mxu0 %v3540
          %3882 = vmatprep.subr.bf16.mxu0 0
          %3883 = vmatpush1.bf16.msra.mxu0 %v3541
          %3884 = vmatprep.subr.bf16.mxu0 0
          %3885 = vmatpush1.bf16.msra.mxu0 %v3542
          %3886 = vmatprep.subr.bf16.mxu0 0
          %3887 = vmatpush1.bf16.msra.mxu0 %v3543
          %3888 = vmatprep.mubr.bf16.mxu0 %v2902
          %3889 = vmatmul.mubr.bf16.gmra.mrb[0].mxu0 %v2900
          %v3890 = vpop.f32.mrb[0].mxu0
          %v3891 = vadd.f32 %v3851, %v3890
          %v3892 = vpop.f32.mrb[0].mxu0
          %v3893 = vpop.f32.mrb[0].mxu0
          %v3894 = vpop.f32.mrb[0].mxu0
          %3895 = vdwg.mxu0
          %3896 = vmatprep.subr.bf16.mxu0 0
          %3897 = vmatpush1.bf16.msra.mxu0 %v3544
          %3898 = vmatprep.subr.bf16.mxu0 0
          %3899 = vmatpush1.bf16.msra.mxu0 %v3545
          %3900 = vmatprep.subr.bf16.mxu0 0
          %3901 = vmatpush1.bf16.msra.mxu0 %v3546
          %3902 = vmatprep.subr.bf16.mxu0 0
          %3903 = vmatpush1.bf16.msra.mxu0 %v3547
          %3904 = vmatprep.subr.bf16.mxu0 0
          %3905 = vmatpush1.bf16.msra.mxu0 %v3548
          %3906 = vmatprep.subr.bf16.mxu0 0
          %3907 = vmatpush1.bf16.msra.mxu0 %v3549
          %3908 = vmatprep.subr.bf16.mxu0 0
          %3909 = vmatpush1.bf16.msra.mxu0 %v3550
          %3910 = vmatprep.subr.bf16.mxu0 0
          %3911 = vmatpush1.bf16.msra.mxu0 %v3551
          %3912 = vmatprep.subr.bf16.mxu0 0
          %3913 = vmatpush1.bf16.msra.mxu0 %v3552
          %3914 = vmatprep.subr.bf16.mxu0 0
          %3915 = vmatpush1.bf16.msra.mxu0 %v3553
          %3916 = vmatprep.subr.bf16.mxu0 0
          %3917 = vmatpush1.bf16.msra.mxu0 %v3554
          %3918 = vmatprep.subr.bf16.mxu0 0
          %3919 = vmatpush1.bf16.msra.mxu0 %v3555
          %3920 = vmatprep.subr.bf16.mxu0 0
          %3921 = vmatpush1.bf16.msra.mxu0 %v3556
          %3922 = vmatprep.subr.bf16.mxu0 0
          %3923 = vmatpush1.bf16.msra.mxu0 %v3557
          %3924 = vmatprep.subr.bf16.mxu0 0
          %3925 = vmatpush1.bf16.msra.mxu0 %v3558
          %3926 = vmatprep.subr.bf16.mxu0 0
          %3927 = vmatpush1.bf16.msra.mxu0 %v3559
          %3928 = vmatprep.mubr.bf16.mxu0 %v2940
          %3929 = vmatmul.mubr.bf16.gmra.mrb[0].mxu0 %v2926
          %v3930 = vpop.f32.mrb[0].mxu0
          %v3931 = vadd.f32 %v3891, %v3930
          %v3932 = vpop.f32.mrb[0].mxu0
          %v3933 = vpop.f32.mrb[0].mxu0
          %v3934 = vpop.f32.mrb[0].mxu0
          %3935 = vdwg.mxu0
          %3936 = vmatprep.subr.bf16.mxu0 0
          %3937 = vmatpush1.bf16.msra.mxu0 %v3560
          %3938 = vmatprep.subr.bf16.mxu0 0
          %3939 = vmatpush1.bf16.msra.mxu0 %v3561
          %3940 = vmatprep.subr.bf16.mxu0 0
          %3941 = vmatpush1.bf16.msra.mxu0 %v3562
          %3942 = vmatprep.subr.bf16.mxu0 0
          %3943 = vmatpush1.bf16.msra.mxu0 %v3563
          %3944 = vmatprep.subr.bf16.mxu0 0
          %3945 = vmatpush1.bf16.msra.mxu0 %v3564
          %3946 = vmatprep.subr.bf16.mxu0 0
          %3947 = vmatpush1.bf16.msra.mxu0 %v3565
          %3948 = vmatprep.subr.bf16.mxu0 0
          %3949 = vmatpush1.bf16.msra.mxu0 %v3566
          %3950 = vmatprep.subr.bf16.mxu0 0
          %3951 = vmatpush1.bf16.msra.mxu0 %v3567
          %3952 = vmatprep.subr.bf16.mxu0 0
          %3953 = vmatpush1.bf16.msra.mxu0 %v3568
          %3954 = vmatprep.subr.bf16.mxu0 0
          %3955 = vmatpush1.bf16.msra.mxu0 %v3569
          %3956 = vmatprep.subr.bf16.mxu0 0
          %3957 = vmatpush1.bf16.msra.mxu0 %v3570
          %3958 = vmatprep.subr.bf16.mxu0 0
          %3959 = vmatpush1.bf16.msra.mxu0 %v3571
          %3960 = vmatprep.subr.bf16.mxu0 0
          %3961 = vmatpush1.bf16.msra.mxu0 %v3572
          %3962 = vmatprep.subr.bf16.mxu0 0
          %3963 = vmatpush1.bf16.msra.mxu0 %v3573
          %3964 = vmatprep.subr.bf16.mxu0 0
          %3965 = vmatpush1.bf16.msra.mxu0 %v3574
          %3966 = vmatprep.subr.bf16.mxu0 0
          %3967 = vmatpush1.bf16.msra.mxu0 %v3575
          %3968 = vmatprep.mubr.bf16.mxu0 %v2950
          %3969 = vmatmul.mubr.bf16.gmra.mrb[0].mxu0 %v2948
          %v3970 = vpop.f32.mrb[0].mxu0
          %v3971 = vadd.f32 %v3931, %v3970
          %v3972 = vpop.f32.mrb[0].mxu0
          %v3973 = vpop.f32.mrb[0].mxu0
          %v3974 = vpop.f32.mrb[0].mxu0
          %3975 = vdwg.mxu0
          %3976 = vmatprep.subr.bf16.mxu0 0
          %3977 = vmatpush1.bf16.msra.mxu0 %v3576
          %3978 = vmatprep.subr.bf16.mxu0 0
          %3979 = vmatpush1.bf16.msra.mxu0 %v3577
          %3980 = vmatprep.subr.bf16.mxu0 0
          %3981 = vmatpush1.bf16.msra.mxu0 %v3578
          %3982 = vmatprep.subr.bf16.mxu0 0
          %3983 = vmatpush1.bf16.msra.mxu0 %v3579
          %3984 = vmatprep.subr.bf16.mxu0 0
          %3985 = vmatpush1.bf16.msra.mxu0 %v3580
          %3986 = vmatprep.subr.bf16.mxu0 0
          %3987 = vmatpush1.bf16.msra.mxu0 %v3581
          %3988 = vmatprep.subr.bf16.mxu0 0
          %3989 = vmatpush1.bf16.msra.mxu0 %v3582
          %3990 = vmatprep.subr.bf16.mxu0 0
          %3991 = vmatpush1.bf16.msra.mxu0 %v3583
          %3992 = vmatprep.subr.bf16.mxu0 0
          %3993 = vmatpush1.bf16.msra.mxu0 %v3584
          %3994 = vmatprep.subr.bf16.mxu0 0
          %3995 = vmatpush1.bf16.msra.mxu0 %v3585
          %3996 = vmatprep.subr.bf16.mxu0 0
          %3997 = vmatpush1.bf16.msra.mxu0 %v3586
          %3998 = vmatprep.subr.bf16.mxu0 0
          %3999 = vmatpush1.bf16.msra.mxu0 %v3587
          %4000 = vmatprep.subr.bf16.mxu0 0
          %4001 = vmatpush1.bf16.msra.mxu0 %v3588
          %4002 = vmatprep.subr.bf16.mxu0 0
          %4003 = vmatpush1.bf16.msra.mxu0 %v3589
          %4004 = vmatprep.subr.bf16.mxu0 0
          %4005 = vmatpush1.bf16.msra.mxu0 %v3590
          %4006 = vmatprep.subr.bf16.mxu0 0
          %4007 = vmatpush1.bf16.msra.mxu0 %v3591
          %4008 = vmatprep.mubr.bf16.mxu0 %v2947
          %4009 = vmatmul.mubr.bf16.gmra.mrb[0].mxu0 %v2933
          %v4010 = vpop.f32.mrb[0].mxu0
          %v4011 = vadd.f32 %v3971, %v4010
          %v4012 = vpop.f32.mrb[0].mxu0
          %v4013 = vpop.f32.mrb[0].mxu0
          %v4014 = vpop.f32.mrb[0].mxu0
          %4015 = vdwg.mxu0
          %4016 = vmatprep.subr.bf16.mxu0 0
          %4017 = vmatpush1.bf16.msra.mxu0 %v3592
          %4018 = vmatprep.subr.bf16.mxu0 0
          %4019 = vmatpush1.bf16.msra.mxu0 %v3593
          %4020 = vmatprep.subr.bf16.mxu0 0
          %4021 = vmatpush1.bf16.msra.mxu0 %v3594
          %4022 = vmatprep.subr.bf16.mxu0 0
          %4023 = vmatpush1.bf16.msra.mxu0 %v3595
          %4024 = vmatprep.subr.bf16.mxu0 0
          %4025 = vmatpush1.bf16.msra.mxu0 %v3596
          %4026 = vmatprep.subr.bf16.mxu0 0
          %4027 = vmatpush1.bf16.msra.mxu0 %v3597
          %4028 = vmatprep.subr.bf16.mxu0 0
          %4029 = vmatpush1.bf16.msra.mxu0 %v3598
          %4030 = vmatprep.subr.bf16.mxu0 0
          %4031 = vmatpush1.bf16.msra.mxu0 %v3599
          %4032 = vmatprep.subr.bf16.mxu0 0
          %4033 = vmatpush1.bf16.msra.mxu0 %v3600
          %4034 = vmatprep.subr.bf16.mxu0 0
          %4035 = vmatpush1.bf16.msra.mxu0 %v3601
          %4036 = vmatprep.subr.bf16.mxu0 0
          %4037 = vmatpush1.bf16.msra.mxu0 %v3602
          %4038 = vmatprep.subr.bf16.mxu0 0
          %4039 = vmatpush1.bf16.msra.mxu0 %v3603
          %4040 = vmatprep.subr.bf16.mxu0 0
          %4041 = vmatpush1.bf16.msra.mxu0 %v3604
          %4042 = vmatprep.subr.bf16.mxu0 0
          %4043 = vmatpush1.bf16.msra.mxu0 %v3605
          %4044 = vmatprep.subr.bf16.mxu0 0
          %4045 = vmatpush1.bf16.msra.mxu0 %v3606
          %4046 = vmatprep.subr.bf16.mxu0 0
          %4047 = vmatpush1.bf16.msra.mxu0 %v3607
          %4048 = vmatprep.mubr.bf16.mxu0 %v2951
          %4049 = vmatmul.mubr.bf16.gmra.mrb[0].mxu0 %v2949
          %v4050 = vpop.f32.mrb[0].mxu0
          %v4051 = vadd.f32 %v4011, %v4050
          %v4052 = vpop.f32.mrb[0].mxu0
          %v4053 = vpop.f32.mrb[0].mxu0
          %v4054 = vpop.f32.mrb[0].mxu0
          %4055 = vdwg.mxu0
          %v4056 = vld [vmem:[%s1052] sm:$0xf]
          %v4057 = vld [vmem:[%s7] sm:$0xf]
          %v4058 = vld [vmem:[%s7 + $0x4] sm:$0xf]
          %v4059 = vld [vmem:[%s7 + $0x8] sm:$0xf]
          %v4060 = vld [vmem:[%s7 + $0xc] sm:$0xf]
          %v4061 = vld [vmem:[%s7 + $0x10] sm:$0xf]
          %v4062 = vld [vmem:[%s7 + $0x14] sm:$0xf]
          %v4063 = vld [vmem:[%s7 + $0x18] sm:$0xf]
          %v4064 = vld [vmem:[%s7 + $0x1c] sm:$0xf]
          %v4065 = vld [vmem:[%s7 + $0x20] sm:$0xf]
          %v4066 = vld [vmem:[%s7 + $0x24] sm:$0xf]
          %v4067 = vld [vmem:[%s7 + $0x28] sm:$0xf]
          %v4068 = vld [vmem:[%s7 + $0x2c] sm:$0xf]
          %v4069 = vld [vmem:[%s7 + $0x30] sm:$0xf]
          %v4070 = vld [vmem:[%s7 + $0x34] sm:$0xf]
          %v4071 = vld [vmem:[%s7 + $0x38] sm:$0xf]
          %v4072 = vld [vmem:[%s7 + $0x3c] sm:$0xf]
          %v4073 = vld [vmem:[%s7 + $0x40] sm:$0xf]
          %v4074 = vld [vmem:[%s7 + $0x44] sm:$0xf]
          %v4075 = vld [vmem:[%s7 + $0x48] sm:$0xf]
          %v4076 = vld [vmem:[%s7 + $0x4c] sm:$0xf]
          %v4077 = vld [vmem:[%s7 + $0x50] sm:$0xf]
          %v4078 = vld [vmem:[%s7 + $0x54] sm:$0xf]
          %v4079 = vld [vmem:[%s7 + $0x58] sm:$0xf]
          %v4080 = vld [vmem:[%s7 + $0x5c] sm:$0xf]
          %v4081 = vld [vmem:[%s7 + $0x60] sm:$0xf]
          %v4082 = vld [vmem:[%s7 + $0x64] sm:$0xf]
          %v4083 = vld [vmem:[%s7 + $0x68] sm:$0xf]
          %v4084 = vld [vmem:[%s7 + $0x6c] sm:$0xf]
          %v4085 = vld [vmem:[%s7 + $0x70] sm:$0xf]
          %v4086 = vld [vmem:[%s7 + $0x74] sm:$0xf]
          %v4087 = vld [vmem:[%s7 + $0x78] sm:$0xf]
          %v4088 = vld [vmem:[%s7 + $0x7c] sm:$0xf]
          %v4089 = vld [vmem:[%s7 + $0x80] sm:$0xf]
          %v4090 = vld [vmem:[%s7 + $0x84] sm:$0xf]
          %v4091 = vld [vmem:[%s7 + $0x88] sm:$0xf]
          %v4092 = vld [vmem:[%s7 + $0x8c] sm:$0xf]
          %v4093 = vld [vmem:[%s7 + $0x90] sm:$0xf]
          %v4094 = vld [vmem:[%s7 + $0x94] sm:$0xf]
          %v4095 = vld [vmem:[%s7 + $0x98] sm:$0xf]
          %v4096 = vld [vmem:[%s7 + $0x9c] sm:$0xf]
          %v4097 = vld [vmem:[%s7 + $0xa0] sm:$0xf]
          %v4098 = vld [vmem:[%s7 + $0xa4] sm:$0xf]
          %v4099 = vld [vmem:[%s7 + $0xa8] sm:$0xf]
          %v4100 = vld [vmem:[%s7 + $0xac] sm:$0xf]
          %v4101 = vld [vmem:[%s7 + $0xb0] sm:$0xf]
          %v4102 = vld [vmem:[%s7 + $0xb4] sm:$0xf]
          %v4103 = vld [vmem:[%s7 + $0xb8] sm:$0xf]
          %v4104 = vld [vmem:[%s7 + $0xbc] sm:$0xf]
          %v4105 = vld [vmem:[%s7 + $0xc0] sm:$0xf]
          %v4106 = vld [vmem:[%s7 + $0xc4] sm:$0xf]
          %v4107 = vld [vmem:[%s7 + $0xc8] sm:$0xf]
          %v4108 = vld [vmem:[%s7 + $0xcc] sm:$0xf]
          %v4109 = vld [vmem:[%s7 + $0xd0] sm:$0xf]
          %v4110 = vld [vmem:[%s7 + $0xd4] sm:$0xf]
          %v4111 = vld [vmem:[%s7 + $0xd8] sm:$0xf]
          %v4112 = vld [vmem:[%s7 + $0xdc] sm:$0xf]
          %v4113 = vld [vmem:[%s7 + $0xe0] sm:$0xf]
          %v4114 = vld [vmem:[%s7 + $0xe4] sm:$0xf]
          %v4115 = vld [vmem:[%s7 + $0xe8] sm:$0xf]
          %v4116 = vld [vmem:[%s7 + $0xec] sm:$0xf]
          %v4117 = vld [vmem:[%s7 + $0xf0] sm:$0xf]
          %v4118 = vld [vmem:[%s7 + $0xf4] sm:$0xf]
          %v4119 = vld [vmem:[%s7 + $0xf8] sm:$0xf]
          %v4120 = vld [vmem:[%s7 + $0xfc] sm:$0xf]
          %v4121 = vld [vmem:[%s8] sm:$0x1]
          %v4123 = vlaneseq
          %v4124 = vshrl.u32 %v4123, 7
          %v4125 = vsub.s32 0, %v4124
          %v4126 = vrot.slane %v4121, %v4125
          %v4130 = vunpack.c.l.s4 1966171168
          %v4131 = vunpack.c.0.s8 %v4130
          %v4132 = vlaneseq
          %v4133 = vshrl.u32 %v4132, 7
          %v4134 = vsub.s32 %v4131, %v4133
          %v4135 = vrot.slane %v4056, %v4134
          %v4136 = vcombine.high %v4135, %v4135
          %v4138 = vunpack.c.l.s4 1966171168
          %v4139 = vunpack.c.0.s8 %v4138
          %v4140 = vlaneseq
          %v4141 = vshrl.u32 %v4140, 7
          %v4142 = vsub.s32 %v4139, %v4141
          %v4143 = vrot.slane %v4135, %v4142
          %v4145 = vunpack.c.l.s4 1966171168
          %v4146 = vunpack.c.0.s8 %v4145
          %v4147 = vlaneseq
          %v4148 = vshrl.u32 %v4147, 7
          %v4149 = vsub.s32 %v4146, %v4148
          %v4150 = vrot.slane %v4136, %v4149
          %v4151 = vcombine.high %v4143, %v4143
          %v4152 = vcombine.high %v4150, %v4150
          %v4221 = vunpack.c.l.b16 %v4057
          %v4222 = vunpack.c.l.b16 %v4058
          %v4223 = vunpack.c.l.b16 %v4059
          %v4224 = vunpack.c.l.b16 %v4060
          %v4225 = vunpack.c.l.b16 %v4061
          %v4226 = vunpack.c.l.b16 %v4062
          %v4227 = vunpack.c.l.b16 %v4063
          %v4228 = vunpack.c.l.b16 %v4064
          %v4229 = vunpack.c.l.b16 %v4065
          %v4230 = vunpack.c.l.b16 %v4066
          %v4231 = vunpack.c.l.b16 %v4067
          %v4232 = vunpack.c.l.b16 %v4068
          %v4233 = vunpack.c.l.b16 %v4069
          %v4234 = vunpack.c.l.b16 %v4070
          %v4235 = vunpack.c.l.b16 %v4071
          %v4236 = vunpack.c.l.b16 %v4072
          %v4237 = vunpack.c.l.b16 %v4073
          %v4238 = vunpack.c.l.b16 %v4074
          %v4239 = vunpack.c.l.b16 %v4075
          %v4240 = vunpack.c.l.b16 %v4076
          %v4241 = vunpack.c.l.b16 %v4077
          %v4242 = vunpack.c.l.b16 %v4078
          %v4243 = vunpack.c.l.b16 %v4079
          %v4244 = vunpack.c.l.b16 %v4080
          %v4245 = vunpack.c.l.b16 %v4081
          %v4246 = vunpack.c.l.b16 %v4082
          %v4247 = vunpack.c.l.b16 %v4083
          %v4248 = vunpack.c.l.b16 %v4084
          %v4249 = vunpack.c.l.b16 %v4085
          %v4250 = vunpack.c.l.b16 %v4086
          %v4251 = vunpack.c.l.b16 %v4087
          %v4252 = vunpack.c.l.b16 %v4088
          %v4253 = vunpack.c.l.b16 %v4089
          %v4254 = vunpack.c.l.b16 %v4090
          %v4255 = vunpack.c.l.b16 %v4091
          %v4256 = vunpack.c.l.b16 %v4092
          %v4257 = vunpack.c.l.b16 %v4093
          %v4258 = vunpack.c.l.b16 %v4094
          %v4259 = vunpack.c.l.b16 %v4095
          %v4260 = vunpack.c.l.b16 %v4096
          %v4261 = vunpack.c.l.b16 %v4097
          %v4262 = vunpack.c.l.b16 %v4098
          %v4263 = vunpack.c.l.b16 %v4099
          %v4264 = vunpack.c.l.b16 %v4100
          %v4265 = vunpack.c.l.b16 %v4101
          %v4266 = vunpack.c.l.b16 %v4102
          %v4267 = vunpack.c.l.b16 %v4103
          %v4268 = vunpack.c.l.b16 %v4104
          %v4269 = vunpack.c.l.b16 %v4105
          %v4270 = vunpack.c.l.b16 %v4106
          %v4271 = vunpack.c.l.b16 %v4107
          %v4272 = vunpack.c.l.b16 %v4108
          %v4273 = vunpack.c.l.b16 %v4109
          %v4274 = vunpack.c.l.b16 %v4110
          %v4275 = vunpack.c.l.b16 %v4111
          %v4276 = vunpack.c.l.b16 %v4112
          %v4277 = vunpack.c.l.b16 %v4113
          %v4278 = vunpack.c.l.b16 %v4114
          %v4279 = vunpack.c.l.b16 %v4115
          %v4280 = vunpack.c.l.b16 %v4116
          %v4281 = vunpack.c.l.b16 %v4117
          %v4282 = vunpack.c.l.b16 %v4118
          %v4283 = vunpack.c.l.b16 %v4119
          %v4284 = vunpack.c.l.b16 %v4120
          %v4285 = vpack.c.b16 %v4222, %v4221
          %v4286 = vpack.c.b16 %v4224, %v4223
          %v4287 = vpack.c.b16 %v4226, %v4225
          %v4288 = vpack.c.b16 %v4228, %v4227
          %v4289 = vpack.c.b16 %v4230, %v4229
          %v4290 = vpack.c.b16 %v4232, %v4231
          %v4291 = vpack.c.b16 %v4234, %v4233
          %v4292 = vpack.c.b16 %v4236, %v4235
          %v4293 = vpack.c.b16 %v4238, %v4237
          %v4294 = vpack.c.b16 %v4240, %v4239
          %v4295 = vpack.c.b16 %v4242, %v4241
          %v4296 = vpack.c.b16 %v4244, %v4243
          %v4297 = vpack.c.b16 %v4246, %v4245
          %v4298 = vpack.c.b16 %v4248, %v4247
          %v4299 = vpack.c.b16 %v4250, %v4249
          %v4300 = vpack.c.b16 %v4252, %v4251
          %v4301 = vpack.c.b16 %v4254, %v4253
          %v4302 = vpack.c.b16 %v4256, %v4255
          %v4303 = vpack.c.b16 %v4258, %v4257
          %v4304 = vpack.c.b16 %v4260, %v4259
          %v4305 = vpack.c.b16 %v4262, %v4261
          %v4306 = vpack.c.b16 %v4264, %v4263
          %v4307 = vpack.c.b16 %v4266, %v4265
          %v4308 = vpack.c.b16 %v4268, %v4267
          %v4309 = vpack.c.b16 %v4270, %v4269
          %v4310 = vpack.c.b16 %v4272, %v4271
          %v4311 = vpack.c.b16 %v4274, %v4273
          %v4312 = vpack.c.b16 %v4276, %v4275
          %v4313 = vpack.c.b16 %v4278, %v4277
          %v4314 = vpack.c.b16 %v4280, %v4279
          %v4315 = vpack.c.b16 %v4282, %v4281
          %v4316 = vpack.c.b16 %v4284, %v4283
          %4349 = vmatprep.subr.bf16.mxu0 0
          %4350 = vmatpush1.bf16.msra.mxu0 %v4285
          %4351 = vmatprep.subr.bf16.mxu0 0
          %4352 = vmatpush1.bf16.msra.mxu0 %v4286
          %4353 = vmatprep.subr.bf16.mxu0 0
          %4354 = vmatpush1.bf16.msra.mxu0 %v4287
          %4355 = vmatprep.subr.bf16.mxu0 0
          %4356 = vmatpush1.bf16.msra.mxu0 %v4288
          %4357 = vmatprep.subr.bf16.mxu0 0
          %4358 = vmatpush1.bf16.msra.mxu0 %v4289
          %4359 = vmatprep.subr.bf16.mxu0 0
          %4360 = vmatpush1.bf16.msra.mxu0 %v4290
          %4361 = vmatprep.subr.bf16.mxu0 0
          %4362 = vmatpush1.bf16.msra.mxu0 %v4291
          %4363 = vmatprep.subr.bf16.mxu0 0
          %4364 = vmatpush1.bf16.msra.mxu0 %v4292
          %4365 = vmatprep.subr.bf16.mxu0 0
          %4366 = vmatpush1.bf16.msra.mxu0 %v4293
          %4367 = vmatprep.subr.bf16.mxu0 0
          %4368 = vmatpush1.bf16.msra.mxu0 %v4294
          %4369 = vmatprep.subr.bf16.mxu0 0
          %4370 = vmatpush1.bf16.msra.mxu0 %v4295
          %4371 = vmatprep.subr.bf16.mxu0 0
          %4372 = vmatpush1.bf16.msra.mxu0 %v4296
          %4373 = vmatprep.subr.bf16.mxu0 0
          %4374 = vmatpush1.bf16.msra.mxu0 %v4297
          %4375 = vmatprep.subr.bf16.mxu0 0
          %4376 = vmatpush1.bf16.msra.mxu0 %v4298
          %4377 = vmatprep.subr.bf16.mxu0 0
          %4378 = vmatpush1.bf16.msra.mxu0 %v4299
          %4379 = vmatprep.subr.bf16.mxu0 0
          %4380 = vmatpush1.bf16.msra.mxu0 %v4300
          %4381 = vmatprep.mubr.bf16.mxu0 %v4150
          %4382 = vmatmul.mubr.bf16.gmra.mrb[0].mxu0 %v4143
          %v4383 = vpop.f32.mrb[0].mxu0
          %v4384 = vadd.f32 %v4126, %v4383
          %v4385 = vpop.f32.mrb[0].mxu0
          %v4386 = vpop.f32.mrb[0].mxu0
          %v4387 = vpop.f32.mrb[0].mxu0
          %4388 = vdwg.mxu0
          %4389 = vmatprep.subr.bf16.mxu0 0
          %4390 = vmatpush1.bf16.msra.mxu0 %v4301
          %4391 = vmatprep.subr.bf16.mxu0 0
          %4392 = vmatpush1.bf16.msra.mxu0 %v4302
          %4393 = vmatprep.subr.bf16.mxu0 0
          %4394 = vmatpush1.bf16.msra.mxu0 %v4303
          %4395 = vmatprep.subr.bf16.mxu0 0
          %4396 = vmatpush1.bf16.msra.mxu0 %v4304
          %4397 = vmatprep.subr.bf16.mxu0 0
          %4398 = vmatpush1.bf16.msra.mxu0 %v4305
          %4399 = vmatprep.subr.bf16.mxu0 0
          %4400 = vmatpush1.bf16.msra.mxu0 %v4306
          %4401 = vmatprep.subr.bf16.mxu0 0
          %4402 = vmatpush1.bf16.msra.mxu0 %v4307
          %4403 = vmatprep.subr.bf16.mxu0 0
          %4404 = vmatpush1.bf16.msra.mxu0 %v4308
          %4405 = vmatprep.subr.bf16.mxu0 0
          %4406 = vmatpush1.bf16.msra.mxu0 %v4309
          %4407 = vmatprep.subr.bf16.mxu0 0
          %4408 = vmatpush1.bf16.msra.mxu0 %v4310
          %4409 = vmatprep.subr.bf16.mxu0 0
          %4410 = vmatpush1.bf16.msra.mxu0 %v4311
          %4411 = vmatprep.subr.bf16.mxu0 0
          %4412 = vmatpush1.bf16.msra.mxu0 %v4312
          %4413 = vmatprep.subr.bf16.mxu0 0
          %4414 = vmatpush1.bf16.msra.mxu0 %v4313
          %4415 = vmatprep.subr.bf16.mxu0 0
          %4416 = vmatpush1.bf16.msra.mxu0 %v4314
          %4417 = vmatprep.subr.bf16.mxu0 0
          %4418 = vmatpush1.bf16.msra.mxu0 %v4315
          %4419 = vmatprep.subr.bf16.mxu0 0
          %4420 = vmatpush1.bf16.msra.mxu0 %v4316
          %4421 = vmatprep.mubr.bf16.mxu0 %v4152
          %4422 = vmatmul.mubr.bf16.gmra.mrb[0].mxu0 %v4151
          %v4423 = vpop.f32.mrb[0].mxu0
          %v4424 = vadd.f32 %v4384, %v4423
          %v4425 = vpop.f32.mrb[0].mxu0
          %v4426 = vpop.f32.mrb[0].mxu0
          %v4427 = vpop.f32.mrb[0].mxu0
          %4428 = vdwg.mxu0
          %v4430 = vrot.slane %v4051, 6
          %v4433 = vrot.slane %v4424, 4
          %vm4435 = vcmask 1041408
          %v4436 = vsel %vm4435, %v2582, %v4430
          %vm4437 = vcmask 1043456
          %v4438 = vsel %vm4437, %v4436, %v4433
          %vm4439 = vcmask 259072
          %4440 = vst.msk [vmem:[#allocation2] sm:$0x3f] %vm4439, %v4438
        $region132: #{tpu_custom_call.1} parent=127 // pred_fallthru
          _
        %v4441 = vld [vmem:[#allocation2] sm:$0x3f]
        %v4442 = vpack.c.bf16 %v4441, %v4441
        %v4443 = vlaneseq
        %v4444 = vshrl.u32 %v4443, 7
        %vm4445 = vcmp.lt.s32.totalorder %v4444, 0
        %v4446 = vsub.s32 0, %v4444
        %v4447 = vsel %vm4445, %v4446, %v4444
        %v4448 = vshrl.u32 %v4447, 1
        %v4449 = vand.u32 %v4447, 1
        %v4450 = vsub.s32 0, %v4449
        %v4451 = vsel %vm4445, %v4450, %v4449
        %vm4452 = vcmp.ne.s32.totalorder %v4451, 0
        %vm4453 = vcmp.lt.s32.totalorder %v4451, 0
        %vm4454 = vmand %vm4453, %vm4452
        %v4455 = vadd.s32 %v4451, 2
        %v4456 = vsel %vm4454, %v4455, %v4451
        %v4457 = vlaneseq
        %v4458 = vand.u32 %v4457, 127
        %vm4459 = vcmp.lt.s32.totalorder %v4458, 0
        %v4460 = vsub.s32 0, %v4458
        %v4461 = vsel %vm4459, %v4460, %v4458
        %v4462 = vshrl.u32 %v4461, 1
        %v4463 = vand.u32 %v4461, 1
        %v4464 = vsub.s32 0, %v4463
        %v4465 = vsel %vm4459, %v4464, %v4463
        %vm4466 = vcmp.ne.s32.totalorder %v4465, 0
        %vm4467 = vcmp.lt.s32.totalorder %v4465, 0
        %vm4468 = vmand %vm4467, %vm4466
        %v4469 = vadd.s32 %v4465, 2
        %v4470 = vsel %vm4468, %v4469, %v4465
        %vm4471 = vcmp.eq.s32.totalorder %v4456, %v4470
        %v4472 = vsel %vm4471, 0.0, -1e+30
        %v4473 = vld [vmem:[%s1057] sm:$0xf]
        %v4474 = vld [vmem:[%s1057 + $0x4] sm:$0xf]
        %v4475 = vld [vmem:[%s1057 + $0x8] sm:$0xf]
        %v4476 = vld [vmem:[%s1057 + $0xc] sm:$0xf]
        %v4477 = vld [vmem:[%s1070] sm:$0x1]
        %v4479 = vlaneseq
        %v4480 = vshrl.u32 %v4479, 7
        %v4481 = vsub.s32 0, %v4480
        %v4482 = vrot.slane %v4477, %v4481
        %v4488 = vunpack.c.l.b16 %v4473
        %v4489 = vunpack.c.l.b16 %v4474
        %v4490 = vunpack.c.l.b16 %v4475
        %v4491 = vunpack.c.l.b16 %v4476
        %v4492 = vpack.c.b16 %v4489, %v4488
        %v4493 = vpack.c.b16 %v4491, %v4490
        %vm4496 = vcmask 261120
        %v4498 = vsel %vm4496, %v4442, 0
        %4500 = vmatprep.subr.bf16.mxu0 0
        %4501 = vmatpush1.bf16.msra.mxu0 %v4492
        %4502 = vmatprep.subr.bf16.mxu0 0
        %4503 = vmatpush1.bf16.msra.mxu0 %v4493
        %4504 = vmatprep.subr.bf16.mxu0 0
        %4505 = vmatpush1.bf16.msra.mxu0 0
        %4506 = vmatprep.subr.bf16.mxu0 0
        %4507 = vmatpush1.bf16.msra.mxu0 0
        %4508 = vmatprep.subr.bf16.mxu0 0
        %4509 = vmatpush1.bf16.msra.mxu0 0
        %4510 = vmatprep.subr.bf16.mxu0 0
        %4511 = vmatpush1.bf16.msra.mxu0 0
        %4512 = vmatprep.subr.bf16.mxu0 0
        %4513 = vmatpush1.bf16.msra.mxu0 0
        %4514 = vmatprep.subr.bf16.mxu0 0
        %4515 = vmatpush1.bf16.msra.mxu0 0
        %4516 = vmatprep.subr.bf16.mxu0 0
        %4517 = vmatpush1.bf16.msra.mxu0 0
        %4518 = vmatprep.subr.bf16.mxu0 0
        %4519 = vmatpush1.bf16.msra.mxu0 0
        %4520 = vmatprep.subr.bf16.mxu0 0
        %4521 = vmatpush1.bf16.msra.mxu0 0
        %4522 = vmatprep.subr.bf16.mxu0 0
        %4523 = vmatpush1.bf16.msra.mxu0 0
        %4524 = vmatprep.subr.bf16.mxu0 0
        %4525 = vmatpush1.bf16.msra.mxu0 0
        %4526 = vmatprep.subr.bf16.mxu0 0
        %4527 = vmatpush1.bf16.msra.mxu0 0
        %4528 = vmatprep.subr.bf16.mxu0 0
        %4529 = vmatpush1.bf16.msra.mxu0 0
        %4530 = vmatprep.subr.bf16.mxu0 0
        %4531 = vmatpush1.bf16.msra.mxu0 0
        %4532 = vmatprep.mubr.bf16.mxu0 0
        %4533 = vmatmul.mubr.bf16.gmra.mrb[0].mxu0 %v4498
        %v4534 = vpop.f32.mrb[0].mxu0
        %v4535 = vadd.f32 %v4482, %v4534
        %v4536 = vpop.f32.mrb[0].mxu0
        %v4537 = vpop.f32.mrb[0].mxu0
        %v4538 = vpop.f32.mrb[0].mxu0
        %4539 = vdwg.mxu0
        %v4540 = vld [vmem:[%s1062] sm:$0xf]
        %v4541 = vld [vmem:[%s1062 + $0x4] sm:$0xf]
        %v4542 = vld [vmem:[%s1062 + $0x8] sm:$0xf]
        %v4543 = vld [vmem:[%s1062 + $0xc] sm:$0xf]
        %v4544 = vld [vmem:[%s1073] sm:$0x1]
        %v4546 = vlaneseq
        %v4547 = vshrl.u32 %v4546, 7
        %v4548 = vsub.s32 0, %v4547
        %v4549 = vrot.slane %v4544, %v4548
        %v4555 = vunpack.c.l.b16 %v4540
        %v4556 = vunpack.c.l.b16 %v4541
        %v4557 = vunpack.c.l.b16 %v4542
        %v4558 = vunpack.c.l.b16 %v4543
        %v4559 = vpack.c.b16 %v4556, %v4555
        %v4560 = vpack.c.b16 %v4558, %v4557
        %4563 = vmatprep.subr.bf16.mxu0 0
        %4564 = vmatpush1.bf16.msra.mxu0 %v4559
        %4565 = vmatprep.subr.bf16.mxu0 0
        %4566 = vmatpush1.bf16.msra.mxu0 %v4560
        %4567 = vmatprep.subr.bf16.mxu0 0
        %4568 = vmatpush1.bf16.msra.mxu0 0
        %4569 = vmatprep.subr.bf16.mxu0 0
        %4570 = vmatpush1.bf16.msra.mxu0 0
        %4571 = vmatprep.subr.bf16.mxu0 0
        %4572 = vmatpush1.bf16.msra.mxu0 0
        %4573 = vmatprep.subr.bf16.mxu0 0
        %4574 = vmatpush1.bf16.msra.mxu0 0
        %4575 = vmatprep.subr.bf16.mxu0 0
        %4576 = vmatpush1.bf16.msra.mxu0 0
        %4577 = vmatprep.subr.bf16.mxu0 0
        %4578 = vmatpush1.bf16.msra.mxu0 0
        %4579 = vmatprep.subr.bf16.mxu0 0
        %4580 = vmatpush1.bf16.msra.mxu0 0
        %4581 = vmatprep.subr.bf16.mxu0 0
        %4582 = vmatpush1.bf16.msra.mxu0 0
        %4583 = vmatprep.subr.bf16.mxu0 0
        %4584 = vmatpush1.bf16.msra.mxu0 0
        %4585 = vmatprep.subr.bf16.mxu0 0
        %4586 = vmatpush1.bf16.msra.mxu0 0
        %4587 = vmatprep.subr.bf16.mxu0 0
        %4588 = vmatpush1.bf16.msra.mxu0 0
        %4589 = vmatprep.subr.bf16.mxu0 0
        %4590 = vmatpush1.bf16.msra.mxu0 0
        %4591 = vmatprep.subr.bf16.mxu0 0
        %4592 = vmatpush1.bf16.msra.mxu0 0
        %4593 = vmatprep.subr.bf16.mxu0 0
        %4594 = vmatpush1.bf16.msra.mxu0 0
        %4595 = vmatprep.mubr.bf16.mxu0 0
        %4596 = vmatmul.mubr.bf16.gmra.mrb[0].mxu0 %v4498
        %v4597 = vpop.f32.mrb[0].mxu0
        %v4598 = vadd.f32 %v4549, %v4597
        %v4599 = vpop.f32.mrb[0].mxu0
        %v4600 = vpop.f32.mrb[0].mxu0
        %v4601 = vpop.f32.mrb[0].mxu0
        %4602 = vdwg.mxu0
        %v4603 = vld [vmem:[%s1067] sm:$0xf]
        %v4604 = vld [vmem:[%s1067 + $0x4] sm:$0xf]
        %v4605 = vld [vmem:[%s1067 + $0x8] sm:$0xf]
        %v4606 = vld [vmem:[%s1067 + $0xc] sm:$0xf]
        %v4607 = vld [vmem:[%s1076] sm:$0x1]
        %v4609 = vlaneseq
        %v4610 = vshrl.u32 %v4609, 7
        %v4611 = vsub.s32 0, %v4610
        %v4612 = vrot.slane %v4607, %v4611
        %v4618 = vunpack.c.l.b16 %v4603
        %v4619 = vunpack.c.l.b16 %v4604
        %v4620 = vunpack.c.l.b16 %v4605
        %v4621 = vunpack.c.l.b16 %v4606
        %v4622 = vpack.c.b16 %v4619, %v4618
        %v4623 = vpack.c.b16 %v4621, %v4620
        %4626 = vmatprep.subr.bf16.mxu0 0
        %4627 = vmatpush1.bf16.msra.mxu0 %v4622
        %4628 = vmatprep.subr.bf16.mxu0 0
        %4629 = vmatpush1.bf16.msra.mxu0 %v4623
        %4630 = vmatprep.subr.bf16.mxu0 0
        %4631 = vmatpush1.bf16.msra.mxu0 0
        %4632 = vmatprep.subr.bf16.mxu0 0
        %4633 = vmatpush1.bf16.msra.mxu0 0
        %4634 = vmatprep.subr.bf16.mxu0 0
        %4635 = vmatpush1.bf16.msra.mxu0 0
        %4636 = vmatprep.subr.bf16.mxu0 0
        %4637 = vmatpush1.bf16.msra.mxu0 0
        %4638 = vmatprep.subr.bf16.mxu0 0
        %4639 = vmatpush1.bf16.msra.mxu0 0
        %4640 = vmatprep.subr.bf16.mxu0 0
        %4641 = vmatpush1.bf16.msra.mxu0 0
        %4642 = vmatprep.subr.bf16.mxu0 0
        %4643 = vmatpush1.bf16.msra.mxu0 0
        %4644 = vmatprep.subr.bf16.mxu0 0
        %4645 = vmatpush1.bf16.msra.mxu0 0
        %4646 = vmatprep.subr.bf16.mxu0 0
        %4647 = vmatpush1.bf16.msra.mxu0 0
        %4648 = vmatprep.subr.bf16.mxu0 0
        %4649 = vmatpush1.bf16.msra.mxu0 0
        %4650 = vmatprep.subr.bf16.mxu0 0
        %4651 = vmatpush1.bf16.msra.mxu0 0
        %4652 = vmatprep.subr.bf16.mxu0 0
        %4653 = vmatpush1.bf16.msra.mxu0 0
        %4654 = vmatprep.subr.bf16.mxu0 0
        %4655 = vmatpush1.bf16.msra.mxu0 0
        %4656 = vmatprep.subr.bf16.mxu0 0
        %4657 = vmatpush1.bf16.msra.mxu0 0
        %4658 = vmatprep.mubr.bf16.mxu0 0
        %4659 = vmatmul.mubr.bf16.gmra.mrb[0].mxu0 %v4498
        %v4660 = vpop.f32.mrb[0].mxu0
        %v4661 = vadd.f32 %v4612, %v4660
        %v4662 = vpop.f32.mrb[0].mxu0
        %v4663 = vpop.f32.mrb[0].mxu0
        %v4664 = vpop.f32.mrb[0].mxu0
        %4665 = vdwg.mxu0
        %v4666 = vpack.c.bf16 %v4535, %v4535
        %v4667 = vpack.c.bf16 %v4598, %v4598
        %v4668 = vpack.c.bf16 %v4661, %v4661
        %vm4669 = vcmask 64512
        %v4671 = vsel %vm4669, %v4666, 0
        %v4674 = vsel %vm4669, %v4667, 0
        %4676 = vmatprep.subr.bf16.mxu0 0
        %4677 = vmatpush1.bf16.xpose.msra.mxu0 %v4674
        %4678 = vmatprep.subr.bf16.mxu0 0
        %4679 = vmatpush1.bf16.xpose.msra.mxu0 0
        %4680 = vmatprep.subr.bf16.mxu0 0
        %4681 = vmatpush1.bf16.xpose.msra.mxu0 0
        %4682 = vmatprep.subr.bf16.mxu0 0
        %4683 = vmatpush1.bf16.xpose.msra.mxu0 0
        %4684 = vmatprep.subr.bf16.mxu0 0
        %4685 = vmatpush1.bf16.xpose.msra.mxu0 0
        %4686 = vmatprep.subr.bf16.mxu0 0
        %4687 = vmatpush1.bf16.xpose.msra.mxu0 0
        %4688 = vmatprep.subr.bf16.mxu0 0
        %4689 = vmatpush1.bf16.xpose.msra.mxu0 0
        %4690 = vmatprep.subr.bf16.mxu0 0
        %4691 = vmatpush1.bf16.xpose.msra.mxu0 0
        %4692 = vmatprep.subr.bf16.mxu0 0
        %4693 = vmatpush1.bf16.xpose.msra.mxu0 0
        %4694 = vmatprep.subr.bf16.mxu0 0
        %4695 = vmatpush1.bf16.xpose.msra.mxu0 0
        %4696 = vmatprep.subr.bf16.mxu0 0
        %4697 = vmatpush1.bf16.xpose.msra.mxu0 0
        %4698 = vmatprep.subr.bf16.mxu0 0
        %4699 = vmatpush1.bf16.xpose.msra.mxu0 0
        %4700 = vmatprep.subr.bf16.mxu0 0
        %4701 = vmatpush1.bf16.xpose.msra.mxu0 0
        %4702 = vmatprep.subr.bf16.mxu0 0
        %4703 = vmatpush1.bf16.xpose.msra.mxu0 0
        %4704 = vmatprep.subr.bf16.mxu0 0
        %4705 = vmatpush1.bf16.xpose.msra.mxu0 0
        %4706 = vmatprep.subr.bf16.mxu0 0
        %4707 = vmatpush1.bf16.xpose.msra.mxu0 0
        %4708 = vmatprep.mubr.bf16.mxu0 0
        %4709 = vmatmul.mubr.bf16.gmra.mrb[0].mxu0 %v4671
        %v4710 = vpop.f32.mrb[0].mxu0
        %v4711 = vadd.f32 %v4472, %v4710
        %v4712 = vpop.f32.mrb[0].mxu0
        %v4713 = vpop.f32.mrb[0].mxu0
        %v4714 = vpop.f32.mrb[0].mxu0
        %4715 = vdwg.mxu0
        %vm4716 = vcmask 46080
        %v4717 = vsel %vm4716, %v4711, -inf
        %4718 = vmax.xlane.f32.xlu0 %v4717
        %v4719 = vpop.xlane.xlu0 %4718
        %v4720 = vsub.f32 %v4711, %v4719
        %v4721 = vmul.f32 %v4720, 1.442695
        %v4722 = vpow.pop %v4721
        %v4723 = vsel %vm4716, %v4722, 0.0
        %4724 = vadd.xlane.f32.xlu0 %v4723
        %v4725 = vpop.xlane.xlu0 %4724
        %v4726 = vrcp.pop %v4725
        %v4727 = vmul.f32 %v4722, %v4726
        %v4728 = vpack.c.bf16 %v4727, %v4727
        %vm4729 = vcmask 48128
        %v4731 = vsel %vm4729, %v4728, 0
        %vm4733 = vcmask 1042432
        %v4735 = vsel %vm4733, %v4668, 0
        %4737 = vmatprep.subr.bf16.mxu0 0
        %4738 = vmatpush1.bf16.msra.mxu0 %v4735
        %4739 = vmatprep.subr.bf16.mxu0 0
        %4740 = vmatpush1.bf16.msra.mxu0 0
        %4741 = vmatprep.subr.bf16.mxu0 0
        %4742 = vmatpush1.bf16.msra.mxu0 0
        %4743 = vmatprep.subr.bf16.mxu0 0
        %4744 = vmatpush1.bf16.msra.mxu0 0
        %4745 = vmatprep.subr.bf16.mxu0 0
        %4746 = vmatpush1.bf16.msra.mxu0 0
        %4747 = vmatprep.subr.bf16.mxu0 0
        %4748 = vmatpush1.bf16.msra.mxu0 0
        %4749 = vmatprep.subr.bf16.mxu0 0
        %4750 = vmatpush1.bf16.msra.mxu0 0
        %4751 = vmatprep.subr.bf16.mxu0 0
        %4752 = vmatpush1.bf16.msra.mxu0 0
        %4753 = vmatprep.subr.bf16.mxu0 0
        %4754 = vmatpush1.bf16.msra.mxu0 0
        %4755 = vmatprep.subr.bf16.mxu0 0
        %4756 = vmatpush1.bf16.msra.mxu0 0
        %4757 = vmatprep.subr.bf16.mxu0 0
        %4758 = vmatpush1.bf16.msra.mxu0 0
        %4759 = vmatprep.subr.bf16.mxu0 0
        %4760 = vmatpush1.bf16.msra.mxu0 0
        %4761 = vmatprep.subr.bf16.mxu0 0
        %4762 = vmatpush1.bf16.msra.mxu0 0
        %4763 = vmatprep.subr.bf16.mxu0 0
        %4764 = vmatpush1.bf16.msra.mxu0 0
        %4765 = vmatprep.subr.bf16.mxu0 0
        %4766 = vmatpush1.bf16.msra.mxu0 0
        %4767 = vmatprep.subr.bf16.mxu0 0
        %4768 = vmatpush1.bf16.msra.mxu0 0
        %4769 = vmatprep.mubr.bf16.mxu0 0
        %4770 = vmatmul.mubr.bf16.gmra.mrb[0].mxu0 %v4731
        %v4771 = vpop.f32.mrb[0].mxu0
        %v4772 = vadd.f32 0.0, %v4771
        %v4773 = vpop.f32.mrb[0].mxu0
        %v4774 = vpop.f32.mrb[0].mxu0
        %v4775 = vpop.f32.mrb[0].mxu0
        %4776 = vdwg.mxu0
        %4778 = vrot.lane.b32.xlu0 %v4666, 120
        %v4779 = vpop.permute.xlu0 %4778
        %4781 = vrot.lane.b32.xlu0 %v4667, 120
        %v4782 = vpop.permute.xlu0 %4781
        %v4784 = vsel %vm4669, %v4779, 0
        %v4787 = vsel %vm4669, %v4782, 0
        %4789 = vmatprep.subr.bf16.mxu0 0
        %4790 = vmatpush1.bf16.xpose.msra.mxu0 %v4787
        %4791 = vmatprep.subr.bf16.mxu0 0
        %4792 = vmatpush1.bf16.xpose.msra.mxu0 0
        %4793 = vmatprep.subr.bf16.mxu0 0
        %4794 = vmatpush1.bf16.xpose.msra.mxu0 0
        %4795 = vmatprep.subr.bf16.mxu0 0
        %4796 = vmatpush1.bf16.xpose.msra.mxu0 0
        %4797 = vmatprep.subr.bf16.mxu0 0
        %4798 = vmatpush1.bf16.xpose.msra.mxu0 0
        %4799 = vmatprep.subr.bf16.mxu0 0
        %4800 = vmatpush1.bf16.xpose.msra.mxu0 0
        %4801 = vmatprep.subr.bf16.mxu0 0
        %4802 = vmatpush1.bf16.xpose.msra.mxu0 0
        %4803 = vmatprep.subr.bf16.mxu0 0
        %4804 = vmatpush1.bf16.xpose.msra.mxu0 0
        %4805 = vmatprep.subr.bf16.mxu0 0
        %4806 = vmatpush1.bf16.xpose.msra.mxu0 0
        %4807 = vmatprep.subr.bf16.mxu0 0
        %4808 = vmatpush1.bf16.xpose.msra.mxu0 0
        %4809 = vmatprep.subr.bf16.mxu0 0
        %4810 = vmatpush1.bf16.xpose.msra.mxu0 0
        %4811 = vmatprep.subr.bf16.mxu0 0
        %4812 = vmatpush1.bf16.xpose.msra.mxu0 0
        %4813 = vmatprep.subr.bf16.mxu0 0
        %4814 = vmatpush1.bf16.xpose.msra.mxu0 0
        %4815 = vmatprep.subr.bf16.mxu0 0
        %4816 = vmatpush1.bf16.xpose.msra.mxu0 0
        %4817 = vmatprep.subr.bf16.mxu0 0
        %4818 = vmatpush1.bf16.xpose.msra.mxu0 0
        %4819 = vmatprep.subr.bf16.mxu0 0
        %4820 = vmatpush1.bf16.xpose.msra.mxu0 0
        %4821 = vmatprep.mubr.bf16.mxu0 0
        %4822 = vmatmul.mubr.bf16.gmra.mrb[0].mxu0 %v4784
        %v4823 = vpop.f32.mrb[0].mxu0
        %v4824 = vadd.f32 %v4472, %v4823
        %v4825 = vpop.f32.mrb[0].mxu0
        %v4826 = vpop.f32.mrb[0].mxu0
        %v4827 = vpop.f32.mrb[0].mxu0
        %4828 = vdwg.mxu0
        %v4829 = vsel %vm4716, %v4824, -inf
        %4830 = vmax.xlane.f32.xlu0 %v4829
        %v4831 = vpop.xlane.xlu0 %4830
        %v4832 = vsub.f32 %v4824, %v4831
        %v4833 = vmul.f32 %v4832, 1.442695
        %v4834 = vpow.pop %v4833
        %v4835 = vsel %vm4716, %v4834, 0.0
        %4836 = vadd.xlane.f32.xlu0 %v4835
        %v4837 = vpop.xlane.xlu0 %4836
        %v4838 = vrcp.pop %v4837
        %v4839 = vmul.f32 %v4834, %v4838
        %v4840 = vpack.c.bf16 %v4839, %v4839
        %4842 = vrot.lane.b32.xlu0 %v4668, 120
        %v4843 = vpop.permute.xlu0 %4842
        %v4845 = vsel %vm4729, %v4840, 0
        %v4848 = vsel %vm4733, %v4843, 0
        %4850 = vmatprep.subr.bf16.mxu0 0
        %4851 = vmatpush1.bf16.msra.mxu0 %v4848
        %4852 = vmatprep.subr.bf16.mxu0 0
        %4853 = vmatpush1.bf16.msra.mxu0 0
        %4854 = vmatprep.subr.bf16.mxu0 0
        %4855 = vmatpush1.bf16.msra.mxu0 0
        %4856 = vmatprep.subr.bf16.mxu0 0
        %4857 = vmatpush1.bf16.msra.mxu0 0
        %4858 = vmatprep.subr.bf16.mxu0 0
        %4859 = vmatpush1.bf16.msra.mxu0 0
        %4860 = vmatprep.subr.bf16.mxu0 0
        %4861 = vmatpush1.bf16.msra.mxu0 0
        %4862 = vmatprep.subr.bf16.mxu0 0
        %4863 = vmatpush1.bf16.msra.mxu0 0
        %4864 = vmatprep.subr.bf16.mxu0 0
        %4865 = vmatpush1.bf16.msra.mxu0 0
        %4866 = vmatprep.subr.bf16.mxu0 0
        %4867 = vmatpush1.bf16.msra.mxu0 0
        %4868 = vmatprep.subr.bf16.mxu0 0
        %4869 = vmatpush1.bf16.msra.mxu0 0
        %4870 = vmatprep.subr.bf16.mxu0 0
        %4871 = vmatpush1.bf16.msra.mxu0 0
        %4872 = vmatprep.subr.bf16.mxu0 0
        %4873 = vmatpush1.bf16.msra.mxu0 0
        %4874 = vmatprep.subr.bf16.mxu0 0
        %4875 = vmatpush1.bf16.msra.mxu0 0
        %4876 = vmatprep.subr.bf16.mxu0 0
        %4877 = vmatpush1.bf16.msra.mxu0 0
        %4878 = vmatprep.subr.bf16.mxu0 0
        %4879 = vmatpush1.bf16.msra.mxu0 0
        %4880 = vmatprep.subr.bf16.mxu0 0
        %4881 = vmatpush1.bf16.msra.mxu0 0
        %4882 = vmatprep.mubr.bf16.mxu0 0
        %4883 = vmatmul.mubr.bf16.gmra.mrb[0].mxu0 %v4845
        %v4884 = vpop.f32.mrb[0].mxu0
        %v4885 = vadd.f32 0.0, %v4884
        %v4886 = vpop.f32.mrb[0].mxu0
        %v4887 = vpop.f32.mrb[0].mxu0
        %v4888 = vpop.f32.mrb[0].mxu0
        %4889 = vdwg.mxu0
        %4890 = vrot.lane.b32.xlu0 %v4666, 112
        %v4891 = vpop.permute.xlu0 %4890
        %4892 = vrot.lane.b32.xlu0 %v4667, 112
        %v4893 = vpop.permute.xlu0 %4892
        %v4895 = vsel %vm4669, %v4891, 0
        %v4898 = vsel %vm4669, %v4893, 0
        %4900 = vmatprep.subr.bf16.mxu0 0
        %4901 = vmatpush1.bf16.xpose.msra.mxu0 %v4898
        %4902 = vmatprep.subr.bf16.mxu0 0
        %4903 = vmatpush1.bf16.xpose.msra.mxu0 0
        %4904 = vmatprep.subr.bf16.mxu0 0
        %4905 = vmatpush1.bf16.xpose.msra.mxu0 0
        %4906 = vmatprep.subr.bf16.mxu0 0
        %4907 = vmatpush1.bf16.xpose.msra.mxu0 0
        %4908 = vmatprep.subr.bf16.mxu0 0
        %4909 = vmatpush1.bf16.xpose.msra.mxu0 0
        %4910 = vmatprep.subr.bf16.mxu0 0
        %4911 = vmatpush1.bf16.xpose.msra.mxu0 0
        %4912 = vmatprep.subr.bf16.mxu0 0
        %4913 = vmatpush1.bf16.xpose.msra.mxu0 0
        %4914 = vmatprep.subr.bf16.mxu0 0
        %4915 = vmatpush1.bf16.xpose.msra.mxu0 0
        %4916 = vmatprep.subr.bf16.mxu0 0
        %4917 = vmatpush1.bf16.xpose.msra.mxu0 0
        %4918 = vmatprep.subr.bf16.mxu0 0
        %4919 = vmatpush1.bf16.xpose.msra.mxu0 0
        %4920 = vmatprep.subr.bf16.mxu0 0
        %4921 = vmatpush1.bf16.xpose.msra.mxu0 0
        %4922 = vmatprep.subr.bf16.mxu0 0
        %4923 = vmatpush1.bf16.xpose.msra.mxu0 0
        %4924 = vmatprep.subr.bf16.mxu0 0
        %4925 = vmatpush1.bf16.xpose.msra.mxu0 0
        %4926 = vmatprep.subr.bf16.mxu0 0
        %4927 = vmatpush1.bf16.xpose.msra.mxu0 0
        %4928 = vmatprep.subr.bf16.mxu0 0
        %4929 = vmatpush1.bf16.xpose.msra.mxu0 0
        %4930 = vmatprep.subr.bf16.mxu0 0
        %4931 = vmatpush1.bf16.xpose.msra.mxu0 0
        %4932 = vmatprep.mubr.bf16.mxu0 0
        %4933 = vmatmul.mubr.bf16.gmra.mrb[0].mxu0 %v4895
        %v4934 = vpop.f32.mrb[0].mxu0
        %v4935 = vadd.f32 %v4472, %v4934
        %v4936 = vpop.f32.mrb[0].mxu0
        %v4937 = vpop.f32.mrb[0].mxu0
        %v4938 = vpop.f32.mrb[0].mxu0
        %4939 = vdwg.mxu0
        %v4940 = vsel %vm4716, %v4935, -inf
        %4941 = vmax.xlane.f32.xlu0 %v4940
        %v4942 = vpop.xlane.xlu0 %4941
        %v4943 = vsub.f32 %v4935, %v4942
        %v4944 = vmul.f32 %v4943, 1.442695
        %v4945 = vpow.pop %v4944
        %v4946 = vsel %vm4716, %v4945, 0.0
        %4947 = vadd.xlane.f32.xlu0 %v4946
        %v4948 = vpop.xlane.xlu0 %4947
        %v4949 = vrcp.pop %v4948
        %v4950 = vmul.f32 %v4945, %v4949
        %v4951 = vpack.c.bf16 %v4950, %v4950
        %4952 = vrot.lane.b32.xlu0 %v4668, 112
        %v4953 = vpop.permute.xlu0 %4952
        %v4955 = vsel %vm4729, %v4951, 0
        %v4958 = vsel %vm4733, %v4953, 0
        %4960 = vmatprep.subr.bf16.mxu0 0
        %4961 = vmatpush1.bf16.msra.mxu0 %v4958
        %4962 = vmatprep.subr.bf16.mxu0 0
        %4963 = vmatpush1.bf16.msra.mxu0 0
        %4964 = vmatprep.subr.bf16.mxu0 0
        %4965 = vmatpush1.bf16.msra.mxu0 0
        %4966 = vmatprep.subr.bf16.mxu0 0
        %4967 = vmatpush1.bf16.msra.mxu0 0
        %4968 = vmatprep.subr.bf16.mxu0 0
        %4969 = vmatpush1.bf16.msra.mxu0 0
        %4970 = vmatprep.subr.bf16.mxu0 0
        %4971 = vmatpush1.bf16.msra.mxu0 0
        %4972 = vmatprep.subr.bf16.mxu0 0
        %4973 = vmatpush1.bf16.msra.mxu0 0
        %4974 = vmatprep.subr.bf16.mxu0 0
        %4975 = vmatpush1.bf16.msra.mxu0 0
        %4976 = vmatprep.subr.bf16.mxu0 0
        %4977 = vmatpush1.bf16.msra.mxu0 0
        %4978 = vmatprep.subr.bf16.mxu0 0
        %4979 = vmatpush1.bf16.msra.mxu0 0
        %4980 = vmatprep.subr.bf16.mxu0 0
        %4981 = vmatpush1.bf16.msra.mxu0 0
        %4982 = vmatprep.subr.bf16.mxu0 0
        %4983 = vmatpush1.bf16.msra.mxu0 0
        %4984 = vmatprep.subr.bf16.mxu0 0
        %4985 = vmatpush1.bf16.msra.mxu0 0
        %4986 = vmatprep.subr.bf16.mxu0 0
        %4987 = vmatpush1.bf16.msra.mxu0 0
        %4988 = vmatprep.subr.bf16.mxu0 0
        %4989 = vmatpush1.bf16.msra.mxu0 0
        %4990 = vmatprep.subr.bf16.mxu0 0
        %4991 = vmatpush1.bf16.msra.mxu0 0
        %4992 = vmatprep.mubr.bf16.mxu0 0
        %4993 = vmatmul.mubr.bf16.gmra.mrb[0].mxu0 %v4955
        %v4994 = vpop.f32.mrb[0].mxu0
        %v4995 = vadd.f32 0.0, %v4994
        %v4996 = vpop.f32.mrb[0].mxu0
        %v4997 = vpop.f32.mrb[0].mxu0
        %v4998 = vpop.f32.mrb[0].mxu0
        %4999 = vdwg.mxu0
        %5000 = vrot.lane.b32.xlu0 %v4666, 104
        %v5001 = vpop.permute.xlu0 %5000
        %5002 = vrot.lane.b32.xlu0 %v4667, 104
        %v5003 = vpop.permute.xlu0 %5002
        %v5005 = vsel %vm4669, %v5001, 0
        %v5008 = vsel %vm4669, %v5003, 0
        %5010 = vmatprep.subr.bf16.mxu0 0
        %5011 = vmatpush1.bf16.xpose.msra.mxu0 %v5008
        %5012 = vmatprep.subr.bf16.mxu0 0
        %5013 = vmatpush1.bf16.xpose.msra.mxu0 0
        %5014 = vmatprep.subr.bf16.mxu0 0
        %5015 = vmatpush1.bf16.xpose.msra.mxu0 0
        %5016 = vmatprep.subr.bf16.mxu0 0
        %5017 = vmatpush1.bf16.xpose.msra.mxu0 0
        %5018 = vmatprep.subr.bf16.mxu0 0
        %5019 = vmatpush1.bf16.xpose.msra.mxu0 0
        %5020 = vmatprep.subr.bf16.mxu0 0
        %5021 = vmatpush1.bf16.xpose.msra.mxu0 0
        %5022 = vmatprep.subr.bf16.mxu0 0
        %5023 = vmatpush1.bf16.xpose.msra.mxu0 0
        %5024 = vmatprep.subr.bf16.mxu0 0
        %5025 = vmatpush1.bf16.xpose.msra.mxu0 0
        %5026 = vmatprep.subr.bf16.mxu0 0
        %5027 = vmatpush1.bf16.xpose.msra.mxu0 0
        %5028 = vmatprep.subr.bf16.mxu0 0
        %5029 = vmatpush1.bf16.xpose.msra.mxu0 0
        %5030 = vmatprep.subr.bf16.mxu0 0
        %5031 = vmatpush1.bf16.xpose.msra.mxu0 0
        %5032 = vmatprep.subr.bf16.mxu0 0
        %5033 = vmatpush1.bf16.xpose.msra.mxu0 0
        %5034 = vmatprep.subr.bf16.mxu0 0
        %5035 = vmatpush1.bf16.xpose.msra.mxu0 0
        %5036 = vmatprep.subr.bf16.mxu0 0
        %5037 = vmatpush1.bf16.xpose.msra.mxu0 0
        %5038 = vmatprep.subr.bf16.mxu0 0
        %5039 = vmatpush1.bf16.xpose.msra.mxu0 0
        %5040 = vmatprep.subr.bf16.mxu0 0
        %5041 = vmatpush1.bf16.xpose.msra.mxu0 0
        %5042 = vmatprep.mubr.bf16.mxu0 0
        %5043 = vmatmul.mubr.bf16.gmra.mrb[0].mxu0 %v5005
        %v5044 = vpop.f32.mrb[0].mxu0
        %v5045 = vadd.f32 %v4472, %v5044
        %v5046 = vpop.f32.mrb[0].mxu0
        %v5047 = vpop.f32.mrb[0].mxu0
        %v5048 = vpop.f32.mrb[0].mxu0
        %5049 = vdwg.mxu0
        %v5050 = vsel %vm4716, %v5045, -inf
        %5051 = vmax.xlane.f32.xlu0 %v5050
        %v5052 = vpop.xlane.xlu0 %5051
        %v5053 = vsub.f32 %v5045, %v5052
        %v5054 = vmul.f32 %v5053, 1.442695
        %v5055 = vpow.pop %v5054
        %v5056 = vsel %vm4716, %v5055, 0.0
        %5057 = vadd.xlane.f32.xlu0 %v5056
        %v5058 = vpop.xlane.xlu0 %5057
        %v5059 = vrcp.pop %v5058
        %v5060 = vmul.f32 %v5055, %v5059
        %v5061 = vpack.c.bf16 %v5060, %v5060
        %5062 = vrot.lane.b32.xlu0 %v4668, 104
        %v5063 = vpop.permute.xlu0 %5062
        %v5065 = vsel %vm4729, %v5061, 0
        %v5068 = vsel %vm4733, %v5063, 0
        %5070 = vmatprep.subr.bf16.mxu0 0
        %5071 = vmatpush1.bf16.msra.mxu0 %v5068
        %5072 = vmatprep.subr.bf16.mxu0 0
        %5073 = vmatpush1.bf16.msra.mxu0 0
        %5074 = vmatprep.subr.bf16.mxu0 0
        %5075 = vmatpush1.bf16.msra.mxu0 0
        %5076 = vmatprep.subr.bf16.mxu0 0
        %5077 = vmatpush1.bf16.msra.mxu0 0
        %5078 = vmatprep.subr.bf16.mxu0 0
        %5079 = vmatpush1.bf16.msra.mxu0 0
        %5080 = vmatprep.subr.bf16.mxu0 0
        %5081 = vmatpush1.bf16.msra.mxu0 0
        %5082 = vmatprep.subr.bf16.mxu0 0
        %5083 = vmatpush1.bf16.msra.mxu0 0
        %5084 = vmatprep.subr.bf16.mxu0 0
        %5085 = vmatpush1.bf16.msra.mxu0 0
        %5086 = vmatprep.subr.bf16.mxu0 0
        %5087 = vmatpush1.bf16.msra.mxu0 0
        %5088 = vmatprep.subr.bf16.mxu0 0
        %5089 = vmatpush1.bf16.msra.mxu0 0
        %5090 = vmatprep.subr.bf16.mxu0 0
        %5091 = vmatpush1.bf16.msra.mxu0 0
        %5092 = vmatprep.subr.bf16.mxu0 0
        %5093 = vmatpush1.bf16.msra.mxu0 0
        %5094 = vmatprep.subr.bf16.mxu0 0
        %5095 = vmatpush1.bf16.msra.mxu0 0
        %5096 = vmatprep.subr.bf16.mxu0 0
        %5097 = vmatpush1.bf16.msra.mxu0 0
        %5098 = vmatprep.subr.bf16.mxu0 0
        %5099 = vmatpush1.bf16.msra.mxu0 0
        %5100 = vmatprep.subr.bf16.mxu0 0
        %5101 = vmatpush1.bf16.msra.mxu0 0
        %5102 = vmatprep.mubr.bf16.mxu0 0
        %5103 = vmatmul.mubr.bf16.gmra.mrb[0].mxu0 %v5065
        %v5104 = vpop.f32.mrb[0].mxu0
        %v5105 = vadd.f32 0.0, %v5104
        %v5106 = vpop.f32.mrb[0].mxu0
        %v5107 = vpop.f32.mrb[0].mxu0
        %v5108 = vpop.f32.mrb[0].mxu0
        %5109 = vdwg.mxu0
        %5111 = vrot.lane.b32.xlu0 %v4885, 8
        %v5112 = vpop.permute.xlu0 %5111
        %5115 = vrot.lane.b32.xlu0 %v4995, 16
        %v5116 = vpop.permute.xlu0 %5115
        %5119 = vrot.lane.b32.xlu0 %v5105, 24
        %v5120 = vpop.permute.xlu0 %5119
        %v5122 = vsel %vm4669, %v4772, %v5112
        %vm5123 = vcmask 130048
        %v5124 = vsel %vm5123, %v5122, %v5116
        %vm5125 = vcmask 195584
        %v5126 = vsel %vm5125, %v5124, %v5120
        %v5127 = vpack.c.bf16 %v5126, %v5126
        %v5128 = vld [vmem:[%s1081] sm:$0xf]
        %v5129 = vld [vmem:[%s1081 + $0x4] sm:$0xf]
        %v5130 = vld [vmem:[%s1081 + $0x8] sm:$0xf]
        %v5131 = vld [vmem:[%s1081 + $0xc] sm:$0xf]
        %v5132 = vld [vmem:[%s1084] sm:$0x1]
        %v5134 = vlaneseq
        %v5135 = vshrl.u32 %v5134, 7
        %v5136 = vsub.s32 0, %v5135
        %v5137 = vrot.slane %v5132, %v5136
        %v5143 = vunpack.c.l.b16 %v5128
        %v5144 = vunpack.c.l.b16 %v5129
        %v5145 = vunpack.c.l.b16 %v5130
        %v5146 = vunpack.c.l.b16 %v5131
        %v5147 = vpack.c.b16 %v5144, %v5143
        %v5148 = vpack.c.b16 %v5146, %v5145
        %v5152 = vsel %vm4496, %v5127, 0
        %5154 = vmatprep.subr.bf16.mxu0 0
        %5155 = vmatpush1.bf16.msra.mxu0 %v5147
        %5156 = vmatprep.subr.bf16.mxu0 0
        %5157 = vmatpush1.bf16.msra.mxu0 %v5148
        %5158 = vmatprep.subr.bf16.mxu0 0
        %5159 = vmatpush1.bf16.msra.mxu0 0
        %5160 = vmatprep.subr.bf16.mxu0 0
        %5161 = vmatpush1.bf16.msra.mxu0 0
        %5162 = vmatprep.subr.bf16.mxu0 0
        %5163 = vmatpush1.bf16.msra.mxu0 0
        %5164 = vmatprep.subr.bf16.mxu0 0
        %5165 = vmatpush1.bf16.msra.mxu0 0
        %5166 = vmatprep.subr.bf16.mxu0 0
        %5167 = vmatpush1.bf16.msra.mxu0 0
        %5168 = vmatprep.subr.bf16.mxu0 0
        %5169 = vmatpush1.bf16.msra.mxu0 0
        %5170 = vmatprep.subr.bf16.mxu0 0
        %5171 = vmatpush1.bf16.msra.mxu0 0
        %5172 = vmatprep.subr.bf16.mxu0 0
        %5173 = vmatpush1.bf16.msra.mxu0 0
        %5174 = vmatprep.subr.bf16.mxu0 0
        %5175 = vmatpush1.bf16.msra.mxu0 0
        %5176 = vmatprep.subr.bf16.mxu0 0
        %5177 = vmatpush1.bf16.msra.mxu0 0
        %5178 = vmatprep.subr.bf16.mxu0 0
        %5179 = vmatpush1.bf16.msra.mxu0 0
        %5180 = vmatprep.subr.bf16.mxu0 0
        %5181 = vmatpush1.bf16.msra.mxu0 0
        %5182 = vmatprep.subr.bf16.mxu0 0
        %5183 = vmatpush1.bf16.msra.mxu0 0
        %5184 = vmatprep.subr.bf16.mxu0 0
        %5185 = vmatpush1.bf16.msra.mxu0 0
        %5186 = vmatprep.mubr.bf16.mxu0 0
        %5187 = vmatmul.mubr.bf16.gmra.mrb[0].mxu0 %v5152
        %v5188 = vpop.f32.mrb[0].mxu0
        %v5189 = vadd.f32 %v5137, %v5188
        %v5190 = vpop.f32.mrb[0].mxu0
        %v5191 = vpop.f32.mrb[0].mxu0
        %v5192 = vpop.f32.mrb[0].mxu0
        %5193 = vdwg.mxu0
        %v5194 = vadd.f32 %v4441, %v5189
        %v5195 = vld [vmem:[%s1087] sm:$0x1]
        %v5196 = vld [vmem:[%s1090] sm:$0x1]
        %vm5197 = vcmask 259072
        %v5198 = vsel %vm5197, %v5194, 0.0
        %5199 = vadd.xlane.f32.xlu0 %v5198
        %v5200 = vpop.xlane.xlu0 %5199
        %v5201 = vrcp.pop 32.0
        %v5202 = vmul.f32 %v5200, %v5201
        %v5203 = vsub.f32 %v5194, %v5202
        %v5204 = vmul.f32 %v5203, %v5203
        %v5205 = vsel %vm5197, %v5204, 0.0
        %5206 = vadd.xlane.f32.xlu0 %v5205
        %v5207 = vpop.xlane.xlu0 %5206
        %v5208 = vmul.f32 %v5207, %v5201
        %v5209 = vadd.f32 %v5208, 1e-05
        %v5210 = vrsqrt.pop %v5209
        %v5211 = vmul.f32 %v5203, %v5210
        %v5213 = vlaneseq
        %v5214 = vshrl.u32 %v5213, 7
        %v5215 = vsub.s32 0, %v5214
        %v5216 = vrot.slane %v5195, %v5215
        %v5218 = vmul.f32 %v5211, %v5216
        %v5220 = vlaneseq
        %v5221 = vshrl.u32 %v5220, 7
        %v5222 = vsub.s32 0, %v5221
        %v5223 = vrot.slane %v5196, %v5222
        %v5225 = vadd.f32 %v5218, %v5223
        %v5226 = vpack.c.bf16 %v5225, %v5225
        %v5227 = vld [vmem:[%s1095] sm:$0xf]
        %v5228 = vld [vmem:[%s1095 + $0x4] sm:$0xf]
        %v5229 = vld [vmem:[%s1095 + $0x8] sm:$0xf]
        %v5230 = vld [vmem:[%s1095 + $0xc] sm:$0xf]
        %v5231 = vld [vmem:[%s1098] sm:$0x1]
        %v5233 = vlaneseq
        %v5234 = vshrl.u32 %v5233, 7
        %v5235 = vsub.s32 0, %v5234
        %v5236 = vrot.slane %v5231, %v5235
        %v5242 = vunpack.c.l.b16 %v5227
        %v5243 = vunpack.c.l.b16 %v5228
        %v5244 = vunpack.c.l.b16 %v5229
        %v5245 = vunpack.c.l.b16 %v5230
        %v5246 = vpack.c.b16 %v5243, %v5242
        %v5247 = vpack.c.b16 %v5245, %v5244
        %v5251 = vsel %vm4496, %v5226, 0
        %5253 = vmatprep.subr.bf16.mxu0 0
        %5254 = vmatpush1.bf16.msra.mxu0 %v5246
        %5255 = vmatprep.subr.bf16.mxu0 0
        %5256 = vmatpush1.bf16.msra.mxu0 %v5247
        %5257 = vmatprep.subr.bf16.mxu0 0
        %5258 = vmatpush1.bf16.msra.mxu0 0
        %5259 = vmatprep.subr.bf16.mxu0 0
        %5260 = vmatpush1.bf16.msra.mxu0 0
        %5261 = vmatprep.subr.bf16.mxu0 0
        %5262 = vmatpush1.bf16.msra.mxu0 0
        %5263 = vmatprep.subr.bf16.mxu0 0
        %5264 = vmatpush1.bf16.msra.mxu0 0
        %5265 = vmatprep.subr.bf16.mxu0 0
        %5266 = vmatpush1.bf16.msra.mxu0 0
        %5267 = vmatprep.subr.bf16.mxu0 0
        %5268 = vmatpush1.bf16.msra.mxu0 0
        %5269 = vmatprep.subr.bf16.mxu0 0
        %5270 = vmatpush1.bf16.msra.mxu0 0
        %5271 = vmatprep.subr.bf16.mxu0 0
        %5272 = vmatpush1.bf16.msra.mxu0 0
        %5273 = vmatprep.subr.bf16.mxu0 0
        %5274 = vmatpush1.bf16.msra.mxu0 0
        %5275 = vmatprep.subr.bf16.mxu0 0
        %5276 = vmatpush1.bf16.msra.mxu0 0
        %5277 = vmatprep.subr.bf16.mxu0 0
        %5278 = vmatpush1.bf16.msra.mxu0 0
        %5279 = vmatprep.subr.bf16.mxu0 0
        %5280 = vmatpush1.bf16.msra.mxu0 0
        %5281 = vmatprep.subr.bf16.mxu0 0
        %5282 = vmatpush1.bf16.msra.mxu0 0
        %5283 = vmatprep.subr.bf16.mxu0 0
        %5284 = vmatpush1.bf16.msra.mxu0 0
        %5285 = vmatprep.mubr.bf16.mxu0 0
        %5286 = vmatmul.mubr.bf16.gmra.mrb[0].mxu0 %v5251
        %v5287 = vpop.f32.mrb[0].mxu0
        %v5288 = vadd.f32 %v5236, %v5287
        %v5289 = vpop.f32.mrb[0].mxu0
        %v5290 = vpop.f32.mrb[0].mxu0
        %v5291 = vpop.f32.mrb[0].mxu0
        %5292 = vdwg.mxu0
        %v5293 = vmax.f32 %v5288, 0.0
        %v5294 = vpack.c.bf16 %v5293, %v5293
        %v5295 = vld [vmem:[%s1103] sm:$0xf]
        %v5296 = vld [vmem:[%s1103 + $0x4] sm:$0xf]
        %v5297 = vld [vmem:[%s1103 + $0x8] sm:$0xf]
        %v5298 = vld [vmem:[%s1103 + $0xc] sm:$0xf]
        %v5299 = vld [vmem:[%s1103 + $0x10] sm:$0xf]
        %v5300 = vld [vmem:[%s1103 + $0x14] sm:$0xf]
        %v5301 = vld [vmem:[%s1103 + $0x18] sm:$0xf]
        %v5302 = vld [vmem:[%s1103 + $0x1c] sm:$0xf]
        %v5303 = vld [vmem:[%s1103 + $0x20] sm:$0xf]
        %v5304 = vld [vmem:[%s1103 + $0x24] sm:$0xf]
        %v5305 = vld [vmem:[%s1103 + $0x28] sm:$0xf]
        %v5306 = vld [vmem:[%s1103 + $0x2c] sm:$0xf]
        %v5307 = vld [vmem:[%s1103 + $0x30] sm:$0xf]
        %v5308 = vld [vmem:[%s1103 + $0x34] sm:$0xf]
        %v5309 = vld [vmem:[%s1103 + $0x38] sm:$0xf]
        %v5310 = vld [vmem:[%s1103 + $0x3c] sm:$0xf]
        %v5311 = vld [vmem:[%s1106] sm:$0x1]
        %v5313 = vlaneseq
        %v5314 = vshrl.u32 %v5313, 7
        %v5315 = vsub.s32 0, %v5314
        %v5316 = vrot.slane %v5311, %v5315
        %v5334 = vunpack.c.l.b16 %v5295
        %v5335 = vunpack.c.l.b16 %v5296
        %v5336 = vunpack.c.l.b16 %v5297
        %v5337 = vunpack.c.l.b16 %v5298
        %v5338 = vunpack.c.l.b16 %v5299
        %v5339 = vunpack.c.l.b16 %v5300
        %v5340 = vunpack.c.l.b16 %v5301
        %v5341 = vunpack.c.l.b16 %v5302
        %v5342 = vunpack.c.l.b16 %v5303
        %v5343 = vunpack.c.l.b16 %v5304
        %v5344 = vunpack.c.l.b16 %v5305
        %v5345 = vunpack.c.l.b16 %v5306
        %v5346 = vunpack.c.l.b16 %v5307
        %v5347 = vunpack.c.l.b16 %v5308
        %v5348 = vunpack.c.l.b16 %v5309
        %v5349 = vunpack.c.l.b16 %v5310
        %v5350 = vpack.c.b16 %v5335, %v5334
        %v5351 = vpack.c.b16 %v5337, %v5336
        %v5352 = vpack.c.b16 %v5339, %v5338
        %v5353 = vpack.c.b16 %v5341, %v5340
        %v5354 = vpack.c.b16 %v5343, %v5342
        %v5355 = vpack.c.b16 %v5345, %v5344
        %v5356 = vpack.c.b16 %v5347, %v5346
        %v5357 = vpack.c.b16 %v5349, %v5348
        %5366 = vmatprep.subr.bf16.mxu0 0
        %5367 = vmatpush1.bf16.msra.mxu0 %v5350
        %5368 = vmatprep.subr.bf16.mxu0 0
        %5369 = vmatpush1.bf16.msra.mxu0 %v5351
        %5370 = vmatprep.subr.bf16.mxu0 0
        %5371 = vmatpush1.bf16.msra.mxu0 %v5352
        %5372 = vmatprep.subr.bf16.mxu0 0
        %5373 = vmatpush1.bf16.msra.mxu0 %v5353
        %5374 = vmatprep.subr.bf16.mxu0 0
        %5375 = vmatpush1.bf16.msra.mxu0 %v5354
        %5376 = vmatprep.subr.bf16.mxu0 0
        %5377 = vmatpush1.bf16.msra.mxu0 %v5355
        %5378 = vmatprep.subr.bf16.mxu0 0
        %5379 = vmatpush1.bf16.msra.mxu0 %v5356
        %5380 = vmatprep.subr.bf16.mxu0 0
        %5381 = vmatpush1.bf16.msra.mxu0 %v5357
        %5382 = vmatprep.subr.bf16.mxu0 0
        %5383 = vmatpush1.bf16.msra.mxu0 0
        %5384 = vmatprep.subr.bf16.mxu0 0
        %5385 = vmatpush1.bf16.msra.mxu0 0
        %5386 = vmatprep.subr.bf16.mxu0 0
        %5387 = vmatpush1.bf16.msra.mxu0 0
        %5388 = vmatprep.subr.bf16.mxu0 0
        %5389 = vmatpush1.bf16.msra.mxu0 0
        %5390 = vmatprep.subr.bf16.mxu0 0
        %5391 = vmatpush1.bf16.msra.mxu0 0
        %5392 = vmatprep.subr.bf16.mxu0 0
        %5393 = vmatpush1.bf16.msra.mxu0 0
        %5394 = vmatprep.subr.bf16.mxu0 0
        %5395 = vmatpush1.bf16.msra.mxu0 0
        %5396 = vmatprep.subr.bf16.mxu0 0
        %5397 = vmatpush1.bf16.msra.mxu0 0
        %5398 = vmatprep.mubr.bf16.mxu0 0
        %5399 = vmatmul.mubr.bf16.gmra.mrb[0].mxu0 %v5294
        %v5400 = vpop.f32.mrb[0].mxu0
        %v5401 = vadd.f32 %v5316, %v5400
        %v5402 = vpop.f32.mrb[0].mxu0
        %v5403 = vpop.f32.mrb[0].mxu0
        %v5404 = vpop.f32.mrb[0].mxu0
        %5405 = vdwg.mxu0
        %v5406 = vadd.f32 %v5225, %v5401
        %v5407 = vld [vmem:[%s1109] sm:$0x1]
        %v5408 = vld [vmem:[%s1112] sm:$0x1]
        %v5409 = vsel %vm5197, %v5406, 0.0
        %5410 = vadd.xlane.f32.xlu0 %v5409
        %v5411 = vpop.xlane.xlu0 %5410
        %v5412 = vmul.f32 %v5411, %v5201
        %v5413 = vsub.f32 %v5406, %v5412
        %v5414 = vmul.f32 %v5413, %v5413
        %v5415 = vsel %vm5197, %v5414, 0.0
        %5416 = vadd.xlane.f32.xlu0 %v5415
        %v5417 = vpop.xlane.xlu0 %5416
        %v5418 = vmul.f32 %v5417, %v5201
        %v5419 = vadd.f32 %v5418, 1e-05
        %v5420 = vrsqrt.pop %v5419
        %v5421 = vmul.f32 %v5413, %v5420
        %v5423 = vlaneseq
        %v5424 = vshrl.u32 %v5423, 7
        %v5425 = vsub.s32 0, %v5424
        %v5426 = vrot.slane %v5407, %v5425
        %v5428 = vmul.f32 %v5421, %v5426
        %v5430 = vlaneseq
        %v5431 = vshrl.u32 %v5430, 7
        %v5432 = vsub.s32 0, %v5431
        %v5433 = vrot.slane %v5408, %v5432
        %v5435 = vadd.f32 %v5428, %v5433
        %5436 = vst.msk [vmem:[#allocation2] sm:$0x3f] %vm5197, %v5435
        %p5437 = scmp.eq.s32.totalorder %s44, 1
        // Predicated region
        $region133: #{tpu_custom_call.1} parent=127 // pred_check
          %p5438 = pneg %p5437
        $region134: #{tpu_custom_call.1} parent=127 // pred_check_branch
          %5440 = sbr.rel (%p5438) target = $region136
        $region135: #{tpu_custom_call.1} parent=127 // pred_region
          %v5442 = vrot.slane %v5435, 2
          %v5444 = vadd.f32 %v5435, %v5442
          %v5445 = vrot.slane %v5435, 4
          %v5447 = vadd.f32 %v5444, %v5445
          %v5448 = vmul.f32 %v5447, 0.33333334
          %v5449 = vpack.c.bf16 %v5448, %v5448
          %v5450 = vld [vmem:[%s25] sm:$0xf]
          %v5451 = vld [vmem:[%s25 + $0x4] sm:$0xf]
          %v5452 = vld [vmem:[%s25 + $0x8] sm:$0xf]
          %v5453 = vld [vmem:[%s25 + $0xc] sm:$0xf]
          %v5454 = vld [vmem:[%s26] sm:$0x1]
          %v5456 = vlaneseq
          %v5457 = vshrl.u32 %v5456, 7
          %v5458 = vsub.s32 0, %v5457
          %v5459 = vrot.slane %v5454, %v5458
          %v5465 = vunpack.c.l.b16 %v5450
          %v5466 = vunpack.c.l.b16 %v5451
          %v5467 = vunpack.c.l.b16 %v5452
          %v5468 = vunpack.c.l.b16 %v5453
          %v5469 = vpack.c.b16 %v5466, %v5465
          %v5470 = vpack.c.b16 %v5468, %v5467
          %v5474 = vsel %vm4496, %v5449, 0
          %5476 = vmatprep.subr.bf16.mxu0 0
          %5477 = vmatpush1.bf16.msra.mxu0 %v5469
          %5478 = vmatprep.subr.bf16.mxu0 0
          %5479 = vmatpush1.bf16.msra.mxu0 %v5470
          %5480 = vmatprep.subr.bf16.mxu0 0
          %5481 = vmatpush1.bf16.msra.mxu0 0
          %5482 = vmatprep.subr.bf16.mxu0 0
          %5483 = vmatpush1.bf16.msra.mxu0 0
          %5484 = vmatprep.subr.bf16.mxu0 0
          %5485 = vmatpush1.bf16.msra.mxu0 0
          %5486 = vmatprep.subr.bf16.mxu0 0
          %5487 = vmatpush1.bf16.msra.mxu0 0
          %5488 = vmatprep.subr.bf16.mxu0 0
          %5489 = vmatpush1.bf16.msra.mxu0 0
          %5490 = vmatprep.subr.bf16.mxu0 0
          %5491 = vmatpush1.bf16.msra.mxu0 0
          %5492 = vmatprep.subr.bf16.mxu0 0
          %5493 = vmatpush1.bf16.msra.mxu0 0
          %5494 = vmatprep.subr.bf16.mxu0 0
          %5495 = vmatpush1.bf16.msra.mxu0 0
          %5496 = vmatprep.subr.bf16.mxu0 0
          %5497 = vmatpush1.bf16.msra.mxu0 0
          %5498 = vmatprep.subr.bf16.mxu0 0
          %5499 = vmatpush1.bf16.msra.mxu0 0
          %5500 = vmatprep.subr.bf16.mxu0 0
          %5501 = vmatpush1.bf16.msra.mxu0 0
          %5502 = vmatprep.subr.bf16.mxu0 0
          %5503 = vmatpush1.bf16.msra.mxu0 0
          %5504 = vmatprep.subr.bf16.mxu0 0
          %5505 = vmatpush1.bf16.msra.mxu0 0
          %5506 = vmatprep.subr.bf16.mxu0 0
          %5507 = vmatpush1.bf16.msra.mxu0 0
          %5508 = vmatprep.mubr.bf16.mxu0 0
          %5509 = vmatmul.mubr.bf16.gmra.mrb[0].mxu0 %v5474
          %v5510 = vpop.f32.mrb[0].mxu0
          %v5511 = vadd.f32 %v5459, %v5510
          %v5512 = vpop.f32.mrb[0].mxu0
          %v5513 = vpop.f32.mrb[0].mxu0
          %v5514 = vpop.f32.mrb[0].mxu0
          %5515 = vdwg.mxu0
          %5516 = vst [vmem:[#allocation3] sm:$0x3] %v5511
        $region136: #{tpu_custom_call.1} parent=127 // pred_fallthru
          _
        // Predicated region
        $region137: #{tpu_custom_call.1} parent=127 // pred_check
          %p5517 = pneg %p731
        $region138: #{tpu_custom_call.1} parent=127 // pred_check_branch
          %5519 = sbr.rel (%p5517) target = $region140
        $region139: #{tpu_custom_call.1} parent=127 // pred_region
          %s5521 = ssub.s32 32, 32
          %5522 = vsyncadd [#allocation4], %s5521
          %s5523 = smul.addr %s43, 32
          %s5524 = scalar_lea.hbm %s27, %s5523
          %s5526 = sshll.u32 [#allocation3], 4
          %s5527 = int_to_ptr.vmem [resolvable:$true] %s5526
          %5529 = dma.vmem_to_hbm [thread:$0]  %s5527, 32, %s5524, [#allocation4]
        $region140: #{tpu_custom_call.1} parent=127 // pred_fallthru
          _
        // Predicated region
        $region141: #{tpu_custom_call.1} parent=127 // pred_check
          %p5530 = pneg %p731
        $region142: #{tpu_custom_call.1} parent=127 // pred_check_branch
          %5532 = sbr.rel (%p5530) target = $region144
        $region143: #{tpu_custom_call.1} parent=127 // pred_region
          %5533 = dma.done [#allocation4], 32
        $region144: #{tpu_custom_call.1} parent=127 // pred_fallthru
          _
      $region128: #{tpu_custom_call.1} parent=5 // pred_fallthru
        _
      %p5534 = scmp.le.s32.totalorder 2, %s34
      // Predicated region
      $region145: #{tpu_custom_call.1} parent=5 // pred_check
        %p5535 = pneg %p5534
      $region146: #{tpu_custom_call.1} parent=5 // pred_check_branch
        %5537 = sbr.rel (%p5535) target = $region148
      $region147: #{tpu_custom_call.1} parent=5 // pred_region
        %s5538 = ssub.s32 %s34, 2
      $region148: #{tpu_custom_call.1} parent=5 // pred_fallthru
        _
    $region6: #{tpu_custom_call.1} parent=1 // loop_footer
      %s38 = sadd.s32 1, %s34
    $region7: #{tpu_custom_call.1} parent=1 // loop_footer_branch
      %33 = sbr.rel target = $region3
    $region8: #{tpu_custom_call.1} parent=1 // loop_exit
      _
    %5539 = vsyncpa [#allocation4], 1
    %s5540 = scalar_lea.sflag [#allocation4], 1
    %5541 = vsyncpa %s5540, 1

</llo_original>
